<compile_context>
chip_gen: v7x
topology: tpu7x:2x2x1
jax: 0.10.0
libtpu: 0.0.40
codegen_flags: <defaults>
</compile_context>

<pallas_src>
import numpy as np

import jax
import jax.numpy as jnp
from jax.experimental import pallas as pl
from jax.experimental.pallas import tpu as pltpu


# ----------------------------- fused Pallas kernel --------------------------

def _lenet_kernel(x_ref, t1_ref, b1_ref, t2_ref, b2_ref, a_ref,
                  fb1_ref, w2_ref, fb2_ref, w3_ref, fb3_ref, out_ref):
    f32 = jnp.float32
    b1 = b1_ref[...]                                   # (1, 256)
    b2 = b2_ref[...]                                   # (1, 256)
    xg = x_ref[0]                                      # (4, 8, 96): [h%4, h//4, c*32+w]

    # ---- conv1 + ReLU -------------------------------------------------------
    # Output rows h (28) are computed in 4 groups (h % 4 == r) so that 2x2 row
    # pooling is a plain pairwise max and conv2 lhs slices stay contiguous.
    # Output columns: (w%2)*128 + co*14 + w//2  (width parity -> column half).
    groups = []
    for r in range(4):
        acc = jnp.zeros((7, 256), f32)
        for dh in range(5):
            s = r + dh
            lhs = xg[s % 4, s // 4:s // 4 + 7, :]               # (7, 96)
            acc = acc + jnp.dot(lhs, t1_ref[dh], preferred_element_type=f32)
        groups.append(jnp.maximum(acc + b1, 0.0))               # (7, 256)

    # ---- 2x2 max pool #1 ----------------------------------------------------
    pe = jnp.maximum(groups[0], groups[1])     # pooled rows 0,2,...,12
    po = jnp.maximum(groups[2], groups[3])     # pooled rows 1,3,...,13
    p1 = (jnp.maximum(pe[:, :128], pe[:, 128:]),   # (7,128), col = ci*14 + w1
          jnp.maximum(po[:, :128], po[:, 128:]))

    # ---- conv2 + ReLU (output rows split even/odd for pool #2) -------------
    acc_e = jnp.zeros((5, 256), f32)
    acc_o = jnp.zeros((5, 256), f32)
    for dh in range(5):
        t2 = t2_ref[dh]                                          # (128, 256)
        lhs_e = p1[dh % 2][dh // 2:dh // 2 + 5, :]               # rows 2m+dh
        lhs_o = p1[(dh + 1) % 2][(dh + 1) // 2:(dh + 1) // 2 + 5, :]  # 2m+1+dh
        acc_e = acc_e + jnp.dot(lhs_e, t2, preferred_element_type=f32)
        acc_o = acc_o + jnp.dot(lhs_o, t2, preferred_element_type=f32)
    r2e = jnp.maximum(acc_e + b2, 0.0)
    r2o = jnp.maximum(acc_o + b2, 0.0)

    # ---- 2x2 max pool #2 ----------------------------------------------------
    rp = jnp.maximum(r2e, r2o)                       # (5, 256)
    p2 = jnp.maximum(rp[:, :128], rp[:, 128:])       # (5, 128), col = co2*5 + w3

    # ---- MLP: fc1 (flatten folded into A) -> relu -> fc2 -> relu -> fc3 -----
    h = fb1_ref[...]                                 # (1, 120)
    for h3 in range(5):
        h = h + jnp.dot(p2[h3:h3 + 1, :], a_ref[h3], preferred_element_type=f32)
    h = jnp.maximum(h, 0.0)
    h = jnp.maximum(jnp.dot(h, w2_ref[...], preferred_element_type=f32)
                    + fb2_ref[...], 0.0)
    out_ref[0] = (jnp.dot(h, w3_ref[...], preferred_element_type=f32)
                  + fb3_ref[...])                    # (1, 128); cols 10..127 = 0


# --------------------- one-time weight lowering (host side) -----------------

def prepare_weights(params):
    cw1 = np.asarray(params["conv1_w"], np.float32)    # (6, 3, 5, 5)
    cb1 = np.asarray(params["conv1_b"], np.float32)
    cw2 = np.asarray(params["conv2_w"], np.float32)    # (16, 6, 5, 5)
    cb2 = np.asarray(params["conv2_b"], np.float32)
    fw1 = np.asarray(params["fc1_w"], np.float32)      # (120, 400)
    fb1 = np.asarray(params["fc1_b"], np.float32)
    fw2 = np.asarray(params["fc2_w"], np.float32)      # (84, 120)
    fb2 = np.asarray(params["fc2_b"], np.float32)
    fw3 = np.asarray(params["fc3_w"], np.float32)      # (10, 84)
    fb3 = np.asarray(params["fc3_b"], np.float32)

    # conv1 Toeplitz: t1[dh][ci*32 + w + dw, par*128 + co*14 + w1],  w = 2*w1+par
    t1 = np.zeros((5, 96, 256), np.float32)
    b1r = np.zeros((1, 256), np.float32)
    for co in range(6):
        for w1 in range(14):
            for par in range(2):
                w = 2 * w1 + par
                col = par * 128 + co * 14 + w1
                b1r[0, col] = cb1[co]
                for dh in range(5):
                    for ci in range(3):
                        t1[dh, ci * 32 + w:ci * 32 + w + 5, col] = cw1[co, ci, dh, :]

    # conv2 Toeplitz: inputs use the pooled layout ci*14 + w1_in.
    t2 = np.zeros((5, 128, 256), np.float32)
    b2r = np.zeros((1, 256), np.float32)
    for co in range(16):
        for w3 in range(5):
            for par in range(2):
                w2 = 2 * w3 + par
                col = par * 128 + co * 5 + w3
                b2r[0, col] = cb2[co]
                for dh in range(5):
                    for ci in range(6):
                        t2[dh, ci * 14 + w2:ci * 14 + w2 + 5, col] = cw2[co, ci, dh, :]

    # fc1 folded per pooled row h3 (reproduces PyTorch's (c,h,w) flatten):
    # A[h3][c*5 + w3, o] = fc1_w[o, c*25 + h3*5 + w3]
    amat = np.zeros((5, 128, 120), np.float32)
    fw1r = fw1.reshape(120, 16, 5, 5)
    for h3 in range(5):
        amat[h3, :80, :] = np.transpose(fw1r[:, :, h3, :], (1, 2, 0)).reshape(80, 120)

    w3p = np.zeros((84, 128), np.float32)
    w3p[:, :10] = fw3.T
    b3p = np.zeros((1, 128), np.float32)
    b3p[0, :10] = fb3

    return {
        "t1": jnp.asarray(t1), "b1": jnp.asarray(b1r),
        "t2": jnp.asarray(t2), "b2": jnp.asarray(b2r),
        "a": jnp.asarray(amat), "fb1": jnp.asarray(fb1.reshape(1, 120)),
        "w2": jnp.asarray(fw2.T.copy()), "fb2": jnp.asarray(fb2.reshape(1, 84)),
        "w3": jnp.asarray(w3p), "fb3": jnp.asarray(b3p),
    }


# ------------------------------- forward -------------------------------------

def _const_spec(shape):
    zeros = (0,) * len(shape)
    return pl.BlockSpec(shape, lambda b: zeros)


def lenet_cifar_forward(kweights, x_nchw):
    n = x_nchw.shape[0]
    x = x_nchw.astype(jnp.float32)
    # NCHW -> rows h, features (c, w); split rows by h % 4 so conv1/pool1 only
    # need contiguous slices inside the kernel.  Tiny per-call glue (24 KB).
    img = jnp.transpose(x, (0, 2, 1, 3)).reshape(n, 32, 96)
    img = img.reshape(n, 8, 4, 96).transpose(0, 2, 1, 3)       # (n, 4, 8, 96)

    out = pl.pallas_call(
        _lenet_kernel,
        grid=(n,),
        in_specs=[
            pl.BlockSpec((1, 4, 8, 96), lambda b: (b, 0, 0, 0)),
            _const_spec((5, 96, 256)), _const_spec((1, 256)),
            _const_spec((5, 128, 256)), _const_spec((1, 256)),
            _const_spec((5, 128, 120)), _const_spec((1, 120)),
            _const_spec((120, 84)), _const_spec((1, 84)),
            _const_spec((84, 128)), _const_spec((1, 128)),
        ],
        out_specs=pl.BlockSpec((1, 1, 128), lambda b: (b, 0, 0)),
        out_shape=jax.ShapeDtypeStruct((n, 1, 128), jnp.float32),
        compiler_params=pltpu.CompilerParams(
            dimension_semantics=("parallel",)),
    )(img, kweights["t1"], kweights["b1"], kweights["t2"], kweights["b2"],
      kweights["a"], kweights["fb1"], kweights["w2"], kweights["fb2"],
      kweights["w3"], kweights["fb3"])
    return out[:, 0, :10]


# ------------------------------ parameters ----------------------------------

def init_params(key):
    ks = jax.random.split(key, 10)

    def xavier(k, shape, fan_in, fan_out):
        std = (2.0 / (fan_in + fan_out)) ** 0.5
        return std * jax.random.normal(k, shape, dtype=jnp.float32)

    def bias(k, fan_in, num):
        bound = 1.0 / (fan_in ** 0.5)
        return jax.random.uniform(k, (num,), jnp.float32, -bound, bound)

    p = {}
    p["conv1_w"] = xavier(ks[0], (6, 3, 5, 5), 3 * 25, 6 * 25)
    p["conv1_b"] = bias(ks[1], 3 * 25, 6)
    p["conv2_w"] = xavier(ks[2], (16, 6, 5, 5), 6 * 25, 16 * 25)
    p["conv2_b"] = bias(ks[3], 6 * 25, 16)
    p["fc1_w"] = xavier(ks[4], (120, 400), 400, 120)
    p["fc1_b"] = bias(ks[5], 400, 120)
    p["fc2_w"] = xavier(ks[6], (84, 120), 120, 84)
    p["fc2_b"] = bias(ks[7], 120, 84)
    p["fc3_w"] = xavier(ks[8], (10, 84), 84, 10)
    p["fc3_b"] = bias(ks[9], 84, 10)
    return p


# --------------------- pure-JAX reference (for self-check) ------------------

def _reference_forward(params, x_nchw):
    x = x_nchw.astype(jnp.float32)
    dn = ("NCHW", "OIHW", "NCHW")
    hi = jax.lax.Precision.HIGHEST

    def pool(h):
        return jnp.maximum(
            jnp.maximum(h[:, :, 0::2, 0::2], h[:, :, 0::2, 1::2]),
            jnp.maximum(h[:, :, 1::2, 0::2], h[:, :, 1::2, 1::2]))

    h = jax.lax.conv_general_dilated(x, params["conv1_w"], (1, 1), "VALID",
                                     dimension_numbers=dn, precision=hi)
    h = pool(jnp.maximum(h + params["conv1_b"][None, :, None, None], 0.0))
    h = jax.lax.conv_general_dilated(h, params["conv2_w"], (1, 1), "VALID",
                                     dimension_numbers=dn, precision=hi)
    h = pool(jnp.maximum(h + params["conv2_b"][None, :, None, None], 0.0))
    f = h.reshape(h.shape[0], -1)
    f = jnp.maximum(jnp.dot(f, params["fc1_w"].T, precision=hi) + params["fc1_b"], 0.0)
    f = jnp.maximum(jnp.dot(f, params["fc2_w"].T, precision=hi) + params["fc2_b"], 0.0)
    return jnp.dot(f, params["fc3_w"].T, precision=hi) + params["fc3_b"]


# --------------------------------- main --------------------------------------

if __name__ == "__main__":
    key = jax.random.PRNGKey(0)
    pkey, xkey = jax.random.split(key)
    params = init_params(pkey)
    kweights = prepare_weights(params)   # one-time weight lowering (host side)

    # LeNetCIFAR requires 3x32x32 inputs (fc1 expects 16*5*5 features); batch=2.
    x = jax.random.normal(xkey, (2, 3, 32, 32), dtype=jnp.float32)

    fwd = jax.jit(lenet_cifar_forward)
    out = fwd(kweights, x)
    jax.block_until_ready(out)
    assert out.shape == (2, 10) and out.dtype == jnp.float32

    ref = _reference_forward(params, x)
    err = float(jnp.max(jnp.abs(out - ref)))
    assert err < 5e-2, f"kernel/reference mismatch: max |diff| = {err}"
    print("KERNEL_OK")
</pallas_src>

<mosaic_0001>
module attributes {stable_mosaic.version = 11 : i64} {
  func.func @_lenet_kernel(%arg0: i32, %arg1: memref<1x4x8x96xf32, #tpu.memory_space<vmem>>, %arg2: memref<5x96x256xf32, #tpu.memory_space<vmem>>, %arg3: memref<1x256xf32, #tpu.memory_space<vmem>>, %arg4: memref<5x128x256xf32, #tpu.memory_space<vmem>>, %arg5: memref<1x256xf32, #tpu.memory_space<vmem>>, %arg6: memref<5x128x120xf32, #tpu.memory_space<vmem>>, %arg7: memref<1x120xf32, #tpu.memory_space<vmem>>, %arg8: memref<120x84xf32, #tpu.memory_space<vmem>>, %arg9: memref<1x84xf32, #tpu.memory_space<vmem>>, %arg10: memref<84x128xf32, #tpu.memory_space<vmem>>, %arg11: memref<1x128xf32, #tpu.memory_space<vmem>>, %arg12: memref<1x1x128xf32, #tpu.memory_space<vmem>>) attributes {dimension_semantics = [#tpu.dimension_semantics<parallel>], iteration_bounds = array<i64: 2>, scalar_prefetch = 0 : i64, scratch_operands = 0 : i64, tpu.core_type = #tpu.core_type<tc>, window_params = [{transform_indices = @transform_0, window_bounds = array<i64: 1, 4, 8, 96>}, {pipeline_mode = #tpu.pipeline_mode<synchronous>, transform_indices = @transform_1, window_bounds = array<i64: 5, 96, 256>}, {pipeline_mode = #tpu.pipeline_mode<synchronous>, transform_indices = @transform_2, window_bounds = array<i64: 1, 256>}, {pipeline_mode = #tpu.pipeline_mode<synchronous>, transform_indices = @transform_3, window_bounds = array<i64: 5, 128, 256>}, {pipeline_mode = #tpu.pipeline_mode<synchronous>, transform_indices = @transform_4, window_bounds = array<i64: 1, 256>}, {pipeline_mode = #tpu.pipeline_mode<synchronous>, transform_indices = @transform_5, window_bounds = array<i64: 5, 128, 120>}, {pipeline_mode = #tpu.pipeline_mode<synchronous>, transform_indices = @transform_6, window_bounds = array<i64: 1, 120>}, {pipeline_mode = #tpu.pipeline_mode<synchronous>, transform_indices = @transform_7, window_bounds = array<i64: 120, 84>}, {pipeline_mode = #tpu.pipeline_mode<synchronous>, transform_indices = @transform_8, window_bounds = array<i64: 1, 84>}, {pipeline_mode = #tpu.pipeline_mode<synchronous>, transform_indices = @transform_9, window_bounds = array<i64: 84, 128>}, {pipeline_mode = #tpu.pipeline_mode<synchronous>, transform_indices = @transform_10, window_bounds = array<i64: 1, 128>}, {transform_indices = @transform_11, window_bounds = array<i64: 1, 1, 128>}]} {
    %c0 = arith.constant 0 : index
    %c0_0 = arith.constant 0 : index
    %0 = vector.load %arg3[%c0, %c0_0] : memref<1x256xf32, #tpu.memory_space<vmem>>, vector<1x256xf32>
    %c0_1 = arith.constant 0 : index
    %c0_2 = arith.constant 0 : index
    %1 = vector.load %arg5[%c0_1, %c0_2] : memref<1x256xf32, #tpu.memory_space<vmem>>, vector<1x256xf32>
    %c0_3 = arith.constant 0 : index
    %c0_4 = arith.constant 0 : index
    %c0_5 = arith.constant 0 : index
    %c0_6 = arith.constant 0 : index
    %2 = vector.load %arg1[%c0_3, %c0_4, %c0_5, %c0_6] : memref<1x4x8x96xf32, #tpu.memory_space<vmem>>, vector<1x4x8x96xf32>
    %3 = vector.shape_cast %2 : vector<1x4x8x96xf32> to vector<4x8x96xf32>
    %cst = arith.constant 0.000000e+00 : f32
    %4 = vector.broadcast %cst : f32 to vector<7x256xf32>
    %5 = vector.extract_strided_slice %3 {offsets = [0, 0, 0], sizes = [1, 7, 96], strides = [1, 1, 1]} : vector<4x8x96xf32> to vector<1x7x96xf32>
    %6 = vector.shape_cast %5 : vector<1x7x96xf32> to vector<7x96xf32>
    %c0_7 = arith.constant 0 : index
    %c0_8 = arith.constant 0 : index
    %c0_9 = arith.constant 0 : index
    %7 = vector.load %arg2[%c0_7, %c0_8, %c0_9] : memref<5x96x256xf32, #tpu.memory_space<vmem>>, vector<1x96x256xf32>
    %8 = vector.shape_cast %7 : vector<1x96x256xf32> to vector<96x256xf32>
    %cst_10 = arith.constant dense<0.000000e+00> : vector<7x256xf32>
    %9 = tpu.matmul %6, %8, %cst_10 {dimension_numbers = #tpu.dot_dimension_numbers<[1], [0], [0], [1], [0, 0, 1, 1], [], []>} : vector<7x96xf32>, vector<96x256xf32>, vector<7x256xf32> -> vector<7x256xf32>
    %10 = arith.addf %4, %9 : vector<7x256xf32>
    %11 = vector.extract_strided_slice %3 {offsets = [1, 0, 0], sizes = [1, 7, 96], strides = [1, 1, 1]} : vector<4x8x96xf32> to vector<1x7x96xf32>
    %12 = vector.shape_cast %11 : vector<1x7x96xf32> to vector<7x96xf32>
    %c1 = arith.constant 1 : index
    %c0_11 = arith.constant 0 : index
    %c0_12 = arith.constant 0 : index
    %13 = vector.load %arg2[%c1, %c0_11, %c0_12] : memref<5x96x256xf32, #tpu.memory_space<vmem>>, vector<1x96x256xf32>
    %14 = vector.shape_cast %13 : vector<1x96x256xf32> to vector<96x256xf32>
    %cst_13 = arith.constant dense<0.000000e+00> : vector<7x256xf32>
    %15 = tpu.matmul %12, %14, %cst_13 {dimension_numbers = #tpu.dot_dimension_numbers<[1], [0], [0], [1], [0, 0, 1, 1], [], []>} : vector<7x96xf32>, vector<96x256xf32>, vector<7x256xf32> -> vector<7x256xf32>
    %16 = arith.addf %10, %15 : vector<7x256xf32>
    %17 = vector.extract_strided_slice %3 {offsets = [2, 0, 0], sizes = [1, 7, 96], strides = [1, 1, 1]} : vector<4x8x96xf32> to vector<1x7x96xf32>
    %18 = vector.shape_cast %17 : vector<1x7x96xf32> to vector<7x96xf32>
    %c2 = arith.constant 2 : index
    %c0_14 = arith.constant 0 : index
    %c0_15 = arith.constant 0 : index
    %19 = vector.load %arg2[%c2, %c0_14, %c0_15] : memref<5x96x256xf32, #tpu.memory_space<vmem>>, vector<1x96x256xf32>
    %20 = vector.shape_cast %19 : vector<1x96x256xf32> to vector<96x256xf32>
    %cst_16 = arith.constant dense<0.000000e+00> : vector<7x256xf32>
    %21 = tpu.matmul %18, %20, %cst_16 {dimension_numbers = #tpu.dot_dimension_numbers<[1], [0], [0], [1], [0, 0, 1, 1], [], []>} : vector<7x96xf32>, vector<96x256xf32>, vector<7x256xf32> -> vector<7x256xf32>
    %22 = arith.addf %16, %21 : vector<7x256xf32>
    %23 = vector.extract_strided_slice %3 {offsets = [3, 0, 0], sizes = [1, 7, 96], strides = [1, 1, 1]} : vector<4x8x96xf32> to vector<1x7x96xf32>
    %24 = vector.shape_cast %23 : vector<1x7x96xf32> to vector<7x96xf32>
    %c3 = arith.constant 3 : index
    %c0_17 = arith.constant 0 : index
    %c0_18 = arith.constant 0 : index
    %25 = vector.load %arg2[%c3, %c0_17, %c0_18] : memref<5x96x256xf32, #tpu.memory_space<vmem>>, vector<1x96x256xf32>
    %26 = vector.shape_cast %25 : vector<1x96x256xf32> to vector<96x256xf32>
    %cst_19 = arith.constant dense<0.000000e+00> : vector<7x256xf32>
    %27 = tpu.matmul %24, %26, %cst_19 {dimension_numbers = #tpu.dot_dimension_numbers<[1], [0], [0], [1], [0, 0, 1, 1], [], []>} : vector<7x96xf32>, vector<96x256xf32>, vector<7x256xf32> -> vector<7x256xf32>
    %28 = arith.addf %22, %27 : vector<7x256xf32>
    %29 = vector.extract_strided_slice %3 {offsets = [0, 1, 0], sizes = [1, 7, 96], strides = [1, 1, 1]} : vector<4x8x96xf32> to vector<1x7x96xf32>
    %30 = vector.shape_cast %29 : vector<1x7x96xf32> to vector<7x96xf32>
    %c4 = arith.constant 4 : index
    %c0_20 = arith.constant 0 : index
    %c0_21 = arith.constant 0 : index
    %31 = vector.load %arg2[%c4, %c0_20, %c0_21] : memref<5x96x256xf32, #tpu.memory_space<vmem>>, vector<1x96x256xf32>
    %32 = vector.shape_cast %31 : vector<1x96x256xf32> to vector<96x256xf32>
    %cst_22 = arith.constant dense<0.000000e+00> : vector<7x256xf32>
    %33 = tpu.matmul %30, %32, %cst_22 {dimension_numbers = #tpu.dot_dimension_numbers<[1], [0], [0], [1], [0, 0, 1, 1], [], []>} : vector<7x96xf32>, vector<96x256xf32>, vector<7x256xf32> -> vector<7x256xf32>
    %34 = arith.addf %28, %33 : vector<7x256xf32>
    %35 = vector.broadcast %0 : vector<1x256xf32> to vector<7x256xf32>
    %36 = arith.addf %34, %35 : vector<7x256xf32>
    %cst_23 = arith.constant 0.000000e+00 : f32
    %37 = vector.broadcast %cst_23 : f32 to vector<7x256xf32>
    %38 = arith.maximumf %36, %37 : vector<7x256xf32>
    %cst_24 = arith.constant 0.000000e+00 : f32
    %39 = vector.broadcast %cst_24 : f32 to vector<7x256xf32>
    %40 = vector.extract_strided_slice %3 {offsets = [1, 0, 0], sizes = [1, 7, 96], strides = [1, 1, 1]} : vector<4x8x96xf32> to vector<1x7x96xf32>
    %41 = vector.shape_cast %40 : vector<1x7x96xf32> to vector<7x96xf32>
    %c0_25 = arith.constant 0 : index
    %c0_26 = arith.constant 0 : index
    %c0_27 = arith.constant 0 : index
    %42 = vector.load %arg2[%c0_25, %c0_26, %c0_27] : memref<5x96x256xf32, #tpu.memory_space<vmem>>, vector<1x96x256xf32>
    %43 = vector.shape_cast %42 : vector<1x96x256xf32> to vector<96x256xf32>
    %cst_28 = arith.constant dense<0.000000e+00> : vector<7x256xf32>
    %44 = tpu.matmul %41, %43, %cst_28 {dimension_numbers = #tpu.dot_dimension_numbers<[1], [0], [0], [1], [0, 0, 1, 1], [], []>} : vector<7x96xf32>, vector<96x256xf32>, vector<7x256xf32> -> vector<7x256xf32>
    %45 = arith.addf %39, %44 : vector<7x256xf32>
    %46 = vector.extract_strided_slice %3 {offsets = [2, 0, 0], sizes = [1, 7, 96], strides = [1, 1, 1]} : vector<4x8x96xf32> to vector<1x7x96xf32>
    %47 = vector.shape_cast %46 : vector<1x7x96xf32> to vector<7x96xf32>
    %c1_29 = arith.constant 1 : index
    %c0_30 = arith.constant 0 : index
    %c0_31 = arith.constant 0 : index
    %48 = vector.load %arg2[%c1_29, %c0_30, %c0_31] : memref<5x96x256xf32, #tpu.memory_space<vmem>>, vector<1x96x256xf32>
    %49 = vector.shape_cast %48 : vector<1x96x256xf32> to vector<96x256xf32>
    %cst_32 = arith.constant dense<0.000000e+00> : vector<7x256xf32>
    %50 = tpu.matmul %47, %49, %cst_32 {dimension_numbers = #tpu.dot_dimension_numbers<[1], [0], [0], [1], [0, 0, 1, 1], [], []>} : vector<7x96xf32>, vector<96x256xf32>, vector<7x256xf32> -> vector<7x256xf32>
    %51 = arith.addf %45, %50 : vector<7x256xf32>
    %52 = vector.extract_strided_slice %3 {offsets = [3, 0, 0], sizes = [1, 7, 96], strides = [1, 1, 1]} : vector<4x8x96xf32> to vector<1x7x96xf32>
    %53 = vector.shape_cast %52 : vector<1x7x96xf32> to vector<7x96xf32>
    %c2_33 = arith.constant 2 : index
    %c0_34 = arith.constant 0 : index
    %c0_35 = arith.constant 0 : index
    %54 = vector.load %arg2[%c2_33, %c0_34, %c0_35] : memref<5x96x256xf32, #tpu.memory_space<vmem>>, vector<1x96x256xf32>
    %55 = vector.shape_cast %54 : vector<1x96x256xf32> to vector<96x256xf32>
    %cst_36 = arith.constant dense<0.000000e+00> : vector<7x256xf32>
    %56 = tpu.matmul %53, %55, %cst_36 {dimension_numbers = #tpu.dot_dimension_numbers<[1], [0], [0], [1], [0, 0, 1, 1], [], []>} : vector<7x96xf32>, vector<96x256xf32>, vector<7x256xf32> -> vector<7x256xf32>
    %57 = arith.addf %51, %56 : vector<7x256xf32>
    %58 = vector.extract_strided_slice %3 {offsets = [0, 1, 0], sizes = [1, 7, 96], strides = [1, 1, 1]} : vector<4x8x96xf32> to vector<1x7x96xf32>
    %59 = vector.shape_cast %58 : vector<1x7x96xf32> to vector<7x96xf32>
    %c3_37 = arith.constant 3 : index
    %c0_38 = arith.constant 0 : index
    %c0_39 = arith.constant 0 : index
    %60 = vector.load %arg2[%c3_37, %c0_38, %c0_39] : memref<5x96x256xf32, #tpu.memory_space<vmem>>, vector<1x96x256xf32>
    %61 = vector.shape_cast %60 : vector<1x96x256xf32> to vector<96x256xf32>
    %cst_40 = arith.constant dense<0.000000e+00> : vector<7x256xf32>
    %62 = tpu.matmul %59, %61, %cst_40 {dimension_numbers = #tpu.dot_dimension_numbers<[1], [0], [0], [1], [0, 0, 1, 1], [], []>} : vector<7x96xf32>, vector<96x256xf32>, vector<7x256xf32> -> vector<7x256xf32>
    %63 = arith.addf %57, %62 : vector<7x256xf32>
    %64 = vector.extract_strided_slice %3 {offsets = [1, 1, 0], sizes = [1, 7, 96], strides = [1, 1, 1]} : vector<4x8x96xf32> to vector<1x7x96xf32>
    %65 = vector.shape_cast %64 : vector<1x7x96xf32> to vector<7x96xf32>
    %c4_41 = arith.constant 4 : index
    %c0_42 = arith.constant 0 : index
    %c0_43 = arith.constant 0 : index
    %66 = vector.load %arg2[%c4_41, %c0_42, %c0_43] : memref<5x96x256xf32, #tpu.memory_space<vmem>>, vector<1x96x256xf32>
    %67 = vector.shape_cast %66 : vector<1x96x256xf32> to vector<96x256xf32>
    %cst_44 = arith.constant dense<0.000000e+00> : vector<7x256xf32>
    %68 = tpu.matmul %65, %67, %cst_44 {dimension_numbers = #tpu.dot_dimension_numbers<[1], [0], [0], [1], [0, 0, 1, 1], [], []>} : vector<7x96xf32>, vector<96x256xf32>, vector<7x256xf32> -> vector<7x256xf32>
    %69 = arith.addf %63, %68 : vector<7x256xf32>
    %70 = vector.broadcast %0 : vector<1x256xf32> to vector<7x256xf32>
    %71 = arith.addf %69, %70 : vector<7x256xf32>
    %cst_45 = arith.constant 0.000000e+00 : f32
    %72 = vector.broadcast %cst_45 : f32 to vector<7x256xf32>
    %73 = arith.maximumf %71, %72 : vector<7x256xf32>
    %cst_46 = arith.constant 0.000000e+00 : f32
    %74 = vector.broadcast %cst_46 : f32 to vector<7x256xf32>
    %75 = vector.extract_strided_slice %3 {offsets = [2, 0, 0], sizes = [1, 7, 96], strides = [1, 1, 1]} : vector<4x8x96xf32> to vector<1x7x96xf32>
    %76 = vector.shape_cast %75 : vector<1x7x96xf32> to vector<7x96xf32>
    %c0_47 = arith.constant 0 : index
    %c0_48 = arith.constant 0 : index
    %c0_49 = arith.constant 0 : index
    %77 = vector.load %arg2[%c0_47, %c0_48, %c0_49] : memref<5x96x256xf32, #tpu.memory_space<vmem>>, vector<1x96x256xf32>
    %78 = vector.shape_cast %77 : vector<1x96x256xf32> to vector<96x256xf32>
    %cst_50 = arith.constant dense<0.000000e+00> : vector<7x256xf32>
    %79 = tpu.matmul %76, %78, %cst_50 {dimension_numbers = #tpu.dot_dimension_numbers<[1], [0], [0], [1], [0, 0, 1, 1], [], []>} : vector<7x96xf32>, vector<96x256xf32>, vector<7x256xf32> -> vector<7x256xf32>
    %80 = arith.addf %74, %79 : vector<7x256xf32>
    %81 = vector.extract_strided_slice %3 {offsets = [3, 0, 0], sizes = [1, 7, 96], strides = [1, 1, 1]} : vector<4x8x96xf32> to vector<1x7x96xf32>
    %82 = vector.shape_cast %81 : vector<1x7x96xf32> to vector<7x96xf32>
    %c1_51 = arith.constant 1 : index
    %c0_52 = arith.constant 0 : index
    %c0_53 = arith.constant 0 : index
    %83 = vector.load %arg2[%c1_51, %c0_52, %c0_53] : memref<5x96x256xf32, #tpu.memory_space<vmem>>, vector<1x96x256xf32>
    %84 = vector.shape_cast %83 : vector<1x96x256xf32> to vector<96x256xf32>
    %cst_54 = arith.constant dense<0.000000e+00> : vector<7x256xf32>
    %85 = tpu.matmul %82, %84, %cst_54 {dimension_numbers = #tpu.dot_dimension_numbers<[1], [0], [0], [1], [0, 0, 1, 1], [], []>} : vector<7x96xf32>, vector<96x256xf32>, vector<7x256xf32> -> vector<7x256xf32>
    %86 = arith.addf %80, %85 : vector<7x256xf32>
    %87 = vector.extract_strided_slice %3 {offsets = [0, 1, 0], sizes = [1, 7, 96], strides = [1, 1, 1]} : vector<4x8x96xf32> to vector<1x7x96xf32>
    %88 = vector.shape_cast %87 : vector<1x7x96xf32> to vector<7x96xf32>
    %c2_55 = arith.constant 2 : index
    %c0_56 = arith.constant 0 : index
    %c0_57 = arith.constant 0 : index
    %89 = vector.load %arg2[%c2_55, %c0_56, %c0_57] : memref<5x96x256xf32, #tpu.memory_space<vmem>>, vector<1x96x256xf32>
    %90 = vector.shape_cast %89 : vector<1x96x256xf32> to vector<96x256xf32>
    %cst_58 = arith.constant dense<0.000000e+00> : vector<7x256xf32>
    %91 = tpu.matmul %88, %90, %cst_58 {dimension_numbers = #tpu.dot_dimension_numbers<[1], [0], [0], [1], [0, 0, 1, 1], [], []>} : vector<7x96xf32>, vector<96x256xf32>, vector<7x256xf32> -> vector<7x256xf32>
    %92 = arith.addf %86, %91 : vector<7x256xf32>
    %93 = vector.extract_strided_slice %3 {offsets = [1, 1, 0], sizes = [1, 7, 96], strides = [1, 1, 1]} : vector<4x8x96xf32> to vector<1x7x96xf32>
    %94 = vector.shape_cast %93 : vector<1x7x96xf32> to vector<7x96xf32>
    %c3_59 = arith.constant 3 : index
    %c0_60 = arith.constant 0 : index
    %c0_61 = arith.constant 0 : index
    %95 = vector.load %arg2[%c3_59, %c0_60, %c0_61] : memref<5x96x256xf32, #tpu.memory_space<vmem>>, vector<1x96x256xf32>
    %96 = vector.shape_cast %95 : vector<1x96x256xf32> to vector<96x256xf32>
    %cst_62 = arith.constant dense<0.000000e+00> : vector<7x256xf32>
    %97 = tpu.matmul %94, %96, %cst_62 {dimension_numbers = #tpu.dot_dimension_numbers<[1], [0], [0], [1], [0, 0, 1, 1], [], []>} : vector<7x96xf32>, vector<96x256xf32>, vector<7x256xf32> -> vector<7x256xf32>
    %98 = arith.addf %92, %97 : vector<7x256xf32>
    %99 = vector.extract_strided_slice %3 {offsets = [2, 1, 0], sizes = [1, 7, 96], strides = [1, 1, 1]} : vector<4x8x96xf32> to vector<1x7x96xf32>
    %100 = vector.shape_cast %99 : vector<1x7x96xf32> to vector<7x96xf32>
    %c4_63 = arith.constant 4 : index
    %c0_64 = arith.constant 0 : index
    %c0_65 = arith.constant 0 : index
    %101 = vector.load %arg2[%c4_63, %c0_64, %c0_65] : memref<5x96x256xf32, #tpu.memory_space<vmem>>, vector<1x96x256xf32>
    %102 = vector.shape_cast %101 : vector<1x96x256xf32> to vector<96x256xf32>
    %cst_66 = arith.constant dense<0.000000e+00> : vector<7x256xf32>
    %103 = tpu.matmul %100, %102, %cst_66 {dimension_numbers = #tpu.dot_dimension_numbers<[1], [0], [0], [1], [0, 0, 1, 1], [], []>} : vector<7x96xf32>, vector<96x256xf32>, vector<7x256xf32> -> vector<7x256xf32>
    %104 = arith.addf %98, %103 : vector<7x256xf32>
    %105 = vector.broadcast %0 : vector<1x256xf32> to vector<7x256xf32>
    %106 = arith.addf %104, %105 : vector<7x256xf32>
    %cst_67 = arith.constant 0.000000e+00 : f32
    %107 = vector.broadcast %cst_67 : f32 to vector<7x256xf32>
    %108 = arith.maximumf %106, %107 : vector<7x256xf32>
    %cst_68 = arith.constant 0.000000e+00 : f32
    %109 = vector.broadcast %cst_68 : f32 to vector<7x256xf32>
    %110 = vector.extract_strided_slice %3 {offsets = [3, 0, 0], sizes = [1, 7, 96], strides = [1, 1, 1]} : vector<4x8x96xf32> to vector<1x7x96xf32>
    %111 = vector.shape_cast %110 : vector<1x7x96xf32> to vector<7x96xf32>
    %c0_69 = arith.constant 0 : index
    %c0_70 = arith.constant 0 : index
    %c0_71 = arith.constant 0 : index
    %112 = vector.load %arg2[%c0_69, %c0_70, %c0_71] : memref<5x96x256xf32, #tpu.memory_space<vmem>>, vector<1x96x256xf32>
    %113 = vector.shape_cast %112 : vector<1x96x256xf32> to vector<96x256xf32>
    %cst_72 = arith.constant dense<0.000000e+00> : vector<7x256xf32>
    %114 = tpu.matmul %111, %113, %cst_72 {dimension_numbers = #tpu.dot_dimension_numbers<[1], [0], [0], [1], [0, 0, 1, 1], [], []>} : vector<7x96xf32>, vector<96x256xf32>, vector<7x256xf32> -> vector<7x256xf32>
    %115 = arith.addf %109, %114 : vector<7x256xf32>
    %116 = vector.extract_strided_slice %3 {offsets = [0, 1, 0], sizes = [1, 7, 96], strides = [1, 1, 1]} : vector<4x8x96xf32> to vector<1x7x96xf32>
    %117 = vector.shape_cast %116 : vector<1x7x96xf32> to vector<7x96xf32>
    %c1_73 = arith.constant 1 : index
    %c0_74 = arith.constant 0 : index
    %c0_75 = arith.constant 0 : index
    %118 = vector.load %arg2[%c1_73, %c0_74, %c0_75] : memref<5x96x256xf32, #tpu.memory_space<vmem>>, vector<1x96x256xf32>
    %119 = vector.shape_cast %118 : vector<1x96x256xf32> to vector<96x256xf32>
    %cst_76 = arith.constant dense<0.000000e+00> : vector<7x256xf32>
    %120 = tpu.matmul %117, %119, %cst_76 {dimension_numbers = #tpu.dot_dimension_numbers<[1], [0], [0], [1], [0, 0, 1, 1], [], []>} : vector<7x96xf32>, vector<96x256xf32>, vector<7x256xf32> -> vector<7x256xf32>
    %121 = arith.addf %115, %120 : vector<7x256xf32>
    %122 = vector.extract_strided_slice %3 {offsets = [1, 1, 0], sizes = [1, 7, 96], strides = [1, 1, 1]} : vector<4x8x96xf32> to vector<1x7x96xf32>
    %123 = vector.shape_cast %122 : vector<1x7x96xf32> to vector<7x96xf32>
    %c2_77 = arith.constant 2 : index
    %c0_78 = arith.constant 0 : index
    %c0_79 = arith.constant 0 : index
    %124 = vector.load %arg2[%c2_77, %c0_78, %c0_79] : memref<5x96x256xf32, #tpu.memory_space<vmem>>, vector<1x96x256xf32>
    %125 = vector.shape_cast %124 : vector<1x96x256xf32> to vector<96x256xf32>
    %cst_80 = arith.constant dense<0.000000e+00> : vector<7x256xf32>
    %126 = tpu.matmul %123, %125, %cst_80 {dimension_numbers = #tpu.dot_dimension_numbers<[1], [0], [0], [1], [0, 0, 1, 1], [], []>} : vector<7x96xf32>, vector<96x256xf32>, vector<7x256xf32> -> vector<7x256xf32>
    %127 = arith.addf %121, %126 : vector<7x256xf32>
    %128 = vector.extract_strided_slice %3 {offsets = [2, 1, 0], sizes = [1, 7, 96], strides = [1, 1, 1]} : vector<4x8x96xf32> to vector<1x7x96xf32>
    %129 = vector.shape_cast %128 : vector<1x7x96xf32> to vector<7x96xf32>
    %c3_81 = arith.constant 3 : index
    %c0_82 = arith.constant 0 : index
    %c0_83 = arith.constant 0 : index
    %130 = vector.load %arg2[%c3_81, %c0_82, %c0_83] : memref<5x96x256xf32, #tpu.memory_space<vmem>>, vector<1x96x256xf32>
    %131 = vector.shape_cast %130 : vector<1x96x256xf32> to vector<96x256xf32>
    %cst_84 = arith.constant dense<0.000000e+00> : vector<7x256xf32>
    %132 = tpu.matmul %129, %131, %cst_84 {dimension_numbers = #tpu.dot_dimension_numbers<[1], [0], [0], [1], [0, 0, 1, 1], [], []>} : vector<7x96xf32>, vector<96x256xf32>, vector<7x256xf32> -> vector<7x256xf32>
    %133 = arith.addf %127, %132 : vector<7x256xf32>
    %134 = vector.extract_strided_slice %3 {offsets = [3, 1, 0], sizes = [1, 7, 96], strides = [1, 1, 1]} : vector<4x8x96xf32> to vector<1x7x96xf32>
    %135 = vector.shape_cast %134 : vector<1x7x96xf32> to vector<7x96xf32>
    %c4_85 = arith.constant 4 : index
    %c0_86 = arith.constant 0 : index
    %c0_87 = arith.constant 0 : index
    %136 = vector.load %arg2[%c4_85, %c0_86, %c0_87] : memref<5x96x256xf32, #tpu.memory_space<vmem>>, vector<1x96x256xf32>
    %137 = vector.shape_cast %136 : vector<1x96x256xf32> to vector<96x256xf32>
    %cst_88 = arith.constant dense<0.000000e+00> : vector<7x256xf32>
    %138 = tpu.matmul %135, %137, %cst_88 {dimension_numbers = #tpu.dot_dimension_numbers<[1], [0], [0], [1], [0, 0, 1, 1], [], []>} : vector<7x96xf32>, vector<96x256xf32>, vector<7x256xf32> -> vector<7x256xf32>
    %139 = arith.addf %133, %138 : vector<7x256xf32>
    %140 = vector.broadcast %0 : vector<1x256xf32> to vector<7x256xf32>
    %141 = arith.addf %139, %140 : vector<7x256xf32>
    %cst_89 = arith.constant 0.000000e+00 : f32
    %142 = vector.broadcast %cst_89 : f32 to vector<7x256xf32>
    %143 = arith.maximumf %141, %142 : vector<7x256xf32>
    %144 = arith.maximumf %38, %73 : vector<7x256xf32>
    %145 = arith.maximumf %108, %143 : vector<7x256xf32>
    %146 = vector.extract_strided_slice %144 {offsets = [0, 0], sizes = [7, 128], strides = [1, 1]} : vector<7x256xf32> to vector<7x128xf32>
    %147 = vector.extract_strided_slice %144 {offsets = [0, 128], sizes = [7, 128], strides = [1, 1]} : vector<7x256xf32> to vector<7x128xf32>
    %148 = arith.maximumf %146, %147 : vector<7x128xf32>
    %149 = vector.extract_strided_slice %145 {offsets = [0, 0], sizes = [7, 128], strides = [1, 1]} : vector<7x256xf32> to vector<7x128xf32>
    %150 = vector.extract_strided_slice %145 {offsets = [0, 128], sizes = [7, 128], strides = [1, 1]} : vector<7x256xf32> to vector<7x128xf32>
    %151 = arith.maximumf %149, %150 : vector<7x128xf32>
    %cst_90 = arith.constant 0.000000e+00 : f32
    %152 = vector.broadcast %cst_90 : f32 to vector<5x256xf32>
    %cst_91 = arith.constant 0.000000e+00 : f32
    %153 = vector.broadcast %cst_91 : f32 to vector<5x256xf32>
    %c0_92 = arith.constant 0 : index
    %c0_93 = arith.constant 0 : index
    %c0_94 = arith.constant 0 : index
    %154 = vector.load %arg4[%c0_92, %c0_93, %c0_94] : memref<5x128x256xf32, #tpu.memory_space<vmem>>, vector<1x128x256xf32>
    %155 = vector.shape_cast %154 : vector<1x128x256xf32> to vector<128x256xf32>
    %156 = vector.extract_strided_slice %148 {offsets = [0, 0], sizes = [5, 128], strides = [1, 1]} : vector<7x128xf32> to vector<5x128xf32>
    %157 = vector.extract_strided_slice %151 {offsets = [0, 0], sizes = [5, 128], strides = [1, 1]} : vector<7x128xf32> to vector<5x128xf32>
    %cst_95 = arith.constant dense<0.000000e+00> : vector<5x256xf32>
    %158 = tpu.matmul %156, %155, %cst_95 {dimension_numbers = #tpu.dot_dimension_numbers<[1], [0], [0], [1], [0, 0, 1, 1], [], []>} : vector<5x128xf32>, vector<128x256xf32>, vector<5x256xf32> -> vector<5x256xf32>
    %159 = arith.addf %152, %158 : vector<5x256xf32>
    %cst_96 = arith.constant dense<0.000000e+00> : vector<5x256xf32>
    %160 = tpu.matmul %157, %155, %cst_96 {dimension_numbers = #tpu.dot_dimension_numbers<[1], [0], [0], [1], [0, 0, 1, 1], [], []>} : vector<5x128xf32>, vector<128x256xf32>, vector<5x256xf32> -> vector<5x256xf32>
    %161 = arith.addf %153, %160 : vector<5x256xf32>
    %c1_97 = arith.constant 1 : index
    %c0_98 = arith.constant 0 : index
    %c0_99 = arith.constant 0 : index
    %162 = vector.load %arg4[%c1_97, %c0_98, %c0_99] : memref<5x128x256xf32, #tpu.memory_space<vmem>>, vector<1x128x256xf32>
    %163 = vector.shape_cast %162 : vector<1x128x256xf32> to vector<128x256xf32>
    %164 = vector.extract_strided_slice %151 {offsets = [0, 0], sizes = [5, 128], strides = [1, 1]} : vector<7x128xf32> to vector<5x128xf32>
    %165 = vector.extract_strided_slice %148 {offsets = [1, 0], sizes = [5, 128], strides = [1, 1]} : vector<7x128xf32> to vector<5x128xf32>
    %cst_100 = arith.constant dense<0.000000e+00> : vector<5x256xf32>
    %166 = tpu.matmul %164, %163, %cst_100 {dimension_numbers = #tpu.dot_dimension_numbers<[1], [0], [0], [1], [0, 0, 1, 1], [], []>} : vector<5x128xf32>, vector<128x256xf32>, vector<5x256xf32> -> vector<5x256xf32>
    %167 = arith.addf %159, %166 : vector<5x256xf32>
    %cst_101 = arith.constant dense<0.000000e+00> : vector<5x256xf32>
    %168 = tpu.matmul %165, %163, %cst_101 {dimension_numbers = #tpu.dot_dimension_numbers<[1], [0], [0], [1], [0, 0, 1, 1], [], []>} : vector<5x128xf32>, vector<128x256xf32>, vector<5x256xf32> -> vector<5x256xf32>
    %169 = arith.addf %161, %168 : vector<5x256xf32>
    %c2_102 = arith.constant 2 : index
    %c0_103 = arith.constant 0 : index
    %c0_104 = arith.constant 0 : index
    %170 = vector.load %arg4[%c2_102, %c0_103, %c0_104] : memref<5x128x256xf32, #tpu.memory_space<vmem>>, vector<1x128x256xf32>
    %171 = vector.shape_cast %170 : vector<1x128x256xf32> to vector<128x256xf32>
    %172 = vector.extract_strided_slice %148 {offsets = [1, 0], sizes = [5, 128], strides = [1, 1]} : vector<7x128xf32> to vector<5x128xf32>
    %173 = vector.extract_strided_slice %151 {offsets = [1, 0], sizes = [5, 128], strides = [1, 1]} : vector<7x128xf32> to vector<5x128xf32>
    %cst_105 = arith.constant dense<0.000000e+00> : vector<5x256xf32>
    %174 = tpu.matmul %172, %171, %cst_105 {dimension_numbers = #tpu.dot_dimension_numbers<[1], [0], [0], [1], [0, 0, 1, 1], [], []>} : vector<5x128xf32>, vector<128x256xf32>, vector<5x256xf32> -> vector<5x256xf32>
    %175 = arith.addf %167, %174 : vector<5x256xf32>
    %cst_106 = arith.constant dense<0.000000e+00> : vector<5x256xf32>
    %176 = tpu.matmul %173, %171, %cst_106 {dimension_numbers = #tpu.dot_dimension_numbers<[1], [0], [0], [1], [0, 0, 1, 1], [], []>} : vector<5x128xf32>, vector<128x256xf32>, vector<5x256xf32> -> vector<5x256xf32>
    %177 = arith.addf %169, %176 : vector<5x256xf32>
    %c3_107 = arith.constant 3 : index
    %c0_108 = arith.constant 0 : index
    %c0_109 = arith.constant 0 : index
    %178 = vector.load %arg4[%c3_107, %c0_108, %c0_109] : memref<5x128x256xf32, #tpu.memory_space<vmem>>, vector<1x128x256xf32>
    %179 = vector.shape_cast %178 : vector<1x128x256xf32> to vector<128x256xf32>
    %180 = vector.extract_strided_slice %151 {offsets = [1, 0], sizes = [5, 128], strides = [1, 1]} : vector<7x128xf32> to vector<5x128xf32>
    %181 = vector.extract_strided_slice %148 {offsets = [2, 0], sizes = [5, 128], strides = [1, 1]} : vector<7x128xf32> to vector<5x128xf32>
    %cst_110 = arith.constant dense<0.000000e+00> : vector<5x256xf32>
    %182 = tpu.matmul %180, %179, %cst_110 {dimension_numbers = #tpu.dot_dimension_numbers<[1], [0], [0], [1], [0, 0, 1, 1], [], []>} : vector<5x128xf32>, vector<128x256xf32>, vector<5x256xf32> -> vector<5x256xf32>
    %183 = arith.addf %175, %182 : vector<5x256xf32>
    %cst_111 = arith.constant dense<0.000000e+00> : vector<5x256xf32>
    %184 = tpu.matmul %181, %179, %cst_111 {dimension_numbers = #tpu.dot_dimension_numbers<[1], [0], [0], [1], [0, 0, 1, 1], [], []>} : vector<5x128xf32>, vector<128x256xf32>, vector<5x256xf32> -> vector<5x256xf32>
    %185 = arith.addf %177, %184 : vector<5x256xf32>
    %c4_112 = arith.constant 4 : index
    %c0_113 = arith.constant 0 : index
    %c0_114 = arith.constant 0 : index
    %186 = vector.load %arg4[%c4_112, %c0_113, %c0_114] : memref<5x128x256xf32, #tpu.memory_space<vmem>>, vector<1x128x256xf32>
    %187 = vector.shape_cast %186 : vector<1x128x256xf32> to vector<128x256xf32>
    %188 = vector.extract_strided_slice %148 {offsets = [2, 0], sizes = [5, 128], strides = [1, 1]} : vector<7x128xf32> to vector<5x128xf32>
    %189 = vector.extract_strided_slice %151 {offsets = [2, 0], sizes = [5, 128], strides = [1, 1]} : vector<7x128xf32> to vector<5x128xf32>
    %cst_115 = arith.constant dense<0.000000e+00> : vector<5x256xf32>
    %190 = tpu.matmul %188, %187, %cst_115 {dimension_numbers = #tpu.dot_dimension_numbers<[1], [0], [0], [1], [0, 0, 1, 1], [], []>} : vector<5x128xf32>, vector<128x256xf32>, vector<5x256xf32> -> vector<5x256xf32>
    %191 = arith.addf %183, %190 : vector<5x256xf32>
    %cst_116 = arith.constant dense<0.000000e+00> : vector<5x256xf32>
    %192 = tpu.matmul %189, %187, %cst_116 {dimension_numbers = #tpu.dot_dimension_numbers<[1], [0], [0], [1], [0, 0, 1, 1], [], []>} : vector<5x128xf32>, vector<128x256xf32>, vector<5x256xf32> -> vector<5x256xf32>
    %193 = arith.addf %185, %192 : vector<5x256xf32>
    %194 = vector.broadcast %1 : vector<1x256xf32> to vector<5x256xf32>
    %195 = arith.addf %191, %194 : vector<5x256xf32>
    %cst_117 = arith.constant 0.000000e+00 : f32
    %196 = vector.broadcast %cst_117 : f32 to vector<5x256xf32>
    %197 = arith.maximumf %195, %196 : vector<5x256xf32>
    %198 = vector.broadcast %1 : vector<1x256xf32> to vector<5x256xf32>
    %199 = arith.addf %193, %198 : vector<5x256xf32>
    %cst_118 = arith.constant 0.000000e+00 : f32
    %200 = vector.broadcast %cst_118 : f32 to vector<5x256xf32>
    %201 = arith.maximumf %199, %200 : vector<5x256xf32>
    %202 = arith.maximumf %197, %201 : vector<5x256xf32>
    %203 = vector.extract_strided_slice %202 {offsets = [0, 0], sizes = [5, 128], strides = [1, 1]} : vector<5x256xf32> to vector<5x128xf32>
    %204 = vector.extract_strided_slice %202 {offsets = [0, 128], sizes = [5, 128], strides = [1, 1]} : vector<5x256xf32> to vector<5x128xf32>
    %205 = arith.maximumf %203, %204 : vector<5x128xf32>
    %c0_119 = arith.constant 0 : index
    %c0_120 = arith.constant 0 : index
    %206 = vector.load %arg7[%c0_119, %c0_120] : memref<1x120xf32, #tpu.memory_space<vmem>>, vector<1x120xf32>
    %207 = vector.extract_strided_slice %205 {offsets = [0, 0], sizes = [1, 128], strides = [1, 1]} : vector<5x128xf32> to vector<1x128xf32>
    %c0_121 = arith.constant 0 : index
    %c0_122 = arith.constant 0 : index
    %c0_123 = arith.constant 0 : index
    %208 = vector.load %arg6[%c0_121, %c0_122, %c0_123] : memref<5x128x120xf32, #tpu.memory_space<vmem>>, vector<1x128x120xf32>
    %209 = vector.shape_cast %208 : vector<1x128x120xf32> to vector<128x120xf32>
    %cst_124 = arith.constant dense<0.000000e+00> : vector<1x120xf32>
    %210 = tpu.matmul %207, %209, %cst_124 {dimension_numbers = #tpu.dot_dimension_numbers<[1], [0], [0], [1], [0, 0, 1, 1], [], []>} : vector<1x128xf32>, vector<128x120xf32>, vector<1x120xf32> -> vector<1x120xf32>
    %211 = arith.addf %206, %210 : vector<1x120xf32>
    %212 = vector.extract_strided_slice %205 {offsets = [1, 0], sizes = [1, 128], strides = [1, 1]} : vector<5x128xf32> to vector<1x128xf32>
    %c1_125 = arith.constant 1 : index
    %c0_126 = arith.constant 0 : index
    %c0_127 = arith.constant 0 : index
    %213 = vector.load %arg6[%c1_125, %c0_126, %c0_127] : memref<5x128x120xf32, #tpu.memory_space<vmem>>, vector<1x128x120xf32>
    %214 = vector.shape_cast %213 : vector<1x128x120xf32> to vector<128x120xf32>
    %cst_128 = arith.constant dense<0.000000e+00> : vector<1x120xf32>
    %215 = tpu.matmul %212, %214, %cst_128 {dimension_numbers = #tpu.dot_dimension_numbers<[1], [0], [0], [1], [0, 0, 1, 1], [], []>} : vector<1x128xf32>, vector<128x120xf32>, vector<1x120xf32> -> vector<1x120xf32>
    %216 = arith.addf %211, %215 : vector<1x120xf32>
    %217 = vector.extract_strided_slice %205 {offsets = [2, 0], sizes = [1, 128], strides = [1, 1]} : vector<5x128xf32> to vector<1x128xf32>
    %c2_129 = arith.constant 2 : index
    %c0_130 = arith.constant 0 : index
    %c0_131 = arith.constant 0 : index
    %218 = vector.load %arg6[%c2_129, %c0_130, %c0_131] : memref<5x128x120xf32, #tpu.memory_space<vmem>>, vector<1x128x120xf32>
    %219 = vector.shape_cast %218 : vector<1x128x120xf32> to vector<128x120xf32>
    %cst_132 = arith.constant dense<0.000000e+00> : vector<1x120xf32>
    %220 = tpu.matmul %217, %219, %cst_132 {dimension_numbers = #tpu.dot_dimension_numbers<[1], [0], [0], [1], [0, 0, 1, 1], [], []>} : vector<1x128xf32>, vector<128x120xf32>, vector<1x120xf32> -> vector<1x120xf32>
    %221 = arith.addf %216, %220 : vector<1x120xf32>
    %222 = vector.extract_strided_slice %205 {offsets = [3, 0], sizes = [1, 128], strides = [1, 1]} : vector<5x128xf32> to vector<1x128xf32>
    %c3_133 = arith.constant 3 : index
    %c0_134 = arith.constant 0 : index
    %c0_135 = arith.constant 0 : index
    %223 = vector.load %arg6[%c3_133, %c0_134, %c0_135] : memref<5x128x120xf32, #tpu.memory_space<vmem>>, vector<1x128x120xf32>
    %224 = vector.shape_cast %223 : vector<1x128x120xf32> to vector<128x120xf32>
    %cst_136 = arith.constant dense<0.000000e+00> : vector<1x120xf32>
    %225 = tpu.matmul %222, %224, %cst_136 {dimension_numbers = #tpu.dot_dimension_numbers<[1], [0], [0], [1], [0, 0, 1, 1], [], []>} : vector<1x128xf32>, vector<128x120xf32>, vector<1x120xf32> -> vector<1x120xf32>
    %226 = arith.addf %221, %225 : vector<1x120xf32>
    %227 = vector.extract_strided_slice %205 {offsets = [4, 0], sizes = [1, 128], strides = [1, 1]} : vector<5x128xf32> to vector<1x128xf32>
    %c4_137 = arith.constant 4 : index
    %c0_138 = arith.constant 0 : index
    %c0_139 = arith.constant 0 : index
    %228 = vector.load %arg6[%c4_137, %c0_138, %c0_139] : memref<5x128x120xf32, #tpu.memory_space<vmem>>, vector<1x128x120xf32>
    %229 = vector.shape_cast %228 : vector<1x128x120xf32> to vector<128x120xf32>
    %cst_140 = arith.constant dense<0.000000e+00> : vector<1x120xf32>
    %230 = tpu.matmul %227, %229, %cst_140 {dimension_numbers = #tpu.dot_dimension_numbers<[1], [0], [0], [1], [0, 0, 1, 1], [], []>} : vector<1x128xf32>, vector<128x120xf32>, vector<1x120xf32> -> vector<1x120xf32>
    %231 = arith.addf %226, %230 : vector<1x120xf32>
    %cst_141 = arith.constant 0.000000e+00 : f32
    %232 = vector.broadcast %cst_141 : f32 to vector<1x120xf32>
    %233 = arith.maximumf %231, %232 : vector<1x120xf32>
    %c0_142 = arith.constant 0 : index
    %c0_143 = arith.constant 0 : index
    %234 = vector.load %arg8[%c0_142, %c0_143] : memref<120x84xf32, #tpu.memory_space<vmem>>, vector<120x84xf32>
    %cst_144 = arith.constant dense<0.000000e+00> : vector<1x84xf32>
    %235 = tpu.matmul %233, %234, %cst_144 {dimension_numbers = #tpu.dot_dimension_numbers<[1], [0], [0], [1], [0, 0, 1, 1], [], []>} : vector<1x120xf32>, vector<120x84xf32>, vector<1x84xf32> -> vector<1x84xf32>
    %c0_145 = arith.constant 0 : index
    %c0_146 = arith.constant 0 : index
    %236 = vector.load %arg9[%c0_145, %c0_146] : memref<1x84xf32, #tpu.memory_space<vmem>>, vector<1x84xf32>
    %237 = arith.addf %235, %236 : vector<1x84xf32>
    %cst_147 = arith.constant 0.000000e+00 : f32
    %238 = vector.broadcast %cst_147 : f32 to vector<1x84xf32>
    %239 = arith.maximumf %237, %238 : vector<1x84xf32>
    %c0_148 = arith.constant 0 : index
    %c0_149 = arith.constant 0 : index
    %240 = vector.load %arg10[%c0_148, %c0_149] : memref<84x128xf32, #tpu.memory_space<vmem>>, vector<84x128xf32>
    %cst_150 = arith.constant dense<0.000000e+00> : vector<1x128xf32>
    %241 = tpu.matmul %239, %240, %cst_150 {dimension_numbers = #tpu.dot_dimension_numbers<[1], [0], [0], [1], [0, 0, 1, 1], [], []>} : vector<1x84xf32>, vector<84x128xf32>, vector<1x128xf32> -> vector<1x128xf32>
    %c0_151 = arith.constant 0 : index
    %c0_152 = arith.constant 0 : index
    %242 = vector.load %arg11[%c0_151, %c0_152] : memref<1x128xf32, #tpu.memory_space<vmem>>, vector<1x128xf32>
    %243 = arith.addf %241, %242 : vector<1x128xf32>
    %c0_153 = arith.constant 0 : index
    %c0_154 = arith.constant 0 : index
    %c0_155 = arith.constant 0 : index
    %244 = vector.load %arg12[%c0_153, %c0_154, %c0_155] : memref<1x1x128xf32, #tpu.memory_space<vmem>>, vector<1x1x128xf32>
    %245 = vector.shape_cast %244 : vector<1x1x128xf32> to vector<1x128xf32>
    %246 = vector.shape_cast %243 : vector<1x128xf32> to vector<1x1x128xf32>
    tpu.vector_store %arg12[%c0_153, %c0_154, %c0_155], %246 {strides = array<i32>} : memref<1x1x128xf32, #tpu.memory_space<vmem>>, vector<1x1x128xf32>,
    return
  }
  func.func @transform_0(%arg0: i32) -> (i32, i32, i32, i32) {
    %c0_i32 = arith.constant 0 : i32
    %c0_i32_0 = arith.constant 0 : i32
    %c0_i32_1 = arith.constant 0 : i32
    %c0_i32_2 = arith.constant 0 : i32
    return %arg0, %c0_i32, %c0_i32_0, %c0_i32_1 : i32, i32, i32, i32
  }
  func.func @transform_1(%arg0: i32) -> (i32, i32, i32) {
    %c0_i32 = arith.constant 0 : i32
    %c0_i32_0 = arith.constant 0 : i32
    %c0_i32_1 = arith.constant 0 : i32
    %c0_i32_2 = arith.constant 0 : i32
    return %c0_i32, %c0_i32_0, %c0_i32_1 : i32, i32, i32
  }
  func.func @transform_2(%arg0: i32) -> (i32, i32) {
    %c0_i32 = arith.constant 0 : i32
    %c0_i32_0 = arith.constant 0 : i32
    %c0_i32_1 = arith.constant 0 : i32
    return %c0_i32, %c0_i32_0 : i32, i32
  }
  func.func @transform_3(%arg0: i32) -> (i32, i32, i32) {
    %c0_i32 = arith.constant 0 : i32
    %c0_i32_0 = arith.constant 0 : i32
    %c0_i32_1 = arith.constant 0 : i32
    %c0_i32_2 = arith.constant 0 : i32
    return %c0_i32, %c0_i32_0, %c0_i32_1 : i32, i32, i32
  }
  func.func @transform_4(%arg0: i32) -> (i32, i32) {
    %c0_i32 = arith.constant 0 : i32
    %c0_i32_0 = arith.constant 0 : i32
    %c0_i32_1 = arith.constant 0 : i32
    return %c0_i32, %c0_i32_0 : i32, i32
  }
  func.func @transform_5(%arg0: i32) -> (i32, i32, i32) {
    %c0_i32 = arith.constant 0 : i32
    %c0_i32_0 = arith.constant 0 : i32
    %c0_i32_1 = arith.constant 0 : i32
    %c0_i32_2 = arith.constant 0 : i32
    return %c0_i32, %c0_i32_0, %c0_i32_1 : i32, i32, i32
  }
  func.func @transform_6(%arg0: i32) -> (i32, i32) {
    %c0_i32 = arith.constant 0 : i32
    %c0_i32_0 = arith.constant 0 : i32
    %c0_i32_1 = arith.constant 0 : i32
    return %c0_i32, %c0_i32_0 : i32, i32
  }
  func.func @transform_7(%arg0: i32) -> (i32, i32) {
    %c0_i32 = arith.constant 0 : i32
    %c0_i32_0 = arith.constant 0 : i32
    %c0_i32_1 = arith.constant 0 : i32
    return %c0_i32, %c0_i32_0 : i32, i32
  }
  func.func @transform_8(%arg0: i32) -> (i32, i32) {
    %c0_i32 = arith.constant 0 : i32
    %c0_i32_0 = arith.constant 0 : i32
    %c0_i32_1 = arith.constant 0 : i32
    return %c0_i32, %c0_i32_0 : i32, i32
  }
  func.func @transform_9(%arg0: i32) -> (i32, i32) {
    %c0_i32 = arith.constant 0 : i32
    %c0_i32_0 = arith.constant 0 : i32
    %c0_i32_1 = arith.constant 0 : i32
    return %c0_i32, %c0_i32_0 : i32, i32
  }
  func.func @transform_10(%arg0: i32) -> (i32, i32) {
    %c0_i32 = arith.constant 0 : i32
    %c0_i32_0 = arith.constant 0 : i32
    %c0_i32_1 = arith.constant 0 : i32
    return %c0_i32, %c0_i32_0 : i32, i32
  }
  func.func @transform_11(%arg0: i32) -> (i32, i32, i32) {
    %c0_i32 = arith.constant 0 : i32
    %c0_i32_0 = arith.constant 0 : i32
    %c0_i32_1 = arith.constant 0 : i32
    return %arg0, %c0_i32, %c0_i32_0 : i32, i32, i32
  }
}

</mosaic_0001>

<llo_original>
// kernel: lenet_cifar_forward.1
$region0: #{lenet_cifar_forward.1}
  #allocation0 [shape = 'u32[]', space=smem, size = 0x4, offset = 0x4, fixed_abs, tag = 'smem constant byte address 0x4 - core index']
  #allocation1 [shape = 'u32[144,128]{1,0:T(1,128)}', space=vmem, size = 0x12000, scoped, tag = 'internal scratch']
  %s0 = inlined_call_operand.vmem [shape: f32[2,4,8,96], index: 0, kind: input, shape index: {}]
  %s1 = inlined_call_operand.vmem [shape: f32[5,96,256], index: 1, kind: input, shape index: {}]
  %s2 = inlined_call_operand.vmem [shape: f32[1,256], index: 2, kind: input, shape index: {}]
  %s3 = inlined_call_operand.vmem [shape: f32[5,128,256], index: 3, kind: input, shape index: {}]
  %s4 = inlined_call_operand.vmem [shape: f32[1,256], index: 4, kind: input, shape index: {}]
  %s5 = inlined_call_operand.vmem [shape: f32[5,128,120], index: 5, kind: input, shape index: {}]
  %s6 = inlined_call_operand.vmem [shape: f32[1,120], index: 6, kind: input, shape index: {}]
  %s7 = inlined_call_operand.vmem [shape: f32[120,84], index: 7, kind: input, shape index: {}]
  %s8 = inlined_call_operand.vmem [shape: f32[1,84], index: 8, kind: input, shape index: {}]
  %s9 = inlined_call_operand.vmem [shape: f32[84,128], index: 9, kind: input, shape index: {}]
  %s10 = inlined_call_operand.vmem [shape: f32[1,128], index: 10, kind: input, shape index: {}]
  %s11 = inlined_call_operand.hbm [shape: f32[2,1,128], index: 11, kind: output, shape index: {}]
  %s12 = sld [smem:[#allocation0]]
  $region77: #{lenet_cifar_forward.1} parent=0
    _
  %s14 = ssub.s32 1, %s12
  %s15 = scalar_select 0, %s14, %s12
  $region1: #{lenet_cifar_forward.1} parent=0
    #allocation2 [shape = 'u8[1024]{0}', space=vmem, size = 0x400, scoped, tag = 'output window, operand 0']
    #allocation3 [shape = 's32[2]{0}', space=sflag, size = 0x8, scoped, tag = 'scoped memory for lenet_cifar_forward.1']
    %16 = vsyncpa [#allocation3], 0
    %s17 = scalar_lea.sflag [#allocation3], 1
    %18 = vsyncpa %s17, 0
    loop: start=0, step=1, limit=4
    $region2: #{lenet_cifar_forward.1} parent=1 // loop_pre_header
      _
    $region3: #{lenet_cifar_forward.1} parent=1 // loop_header
      %s20 = sphi 0, %s24
      %p21 = scmp.ge.s32.totalorder %s20, 4
      %s30 = sphi 0, %s32
      %s33 = sphi 0, %s30
      %s34 = sphi 0, %s33
      %s50 = sphi 0, %s34
      %s54 = sphi 0, %s54
      %s56 = sphi 0, %s54
      %s57 = sphi 0, %s56
      %s71 = sphi 0, %s57
      %s75 = sphi 0, %s75
      %s77 = sphi 0, %s75
      %s78 = sphi 0, %s77
      %s92 = sphi 0, %s78
      %s96 = sphi 0, %s96
      %s98 = sphi 0, %s96
      %s99 = sphi 0, %s98
      %s113 = sphi 0, %s99
      %s117 = sphi 0, %s117
      %s119 = sphi 0, %s117
      %s120 = sphi 0, %s119
      %s134 = sphi 0, %s120
      %s138 = sphi 0, %s138
      %s140 = sphi 0, %s138
      %s141 = sphi 0, %s140
      %s155 = sphi 0, %s141
      %s159 = sphi 0, %s159
      %s161 = sphi 0, %s159
      %s162 = sphi 0, %s161
      %s176 = sphi 0, %s162
      %s180 = sphi 0, %s180
      %s182 = sphi 0, %s180
      %s183 = sphi 0, %s182
      %s197 = sphi 0, %s183
      %s201 = sphi 0, %s201
      %s203 = sphi 0, %s201
      %s204 = sphi 0, %s203
      %s218 = sphi 0, %s204
      %s222 = sphi 0, %s222
      %s224 = sphi 0, %s222
      %s225 = sphi 0, %s224
      %s239 = sphi 0, %s225
      %s243 = sphi 0, %s243
      %s245 = sphi 0, %s243
      %s246 = sphi 0, %s245
      %s260 = sphi 0, %s246
      %s266 = sphi 0, %s268
      %s269 = sphi 0, %s266
      %s270 = sphi 0, %s269
      %s286 = sphi 0, %s270
    $region4: #{lenet_cifar_forward.1} parent=1 // loop_header_branch
      %23 = sbr.rel (%p21) target = $region8
    $region5: #{lenet_cifar_forward.1} parent=1 // loop_body
      %s25 = ssub.s32 %s20, 1
      %s26 = ssub.s32 %s20, 2
      %s27 = sadd.s32 %s20, 1
      %s28 = ssub.s32 %s20, %s27
      %p29 = scmp.eq.s32.totalorder %s28, 0
      %s31 = sadd.s32 %s30, 1
      %s32 = scalar_select %p29, %s30, %s31
      %p35 = pneg %p29
      %p36 = scmp.eq.s32.totalorder %s20, 1
      %p37 = por %p35, %p36
      %p38 = scmp.ne.s32.totalorder %s30, %s33
      %p39 = scmp.eq.s32.totalorder %s20, 0
      %p40 = por %p38, %p39
      %p41 = scmp.ne.s32.totalorder %s30, %s33
      %p42 = scmp.eq.s32.totalorder %s25, 1
      %p43 = por %p41, %p42
      %p44 = scmp.ne.s32.totalorder %s33, %s34
      %p45 = scmp.eq.s32.totalorder %s25, 0
      %p46 = por %p44, %p45
      %p47 = scmp.ne.s32.totalorder %s33, %s34
      %p48 = scmp.eq.s32.totalorder %s26, 1
      %p49 = por %p47, %p48
      %p51 = scmp.ne.s32.totalorder %s34, %s50
      %p52 = scmp.eq.s32.totalorder %s26, 0
      %p53 = por %p51, %p52
      %s55 = sadd.s32 %s54, 1
      %p58 = scmp.eq.s32.totalorder %s20, 1
      %p59 = scmp.ne.s32.totalorder %s54, %s56
      %p60 = scmp.eq.s32.totalorder %s20, 0
      %p61 = por %p59, %p60
      %p62 = scmp.ne.s32.totalorder %s54, %s56
      %p63 = scmp.eq.s32.totalorder %s25, 1
      %p64 = por %p62, %p63
      %p65 = scmp.ne.s32.totalorder %s56, %s57
      %p66 = scmp.eq.s32.totalorder %s25, 0
      %p67 = por %p65, %p66
      %p68 = scmp.ne.s32.totalorder %s56, %s57
      %p69 = scmp.eq.s32.totalorder %s26, 1
      %p70 = por %p68, %p69
      %p72 = scmp.ne.s32.totalorder %s57, %s71
      %p73 = scmp.eq.s32.totalorder %s26, 0
      %p74 = por %p72, %p73
      %s76 = sadd.s32 %s75, 1
      %p79 = scmp.eq.s32.totalorder %s20, 1
      %p80 = scmp.ne.s32.totalorder %s75, %s77
      %p81 = scmp.eq.s32.totalorder %s20, 0
      %p82 = por %p80, %p81
      %p83 = scmp.ne.s32.totalorder %s75, %s77
      %p84 = scmp.eq.s32.totalorder %s25, 1
      %p85 = por %p83, %p84
      %p86 = scmp.ne.s32.totalorder %s77, %s78
      %p87 = scmp.eq.s32.totalorder %s25, 0
      %p88 = por %p86, %p87
      %p89 = scmp.ne.s32.totalorder %s77, %s78
      %p90 = scmp.eq.s32.totalorder %s26, 1
      %p91 = por %p89, %p90
      %p93 = scmp.ne.s32.totalorder %s78, %s92
      %p94 = scmp.eq.s32.totalorder %s26, 0
      %p95 = por %p93, %p94
      %s97 = sadd.s32 %s96, 1
      %p100 = scmp.eq.s32.totalorder %s20, 1
      %p101 = scmp.ne.s32.totalorder %s96, %s98
      %p102 = scmp.eq.s32.totalorder %s20, 0
      %p103 = por %p101, %p102
      %p104 = scmp.ne.s32.totalorder %s96, %s98
      %p105 = scmp.eq.s32.totalorder %s25, 1
      %p106 = por %p104, %p105
      %p107 = scmp.ne.s32.totalorder %s98, %s99
      %p108 = scmp.eq.s32.totalorder %s25, 0
      %p109 = por %p107, %p108
      %p110 = scmp.ne.s32.totalorder %s98, %s99
      %p111 = scmp.eq.s32.totalorder %s26, 1
      %p112 = por %p110, %p111
      %p114 = scmp.ne.s32.totalorder %s99, %s113
      %p115 = scmp.eq.s32.totalorder %s26, 0
      %p116 = por %p114, %p115
      %s118 = sadd.s32 %s117, 1
      %p121 = scmp.eq.s32.totalorder %s20, 1
      %p122 = scmp.ne.s32.totalorder %s117, %s119
      %p123 = scmp.eq.s32.totalorder %s20, 0
      %p124 = por %p122, %p123
      %p125 = scmp.ne.s32.totalorder %s117, %s119
      %p126 = scmp.eq.s32.totalorder %s25, 1
      %p127 = por %p125, %p126
      %p128 = scmp.ne.s32.totalorder %s119, %s120
      %p129 = scmp.eq.s32.totalorder %s25, 0
      %p130 = por %p128, %p129
      %p131 = scmp.ne.s32.totalorder %s119, %s120
      %p132 = scmp.eq.s32.totalorder %s26, 1
      %p133 = por %p131, %p132
      %p135 = scmp.ne.s32.totalorder %s120, %s134
      %p136 = scmp.eq.s32.totalorder %s26, 0
      %p137 = por %p135, %p136
      %s139 = sadd.s32 %s138, 1
      %p142 = scmp.eq.s32.totalorder %s20, 1
      %p143 = scmp.ne.s32.totalorder %s138, %s140
      %p144 = scmp.eq.s32.totalorder %s20, 0
      %p145 = por %p143, %p144
      %p146 = scmp.ne.s32.totalorder %s138, %s140
      %p147 = scmp.eq.s32.totalorder %s25, 1
      %p148 = por %p146, %p147
      %p149 = scmp.ne.s32.totalorder %s140, %s141
      %p150 = scmp.eq.s32.totalorder %s25, 0
      %p151 = por %p149, %p150
      %p152 = scmp.ne.s32.totalorder %s140, %s141
      %p153 = scmp.eq.s32.totalorder %s26, 1
      %p154 = por %p152, %p153
      %p156 = scmp.ne.s32.totalorder %s141, %s155
      %p157 = scmp.eq.s32.totalorder %s26, 0
      %p158 = por %p156, %p157
      %s160 = sadd.s32 %s159, 1
      %p163 = scmp.eq.s32.totalorder %s20, 1
      %p164 = scmp.ne.s32.totalorder %s159, %s161
      %p165 = scmp.eq.s32.totalorder %s20, 0
      %p166 = por %p164, %p165
      %p167 = scmp.ne.s32.totalorder %s159, %s161
      %p168 = scmp.eq.s32.totalorder %s25, 1
      %p169 = por %p167, %p168
      %p170 = scmp.ne.s32.totalorder %s161, %s162
      %p171 = scmp.eq.s32.totalorder %s25, 0
      %p172 = por %p170, %p171
      %p173 = scmp.ne.s32.totalorder %s161, %s162
      %p174 = scmp.eq.s32.totalorder %s26, 1
      %p175 = por %p173, %p174
      %p177 = scmp.ne.s32.totalorder %s162, %s176
      %p178 = scmp.eq.s32.totalorder %s26, 0
      %p179 = por %p177, %p178
      %s181 = sadd.s32 %s180, 1
      %p184 = scmp.eq.s32.totalorder %s20, 1
      %p185 = scmp.ne.s32.totalorder %s180, %s182
      %p186 = scmp.eq.s32.totalorder %s20, 0
      %p187 = por %p185, %p186
      %p188 = scmp.ne.s32.totalorder %s180, %s182
      %p189 = scmp.eq.s32.totalorder %s25, 1
      %p190 = por %p188, %p189
      %p191 = scmp.ne.s32.totalorder %s182, %s183
      %p192 = scmp.eq.s32.totalorder %s25, 0
      %p193 = por %p191, %p192
      %p194 = scmp.ne.s32.totalorder %s182, %s183
      %p195 = scmp.eq.s32.totalorder %s26, 1
      %p196 = por %p194, %p195
      %p198 = scmp.ne.s32.totalorder %s183, %s197
      %p199 = scmp.eq.s32.totalorder %s26, 0
      %p200 = por %p198, %p199
      %s202 = sadd.s32 %s201, 1
      %p205 = scmp.eq.s32.totalorder %s20, 1
      %p206 = scmp.ne.s32.totalorder %s201, %s203
      %p207 = scmp.eq.s32.totalorder %s20, 0
      %p208 = por %p206, %p207
      %p209 = scmp.ne.s32.totalorder %s201, %s203
      %p210 = scmp.eq.s32.totalorder %s25, 1
      %p211 = por %p209, %p210
      %p212 = scmp.ne.s32.totalorder %s203, %s204
      %p213 = scmp.eq.s32.totalorder %s25, 0
      %p214 = por %p212, %p213
      %p215 = scmp.ne.s32.totalorder %s203, %s204
      %p216 = scmp.eq.s32.totalorder %s26, 1
      %p217 = por %p215, %p216
      %p219 = scmp.ne.s32.totalorder %s204, %s218
      %p220 = scmp.eq.s32.totalorder %s26, 0
      %p221 = por %p219, %p220
      %s223 = sadd.s32 %s222, 1
      %p226 = scmp.eq.s32.totalorder %s20, 1
      %p227 = scmp.ne.s32.totalorder %s222, %s224
      %p228 = scmp.eq.s32.totalorder %s20, 0
      %p229 = por %p227, %p228
      %p230 = scmp.ne.s32.totalorder %s222, %s224
      %p231 = scmp.eq.s32.totalorder %s25, 1
      %p232 = por %p230, %p231
      %p233 = scmp.ne.s32.totalorder %s224, %s225
      %p234 = scmp.eq.s32.totalorder %s25, 0
      %p235 = por %p233, %p234
      %p236 = scmp.ne.s32.totalorder %s224, %s225
      %p237 = scmp.eq.s32.totalorder %s26, 1
      %p238 = por %p236, %p237
      %p240 = scmp.ne.s32.totalorder %s225, %s239
      %p241 = scmp.eq.s32.totalorder %s26, 0
      %p242 = por %p240, %p241
      %s244 = sadd.s32 %s243, 1
      %p247 = scmp.eq.s32.totalorder %s20, 1
      %p248 = scmp.ne.s32.totalorder %s243, %s245
      %p249 = scmp.eq.s32.totalorder %s20, 0
      %p250 = por %p248, %p249
      %p251 = scmp.ne.s32.totalorder %s243, %s245
      %p252 = scmp.eq.s32.totalorder %s25, 1
      %p253 = por %p251, %p252
      %p254 = scmp.ne.s32.totalorder %s245, %s246
      %p255 = scmp.eq.s32.totalorder %s25, 0
      %p256 = por %p254, %p255
      %p257 = scmp.ne.s32.totalorder %s245, %s246
      %p258 = scmp.eq.s32.totalorder %s26, 1
      %p259 = por %p257, %p258
      %p261 = scmp.ne.s32.totalorder %s246, %s260
      %p262 = scmp.eq.s32.totalorder %s26, 0
      %p263 = por %p261, %p262
      %s264 = ssub.s32 %s20, %s27
      %p265 = scmp.eq.s32.totalorder %s264, 0
      %s267 = sadd.s32 %s266, 1
      %s268 = scalar_select %p265, %s266, %s267
      %p271 = pneg %p265
      %p272 = scmp.eq.s32.totalorder %s20, 1
      %p273 = por %p271, %p272
      %p274 = scmp.ne.s32.totalorder %s266, %s269
      %p275 = scmp.eq.s32.totalorder %s20, 0
      %p276 = por %p274, %p275
      %p277 = scmp.ne.s32.totalorder %s266, %s269
      %p278 = scmp.eq.s32.totalorder %s25, 1
      %p279 = por %p277, %p278
      %p280 = scmp.ne.s32.totalorder %s269, %s270
      %p281 = scmp.eq.s32.totalorder %s25, 0
      %p282 = por %p280, %p281
      %p283 = scmp.ne.s32.totalorder %s269, %s270
      %p284 = scmp.eq.s32.totalorder %s26, 1
      %p285 = por %p283, %p284
      %p287 = scmp.ne.s32.totalorder %s270, %s286
      %p288 = scmp.eq.s32.totalorder %s26, 0
      %p289 = por %p287, %p288
      %p290 = scmp.le.s32.totalorder 1, %s20
      %p291 = scmp.lt.s32.totalorder %s20, 3
      %p292 = pnand %p290, %p291
      %p293 = pneg %p292
      // Predicated region
      $region9: #{lenet_cifar_forward.1} parent=5 // pred_check
        _
      $region10: #{lenet_cifar_forward.1} parent=5 // pred_check_branch
        %295 = sbr.rel (%p292) target = $region12
      $region11: #{lenet_cifar_forward.1} parent=5 // pred_region
        %s296 = ssub.s32 %s20, 1
        // Predicated region
        $region13: #{lenet_cifar_forward.1} parent=11 // pred_check
          %p297 = pneg %p67
        $region14: #{lenet_cifar_forward.1} parent=11 // pred_check_branch
          %299 = sbr.rel (%p297) target = $region16
        $region15: #{lenet_cifar_forward.1} parent=11 // pred_region
          _
        $region16: #{lenet_cifar_forward.1} parent=11 // pred_fallthru
          _
        // Predicated region
        $region17: #{lenet_cifar_forward.1} parent=11 // pred_check
          %p300 = pneg %p88
        $region18: #{lenet_cifar_forward.1} parent=11 // pred_check_branch
          %302 = sbr.rel (%p300) target = $region20
        $region19: #{lenet_cifar_forward.1} parent=11 // pred_region
          _
        $region20: #{lenet_cifar_forward.1} parent=11 // pred_fallthru
          _
        // Predicated region
        $region21: #{lenet_cifar_forward.1} parent=11 // pred_check
          %p303 = pneg %p109
        $region22: #{lenet_cifar_forward.1} parent=11 // pred_check_branch
          %305 = sbr.rel (%p303) target = $region24
        $region23: #{lenet_cifar_forward.1} parent=11 // pred_region
          _
        $region24: #{lenet_cifar_forward.1} parent=11 // pred_fallthru
          _
        // Predicated region
        $region25: #{lenet_cifar_forward.1} parent=11 // pred_check
          %p306 = pneg %p130
        $region26: #{lenet_cifar_forward.1} parent=11 // pred_check_branch
          %308 = sbr.rel (%p306) target = $region28
        $region27: #{lenet_cifar_forward.1} parent=11 // pred_region
          _
        $region28: #{lenet_cifar_forward.1} parent=11 // pred_fallthru
          _
        // Predicated region
        $region29: #{lenet_cifar_forward.1} parent=11 // pred_check
          %p309 = pneg %p151
        $region30: #{lenet_cifar_forward.1} parent=11 // pred_check_branch
          %311 = sbr.rel (%p309) target = $region32
        $region31: #{lenet_cifar_forward.1} parent=11 // pred_region
          _
        $region32: #{lenet_cifar_forward.1} parent=11 // pred_fallthru
          _
        // Predicated region
        $region33: #{lenet_cifar_forward.1} parent=11 // pred_check
          %p312 = pneg %p172
        $region34: #{lenet_cifar_forward.1} parent=11 // pred_check_branch
          %314 = sbr.rel (%p312) target = $region36
        $region35: #{lenet_cifar_forward.1} parent=11 // pred_region
          _
        $region36: #{lenet_cifar_forward.1} parent=11 // pred_fallthru
          _
        // Predicated region
        $region37: #{lenet_cifar_forward.1} parent=11 // pred_check
          %p315 = pneg %p193
        $region38: #{lenet_cifar_forward.1} parent=11 // pred_check_branch
          %317 = sbr.rel (%p315) target = $region40
        $region39: #{lenet_cifar_forward.1} parent=11 // pred_region
          _
        $region40: #{lenet_cifar_forward.1} parent=11 // pred_fallthru
          _
        // Predicated region
        $region41: #{lenet_cifar_forward.1} parent=11 // pred_check
          %p318 = pneg %p214
        $region42: #{lenet_cifar_forward.1} parent=11 // pred_check_branch
          %320 = sbr.rel (%p318) target = $region44
        $region43: #{lenet_cifar_forward.1} parent=11 // pred_region
          _
        $region44: #{lenet_cifar_forward.1} parent=11 // pred_fallthru
          _
        // Predicated region
        $region45: #{lenet_cifar_forward.1} parent=11 // pred_check
          %p321 = pneg %p235
        $region46: #{lenet_cifar_forward.1} parent=11 // pred_check_branch
          %323 = sbr.rel (%p321) target = $region48
        $region47: #{lenet_cifar_forward.1} parent=11 // pred_region
          _
        $region48: #{lenet_cifar_forward.1} parent=11 // pred_fallthru
          _
        // Predicated region
        $region49: #{lenet_cifar_forward.1} parent=11 // pred_check
          %p324 = pneg %p256
        $region50: #{lenet_cifar_forward.1} parent=11 // pred_check_branch
          %326 = sbr.rel (%p324) target = $region52
        $region51: #{lenet_cifar_forward.1} parent=11 // pred_region
          _
        $region52: #{lenet_cifar_forward.1} parent=11 // pred_fallthru
          _
      $region12: #{lenet_cifar_forward.1} parent=5 // pred_fallthru
        _
      %p327 = scmp.lt.s32.totalorder %s20, 2
      // Predicated region
      $region53: #{lenet_cifar_forward.1} parent=5 // pred_check
        %p328 = pneg %p327
      $region54: #{lenet_cifar_forward.1} parent=5 // pred_check_branch
        %330 = sbr.rel (%p328) target = $region56
      $region55: #{lenet_cifar_forward.1} parent=5 // pred_region
        // Predicated region
        $region57: #{lenet_cifar_forward.1} parent=55 // pred_check
          %p331 = pneg %p40
        $region58: #{lenet_cifar_forward.1} parent=55 // pred_check_branch
          %333 = sbr.rel (%p331) target = $region60
        $region59: #{lenet_cifar_forward.1} parent=55 // pred_region
          %p334 = scmp.lt.s32.totalorder %s20, 1
          %s335 = scalar_select %p334, %s20, 1
          %s336 = smul.addr %s335, 4
          %s337 = smul.addr %s336, 8
          %s338 = scalar_lea.vmem %s0, %s337
        $region60: #{lenet_cifar_forward.1} parent=55 // pred_fallthru
          _
      $region56: #{lenet_cifar_forward.1} parent=5 // pred_fallthru
        _
      %p339 = scmp.le.s32.totalorder 1, %s20
      %p340 = scmp.lt.s32.totalorder %s20, 3
      %p341 = pnand %p339, %p340
      %p342 = pneg %p341
      // Predicated region
      $region61: #{lenet_cifar_forward.1} parent=5 // pred_check
        _
      $region62: #{lenet_cifar_forward.1} parent=5 // pred_check_branch
        %344 = sbr.rel (%p341) target = $region64
      $region63: #{lenet_cifar_forward.1} parent=5 // pred_region
        %s345 = ssub.s32 %s20, 1
        %p346 = scmp.lt.s32.totalorder %s25, 1
        %s347 = scalar_select %p346, %s25, 1
        %s348 = smul.addr %s347, 4
        %s349 = smul.addr %s348, 8
        %s350 = scalar_lea.vmem %s0, %s349
        %p351 = pneg %p46
        %p352 = pneg %p43
        %p353 = pneg %p67
        %p354 = pneg %p64
        %p355 = pneg %p88
        %p356 = pneg %p85
        %p357 = pneg %p109
        %p358 = pneg %p106
        %p359 = pneg %p130
        %p360 = pneg %p127
        %p361 = pneg %p151
        %p362 = pneg %p148
        %p363 = pneg %p172
        %p364 = pneg %p169
        %p365 = pneg %p193
        %p366 = pneg %p190
        %p367 = pneg %p214
        %p368 = pneg %p211
        %p369 = pneg %p235
        %p370 = pneg %p232
        %p371 = pneg %p256
        %p372 = pneg %p253
        %p373 = pneg %p282
        %p374 = pneg %p279
        %s375 = sand.u32 %s269, 1
        %s376 = scalar_lea.sflag [#allocation3], %s375
        %s377 = sand.u32 %s269, 1
        %s378 = scalar_lea.vmem [#allocation2], %s377
        %p379 = scmp.lt.s32.totalorder %s25, 1
        %s380 = scalar_select %p379, %s25, 1
        %s381 = smul.addr %s380, 4
        %s382 = smul.addr %s381, 8
        %s383 = scalar_lea.vmem %s0, %s382
        %v384 = vld [vmem:[%s2] sm:$0x3]
        %v385 = vld [vmem:[%s4] sm:$0x3]
        %v386 = vld [vmem:[%s383] sm:$0xff]
        %v387 = vld [vmem:[%s383 + $0x8] sm:$0xff]
        %v388 = vld [vmem:[%s383 + $0x10] sm:$0xff]
        %v389 = vld [vmem:[%s383 + $0x18] sm:$0xff]
        %v390 = vld [vmem:[%s1] sm:$0xff]
        %v391 = vld [vmem:[%s1 + $0x8] sm:$0xff]
        %v392 = vld [vmem:[%s1 + $0x10] sm:$0xff]
        %v393 = vld [vmem:[%s1 + $0x18] sm:$0xff]
        %v394 = vld [vmem:[%s1 + $0x20] sm:$0xff]
        %v395 = vld [vmem:[%s1 + $0x28] sm:$0xff]
        %v396 = vld [vmem:[%s1 + $0x30] sm:$0xff]
        %v397 = vld [vmem:[%s1 + $0x38] sm:$0xff]
        %v398 = vld [vmem:[%s1 + $0x40] sm:$0xff]
        %v399 = vld [vmem:[%s1 + $0x48] sm:$0xff]
        %v400 = vld [vmem:[%s1 + $0x50] sm:$0xff]
        %v401 = vld [vmem:[%s1 + $0x58] sm:$0xff]
        %v402 = vld [vmem:[%s1 + $0x60] sm:$0xff]
        %v403 = vld [vmem:[%s1 + $0x68] sm:$0xff]
        %v404 = vld [vmem:[%s1 + $0x70] sm:$0xff]
        %v405 = vld [vmem:[%s1 + $0x78] sm:$0xff]
        %v406 = vld [vmem:[%s1 + $0x80] sm:$0xff]
        %v407 = vld [vmem:[%s1 + $0x88] sm:$0xff]
        %v408 = vld [vmem:[%s1 + $0x90] sm:$0xff]
        %v409 = vld [vmem:[%s1 + $0x98] sm:$0xff]
        %v410 = vld [vmem:[%s1 + $0xa0] sm:$0xff]
        %v411 = vld [vmem:[%s1 + $0xa8] sm:$0xff]
        %v412 = vld [vmem:[%s1 + $0xb0] sm:$0xff]
        %v413 = vld [vmem:[%s1 + $0xb8] sm:$0xff]
        %s414 = scalar_lea.vmem %s1, 192
        %v415 = vld [vmem:[%s414] sm:$0xff]
        %v416 = vld [vmem:[%s414 + $0x8] sm:$0xff]
        %v417 = vld [vmem:[%s414 + $0x10] sm:$0xff]
        %v418 = vld [vmem:[%s414 + $0x18] sm:$0xff]
        %v419 = vld [vmem:[%s414 + $0x20] sm:$0xff]
        %v420 = vld [vmem:[%s414 + $0x28] sm:$0xff]
        %v421 = vld [vmem:[%s414 + $0x30] sm:$0xff]
        %v422 = vld [vmem:[%s414 + $0x38] sm:$0xff]
        %v423 = vld [vmem:[%s414 + $0x40] sm:$0xff]
        %v424 = vld [vmem:[%s414 + $0x48] sm:$0xff]
        %v425 = vld [vmem:[%s414 + $0x50] sm:$0xff]
        %v426 = vld [vmem:[%s414 + $0x58] sm:$0xff]
        %v427 = vld [vmem:[%s414 + $0x60] sm:$0xff]
        %v428 = vld [vmem:[%s414 + $0x68] sm:$0xff]
        %v429 = vld [vmem:[%s414 + $0x70] sm:$0xff]
        %v430 = vld [vmem:[%s414 + $0x78] sm:$0xff]
        %v431 = vld [vmem:[%s414 + $0x80] sm:$0xff]
        %v432 = vld [vmem:[%s414 + $0x88] sm:$0xff]
        %v433 = vld [vmem:[%s414 + $0x90] sm:$0xff]
        %v434 = vld [vmem:[%s414 + $0x98] sm:$0xff]
        %v435 = vld [vmem:[%s414 + $0xa0] sm:$0xff]
        %v436 = vld [vmem:[%s414 + $0xa8] sm:$0xff]
        %v437 = vld [vmem:[%s414 + $0xb0] sm:$0xff]
        %v438 = vld [vmem:[%s414 + $0xb8] sm:$0xff]
        %vm439 = vcmask 785408
        %v441 = vsel %vm439, %v387, 0
        %443 = vmatprep.subr.mxu0 %v416
        %444 = vmatpush1.msra.mxu0 %v415
        %445 = vmatprep.subr.mxu0 %v418
        %446 = vmatpush1.msra.mxu0 %v417
        %447 = vmatprep.subr.mxu0 %v420
        %448 = vmatpush1.msra.mxu0 %v419
        %449 = vmatprep.subr.mxu0 %v422
        %450 = vmatpush1.msra.mxu0 %v421
        %451 = vmatprep.subr.mxu0 %v424
        %452 = vmatpush1.msra.mxu0 %v423
        %453 = vmatprep.subr.mxu0 %v426
        %454 = vmatpush1.msra.mxu0 %v425
        %455 = vmatprep.subr.mxu0 %v428
        %456 = vmatpush1.msra.mxu0 %v427
        %457 = vmatprep.subr.mxu0 %v430
        %458 = vmatpush1.msra.mxu0 %v429
        %459 = vmatprep.subr.mxu0 %v432
        %460 = vmatpush1.msra.mxu0 %v431
        %461 = vmatprep.subr.mxu0 %v434
        %462 = vmatpush1.msra.mxu0 %v433
        %463 = vmatprep.subr.mxu0 %v436
        %464 = vmatpush1.msra.mxu0 %v435
        %465 = vmatprep.subr.mxu0 %v438
        %466 = vmatpush1.msra.mxu0 %v437
        %467 = vmatprep.subr.mxu0 0.0
        %468 = vmatpush1.msra.mxu0 0.0
        %469 = vmatprep.subr.mxu0 0.0
        %470 = vmatpush1.msra.mxu0 0.0
        %471 = vmatprep.subr.mxu0 0.0
        %472 = vmatpush1.msra.mxu0 0.0
        %473 = vmatprep.subr.mxu0 0.0
        %474 = vmatpush1.msra.mxu0 0.0
        %475 = vmatprep.subr.mxu0 0.0
        %476 = vmatpush1.msra.mxu0 0.0
        %477 = vmatprep.subr.mxu0 0.0
        %478 = vmatpush1.msra.mxu0 0.0
        %479 = vmatprep.subr.mxu0 0.0
        %480 = vmatpush1.msra.mxu0 0.0
        %481 = vmatprep.subr.mxu0 0.0
        %482 = vmatpush1.msra.mxu0 0.0
        %483 = vmatprep.subr.mxu0 0.0
        %484 = vmatpush1.msra.mxu0 0.0
        %485 = vmatprep.subr.mxu0 0.0
        %486 = vmatpush1.msra.mxu0 0.0
        %487 = vmatprep.subr.mxu0 0.0
        %488 = vmatpush1.msra.mxu0 0.0
        %489 = vmatprep.subr.mxu0 0.0
        %490 = vmatpush1.msra.mxu0 0.0
        %491 = vmatprep.subr.mxu0 0.0
        %492 = vmatpush1.msra.mxu0 0.0
        %493 = vmatprep.subr.mxu0 0.0
        %494 = vmatpush1.msra.mxu0 0.0
        %495 = vmatprep.subr.mxu0 0.0
        %496 = vmatpush1.msra.mxu0 0.0
        %497 = vmatprep.subr.mxu0 0.0
        %498 = vmatpush1.msra.mxu0 0.0
        %499 = vmatprep.subr.mxu0 0.0
        %500 = vmatpush1.msra.mxu0 0.0
        %501 = vmatprep.subr.mxu0 0.0
        %502 = vmatpush1.msra.mxu0 0.0
        %503 = vmatprep.subr.mxu0 0.0
        %504 = vmatpush1.msra.mxu0 0.0
        %505 = vmatprep.subr.mxu0 0.0
        %506 = vmatpush1.msra.mxu0 0.0
        %507 = vmatprep.mubr.f32.mxu0 0.0
        %508 = vmatmul.mubr.f32.gmra.mrb[0].mxu0 %v441
        %v509 = vpop.f32.mrb[0].mxu0
        %v510 = vadd.f32 0.0, %v509
        %v511 = vpop.f32.mrb[0].mxu0
        %v512 = vadd.f32 0.0, %v511
        %513 = vdwg.mxu0
        %v515 = vsel %vm439, %v386, 0
        %517 = vmatprep.subr.mxu0 %v391
        %518 = vmatpush1.msra.mxu0 %v390
        %519 = vmatprep.subr.mxu0 %v393
        %520 = vmatpush1.msra.mxu0 %v392
        %521 = vmatprep.subr.mxu0 %v395
        %522 = vmatpush1.msra.mxu0 %v394
        %523 = vmatprep.subr.mxu0 %v397
        %524 = vmatpush1.msra.mxu0 %v396
        %525 = vmatprep.subr.mxu0 %v399
        %526 = vmatpush1.msra.mxu0 %v398
        %527 = vmatprep.subr.mxu0 %v401
        %528 = vmatpush1.msra.mxu0 %v400
        %529 = vmatprep.subr.mxu0 %v403
        %530 = vmatpush1.msra.mxu0 %v402
        %531 = vmatprep.subr.mxu0 %v405
        %532 = vmatpush1.msra.mxu0 %v404
        %533 = vmatprep.subr.mxu0 %v407
        %534 = vmatpush1.msra.mxu0 %v406
        %535 = vmatprep.subr.mxu0 %v409
        %536 = vmatpush1.msra.mxu0 %v408
        %537 = vmatprep.subr.mxu0 %v411
        %538 = vmatpush1.msra.mxu0 %v410
        %539 = vmatprep.subr.mxu0 %v413
        %540 = vmatpush1.msra.mxu0 %v412
        %541 = vmatprep.subr.mxu0 0.0
        %542 = vmatpush1.msra.mxu0 0.0
        %543 = vmatprep.subr.mxu0 0.0
        %544 = vmatpush1.msra.mxu0 0.0
        %545 = vmatprep.subr.mxu0 0.0
        %546 = vmatpush1.msra.mxu0 0.0
        %547 = vmatprep.subr.mxu0 0.0
        %548 = vmatpush1.msra.mxu0 0.0
        %549 = vmatprep.subr.mxu0 0.0
        %550 = vmatpush1.msra.mxu0 0.0
        %551 = vmatprep.subr.mxu0 0.0
        %552 = vmatpush1.msra.mxu0 0.0
        %553 = vmatprep.subr.mxu0 0.0
        %554 = vmatpush1.msra.mxu0 0.0
        %555 = vmatprep.subr.mxu0 0.0
        %556 = vmatpush1.msra.mxu0 0.0
        %557 = vmatprep.subr.mxu0 0.0
        %558 = vmatpush1.msra.mxu0 0.0
        %559 = vmatprep.subr.mxu0 0.0
        %560 = vmatpush1.msra.mxu0 0.0
        %561 = vmatprep.subr.mxu0 0.0
        %562 = vmatpush1.msra.mxu0 0.0
        %563 = vmatprep.subr.mxu0 0.0
        %564 = vmatpush1.msra.mxu0 0.0
        %565 = vmatprep.subr.mxu0 0.0
        %566 = vmatpush1.msra.mxu0 0.0
        %567 = vmatprep.subr.mxu0 0.0
        %568 = vmatpush1.msra.mxu0 0.0
        %569 = vmatprep.subr.mxu0 0.0
        %570 = vmatpush1.msra.mxu0 0.0
        %571 = vmatprep.subr.mxu0 0.0
        %572 = vmatpush1.msra.mxu0 0.0
        %573 = vmatprep.subr.mxu0 0.0
        %574 = vmatpush1.msra.mxu0 0.0
        %575 = vmatprep.subr.mxu0 0.0
        %576 = vmatpush1.msra.mxu0 0.0
        %577 = vmatprep.subr.mxu0 0.0
        %578 = vmatpush1.msra.mxu0 0.0
        %579 = vmatprep.subr.mxu0 0.0
        %580 = vmatpush1.msra.mxu0 0.0
        %581 = vmatprep.mubr.f32.mxu0 0.0
        %582 = vmatmul.mubr.f32.gmra.mrb[0].mxu0 %v515
        %v583 = vpop.f32.mrb[0].mxu0
        %v584 = vadd.f32 %v510, %v583
        %v585 = vpop.f32.mrb[0].mxu0
        %v586 = vadd.f32 %v512, %v585
        %587 = vdwg.mxu0
        %s588 = scalar_lea.vmem %s1, 384
        %v589 = vld [vmem:[%s588] sm:$0xff]
        %v590 = vld [vmem:[%s588 + $0x8] sm:$0xff]
        %v591 = vld [vmem:[%s588 + $0x10] sm:$0xff]
        %v592 = vld [vmem:[%s588 + $0x18] sm:$0xff]
        %v593 = vld [vmem:[%s588 + $0x20] sm:$0xff]
        %v594 = vld [vmem:[%s588 + $0x28] sm:$0xff]
        %v595 = vld [vmem:[%s588 + $0x30] sm:$0xff]
        %v596 = vld [vmem:[%s588 + $0x38] sm:$0xff]
        %v597 = vld [vmem:[%s588 + $0x40] sm:$0xff]
        %v598 = vld [vmem:[%s588 + $0x48] sm:$0xff]
        %v599 = vld [vmem:[%s588 + $0x50] sm:$0xff]
        %v600 = vld [vmem:[%s588 + $0x58] sm:$0xff]
        %v601 = vld [vmem:[%s588 + $0x60] sm:$0xff]
        %v602 = vld [vmem:[%s588 + $0x68] sm:$0xff]
        %v603 = vld [vmem:[%s588 + $0x70] sm:$0xff]
        %v604 = vld [vmem:[%s588 + $0x78] sm:$0xff]
        %v605 = vld [vmem:[%s588 + $0x80] sm:$0xff]
        %v606 = vld [vmem:[%s588 + $0x88] sm:$0xff]
        %v607 = vld [vmem:[%s588 + $0x90] sm:$0xff]
        %v608 = vld [vmem:[%s588 + $0x98] sm:$0xff]
        %v609 = vld [vmem:[%s588 + $0xa0] sm:$0xff]
        %v610 = vld [vmem:[%s588 + $0xa8] sm:$0xff]
        %v611 = vld [vmem:[%s588 + $0xb0] sm:$0xff]
        %v612 = vld [vmem:[%s588 + $0xb8] sm:$0xff]
        %v614 = vsel %vm439, %v388, 0
        %616 = vmatprep.subr.mxu0 %v590
        %617 = vmatpush1.msra.mxu0 %v589
        %618 = vmatprep.subr.mxu0 %v592
        %619 = vmatpush1.msra.mxu0 %v591
        %620 = vmatprep.subr.mxu0 %v594
        %621 = vmatpush1.msra.mxu0 %v593
        %622 = vmatprep.subr.mxu0 %v596
        %623 = vmatpush1.msra.mxu0 %v595
        %624 = vmatprep.subr.mxu0 %v598
        %625 = vmatpush1.msra.mxu0 %v597
        %626 = vmatprep.subr.mxu0 %v600
        %627 = vmatpush1.msra.mxu0 %v599
        %628 = vmatprep.subr.mxu0 %v602
        %629 = vmatpush1.msra.mxu0 %v601
        %630 = vmatprep.subr.mxu0 %v604
        %631 = vmatpush1.msra.mxu0 %v603
        %632 = vmatprep.subr.mxu0 %v606
        %633 = vmatpush1.msra.mxu0 %v605
        %634 = vmatprep.subr.mxu0 %v608
        %635 = vmatpush1.msra.mxu0 %v607
        %636 = vmatprep.subr.mxu0 %v610
        %637 = vmatpush1.msra.mxu0 %v609
        %638 = vmatprep.subr.mxu0 %v612
        %639 = vmatpush1.msra.mxu0 %v611
        %640 = vmatprep.subr.mxu0 0.0
        %641 = vmatpush1.msra.mxu0 0.0
        %642 = vmatprep.subr.mxu0 0.0
        %643 = vmatpush1.msra.mxu0 0.0
        %644 = vmatprep.subr.mxu0 0.0
        %645 = vmatpush1.msra.mxu0 0.0
        %646 = vmatprep.subr.mxu0 0.0
        %647 = vmatpush1.msra.mxu0 0.0
        %648 = vmatprep.subr.mxu0 0.0
        %649 = vmatpush1.msra.mxu0 0.0
        %650 = vmatprep.subr.mxu0 0.0
        %651 = vmatpush1.msra.mxu0 0.0
        %652 = vmatprep.subr.mxu0 0.0
        %653 = vmatpush1.msra.mxu0 0.0
        %654 = vmatprep.subr.mxu0 0.0
        %655 = vmatpush1.msra.mxu0 0.0
        %656 = vmatprep.subr.mxu0 0.0
        %657 = vmatpush1.msra.mxu0 0.0
        %658 = vmatprep.subr.mxu0 0.0
        %659 = vmatpush1.msra.mxu0 0.0
        %660 = vmatprep.subr.mxu0 0.0
        %661 = vmatpush1.msra.mxu0 0.0
        %662 = vmatprep.subr.mxu0 0.0
        %663 = vmatpush1.msra.mxu0 0.0
        %664 = vmatprep.subr.mxu0 0.0
        %665 = vmatpush1.msra.mxu0 0.0
        %666 = vmatprep.subr.mxu0 0.0
        %667 = vmatpush1.msra.mxu0 0.0
        %668 = vmatprep.subr.mxu0 0.0
        %669 = vmatpush1.msra.mxu0 0.0
        %670 = vmatprep.subr.mxu0 0.0
        %671 = vmatpush1.msra.mxu0 0.0
        %672 = vmatprep.subr.mxu0 0.0
        %673 = vmatpush1.msra.mxu0 0.0
        %674 = vmatprep.subr.mxu0 0.0
        %675 = vmatpush1.msra.mxu0 0.0
        %676 = vmatprep.subr.mxu0 0.0
        %677 = vmatpush1.msra.mxu0 0.0
        %678 = vmatprep.subr.mxu0 0.0
        %679 = vmatpush1.msra.mxu0 0.0
        %680 = vmatprep.mubr.f32.mxu0 0.0
        %681 = vmatmul.mubr.f32.gmra.mrb[0].mxu0 %v614
        %v682 = vpop.f32.mrb[0].mxu0
        %v683 = vadd.f32 0.0, %v682
        %v684 = vpop.f32.mrb[0].mxu0
        %v685 = vadd.f32 0.0, %v684
        %686 = vdwg.mxu0
        %v687 = vadd.f32 %v584, %v683
        %v688 = vadd.f32 %v586, %v685
        %s689 = scalar_lea.vmem %s1, 576
        %v690 = vld [vmem:[%s689] sm:$0xff]
        %v691 = vld [vmem:[%s689 + $0x8] sm:$0xff]
        %v692 = vld [vmem:[%s689 + $0x10] sm:$0xff]
        %v693 = vld [vmem:[%s689 + $0x18] sm:$0xff]
        %v694 = vld [vmem:[%s689 + $0x20] sm:$0xff]
        %v695 = vld [vmem:[%s689 + $0x28] sm:$0xff]
        %v696 = vld [vmem:[%s689 + $0x30] sm:$0xff]
        %v697 = vld [vmem:[%s689 + $0x38] sm:$0xff]
        %v698 = vld [vmem:[%s689 + $0x40] sm:$0xff]
        %v699 = vld [vmem:[%s689 + $0x48] sm:$0xff]
        %v700 = vld [vmem:[%s689 + $0x50] sm:$0xff]
        %v701 = vld [vmem:[%s689 + $0x58] sm:$0xff]
        %v702 = vld [vmem:[%s689 + $0x60] sm:$0xff]
        %v703 = vld [vmem:[%s689 + $0x68] sm:$0xff]
        %v704 = vld [vmem:[%s689 + $0x70] sm:$0xff]
        %v705 = vld [vmem:[%s689 + $0x78] sm:$0xff]
        %v706 = vld [vmem:[%s689 + $0x80] sm:$0xff]
        %v707 = vld [vmem:[%s689 + $0x88] sm:$0xff]
        %v708 = vld [vmem:[%s689 + $0x90] sm:$0xff]
        %v709 = vld [vmem:[%s689 + $0x98] sm:$0xff]
        %v710 = vld [vmem:[%s689 + $0xa0] sm:$0xff]
        %v711 = vld [vmem:[%s689 + $0xa8] sm:$0xff]
        %v712 = vld [vmem:[%s689 + $0xb0] sm:$0xff]
        %v713 = vld [vmem:[%s689 + $0xb8] sm:$0xff]
        %v715 = vsel %vm439, %v389, 0
        %717 = vmatprep.subr.mxu0 %v691
        %718 = vmatpush1.msra.mxu0 %v690
        %719 = vmatprep.subr.mxu0 %v693
        %720 = vmatpush1.msra.mxu0 %v692
        %721 = vmatprep.subr.mxu0 %v695
        %722 = vmatpush1.msra.mxu0 %v694
        %723 = vmatprep.subr.mxu0 %v697
        %724 = vmatpush1.msra.mxu0 %v696
        %725 = vmatprep.subr.mxu0 %v699
        %726 = vmatpush1.msra.mxu0 %v698
        %727 = vmatprep.subr.mxu0 %v701
        %728 = vmatpush1.msra.mxu0 %v700
        %729 = vmatprep.subr.mxu0 %v703
        %730 = vmatpush1.msra.mxu0 %v702
        %731 = vmatprep.subr.mxu0 %v705
        %732 = vmatpush1.msra.mxu0 %v704
        %733 = vmatprep.subr.mxu0 %v707
        %734 = vmatpush1.msra.mxu0 %v706
        %735 = vmatprep.subr.mxu0 %v709
        %736 = vmatpush1.msra.mxu0 %v708
        %737 = vmatprep.subr.mxu0 %v711
        %738 = vmatpush1.msra.mxu0 %v710
        %739 = vmatprep.subr.mxu0 %v713
        %740 = vmatpush1.msra.mxu0 %v712
        %741 = vmatprep.subr.mxu0 0.0
        %742 = vmatpush1.msra.mxu0 0.0
        %743 = vmatprep.subr.mxu0 0.0
        %744 = vmatpush1.msra.mxu0 0.0
        %745 = vmatprep.subr.mxu0 0.0
        %746 = vmatpush1.msra.mxu0 0.0
        %747 = vmatprep.subr.mxu0 0.0
        %748 = vmatpush1.msra.mxu0 0.0
        %749 = vmatprep.subr.mxu0 0.0
        %750 = vmatpush1.msra.mxu0 0.0
        %751 = vmatprep.subr.mxu0 0.0
        %752 = vmatpush1.msra.mxu0 0.0
        %753 = vmatprep.subr.mxu0 0.0
        %754 = vmatpush1.msra.mxu0 0.0
        %755 = vmatprep.subr.mxu0 0.0
        %756 = vmatpush1.msra.mxu0 0.0
        %757 = vmatprep.subr.mxu0 0.0
        %758 = vmatpush1.msra.mxu0 0.0
        %759 = vmatprep.subr.mxu0 0.0
        %760 = vmatpush1.msra.mxu0 0.0
        %761 = vmatprep.subr.mxu0 0.0
        %762 = vmatpush1.msra.mxu0 0.0
        %763 = vmatprep.subr.mxu0 0.0
        %764 = vmatpush1.msra.mxu0 0.0
        %765 = vmatprep.subr.mxu0 0.0
        %766 = vmatpush1.msra.mxu0 0.0
        %767 = vmatprep.subr.mxu0 0.0
        %768 = vmatpush1.msra.mxu0 0.0
        %769 = vmatprep.subr.mxu0 0.0
        %770 = vmatpush1.msra.mxu0 0.0
        %771 = vmatprep.subr.mxu0 0.0
        %772 = vmatpush1.msra.mxu0 0.0
        %773 = vmatprep.subr.mxu0 0.0
        %774 = vmatpush1.msra.mxu0 0.0
        %775 = vmatprep.subr.mxu0 0.0
        %776 = vmatpush1.msra.mxu0 0.0
        %777 = vmatprep.subr.mxu0 0.0
        %778 = vmatpush1.msra.mxu0 0.0
        %779 = vmatprep.subr.mxu0 0.0
        %780 = vmatpush1.msra.mxu0 0.0
        %781 = vmatprep.mubr.f32.mxu0 0.0
        %782 = vmatmul.mubr.f32.gmra.mrb[0].mxu0 %v715
        %v783 = vpop.f32.mrb[0].mxu0
        %v784 = vadd.f32 0.0, %v783
        %v785 = vpop.f32.mrb[0].mxu0
        %v786 = vadd.f32 0.0, %v785
        %787 = vdwg.mxu0
        %v788 = vadd.f32 %v687, %v784
        %v789 = vadd.f32 %v688, %v786
        %s790 = scalar_lea.vmem %s1, 768
        %v791 = vld [vmem:[%s790] sm:$0xff]
        %v792 = vld [vmem:[%s790 + $0x8] sm:$0xff]
        %v793 = vld [vmem:[%s790 + $0x10] sm:$0xff]
        %v794 = vld [vmem:[%s790 + $0x18] sm:$0xff]
        %v795 = vld [vmem:[%s790 + $0x20] sm:$0xff]
        %v796 = vld [vmem:[%s790 + $0x28] sm:$0xff]
        %v797 = vld [vmem:[%s790 + $0x30] sm:$0xff]
        %v798 = vld [vmem:[%s790 + $0x38] sm:$0xff]
        %v799 = vld [vmem:[%s790 + $0x40] sm:$0xff]
        %v800 = vld [vmem:[%s790 + $0x48] sm:$0xff]
        %v801 = vld [vmem:[%s790 + $0x50] sm:$0xff]
        %v802 = vld [vmem:[%s790 + $0x58] sm:$0xff]
        %v803 = vld [vmem:[%s790 + $0x60] sm:$0xff]
        %v804 = vld [vmem:[%s790 + $0x68] sm:$0xff]
        %v805 = vld [vmem:[%s790 + $0x70] sm:$0xff]
        %v806 = vld [vmem:[%s790 + $0x78] sm:$0xff]
        %v807 = vld [vmem:[%s790 + $0x80] sm:$0xff]
        %v808 = vld [vmem:[%s790 + $0x88] sm:$0xff]
        %v809 = vld [vmem:[%s790 + $0x90] sm:$0xff]
        %v810 = vld [vmem:[%s790 + $0x98] sm:$0xff]
        %v811 = vld [vmem:[%s790 + $0xa0] sm:$0xff]
        %v812 = vld [vmem:[%s790 + $0xa8] sm:$0xff]
        %v813 = vld [vmem:[%s790 + $0xb0] sm:$0xff]
        %v814 = vld [vmem:[%s790 + $0xb8] sm:$0xff]
        %v815 = vrot.slane %v386, 1
        %v816 = vsel %vm439, %v815, 0
        %818 = vmatprep.subr.mxu0 %v792
        %819 = vmatpush1.msra.mxu0 %v791
        %820 = vmatprep.subr.mxu0 %v794
        %821 = vmatpush1.msra.mxu0 %v793
        %822 = vmatprep.subr.mxu0 %v796
        %823 = vmatpush1.msra.mxu0 %v795
        %824 = vmatprep.subr.mxu0 %v798
        %825 = vmatpush1.msra.mxu0 %v797
        %826 = vmatprep.subr.mxu0 %v800
        %827 = vmatpush1.msra.mxu0 %v799
        %828 = vmatprep.subr.mxu0 %v802
        %829 = vmatpush1.msra.mxu0 %v801
        %830 = vmatprep.subr.mxu0 %v804
        %831 = vmatpush1.msra.mxu0 %v803
        %832 = vmatprep.subr.mxu0 %v806
        %833 = vmatpush1.msra.mxu0 %v805
        %834 = vmatprep.subr.mxu0 %v808
        %835 = vmatpush1.msra.mxu0 %v807
        %836 = vmatprep.subr.mxu0 %v810
        %837 = vmatpush1.msra.mxu0 %v809
        %838 = vmatprep.subr.mxu0 %v812
        %839 = vmatpush1.msra.mxu0 %v811
        %840 = vmatprep.subr.mxu0 %v814
        %841 = vmatpush1.msra.mxu0 %v813
        %842 = vmatprep.subr.mxu0 0.0
        %843 = vmatpush1.msra.mxu0 0.0
        %844 = vmatprep.subr.mxu0 0.0
        %845 = vmatpush1.msra.mxu0 0.0
        %846 = vmatprep.subr.mxu0 0.0
        %847 = vmatpush1.msra.mxu0 0.0
        %848 = vmatprep.subr.mxu0 0.0
        %849 = vmatpush1.msra.mxu0 0.0
        %850 = vmatprep.subr.mxu0 0.0
        %851 = vmatpush1.msra.mxu0 0.0
        %852 = vmatprep.subr.mxu0 0.0
        %853 = vmatpush1.msra.mxu0 0.0
        %854 = vmatprep.subr.mxu0 0.0
        %855 = vmatpush1.msra.mxu0 0.0
        %856 = vmatprep.subr.mxu0 0.0
        %857 = vmatpush1.msra.mxu0 0.0
        %858 = vmatprep.subr.mxu0 0.0
        %859 = vmatpush1.msra.mxu0 0.0
        %860 = vmatprep.subr.mxu0 0.0
        %861 = vmatpush1.msra.mxu0 0.0
        %862 = vmatprep.subr.mxu0 0.0
        %863 = vmatpush1.msra.mxu0 0.0
        %864 = vmatprep.subr.mxu0 0.0
        %865 = vmatpush1.msra.mxu0 0.0
        %866 = vmatprep.subr.mxu0 0.0
        %867 = vmatpush1.msra.mxu0 0.0
        %868 = vmatprep.subr.mxu0 0.0
        %869 = vmatpush1.msra.mxu0 0.0
        %870 = vmatprep.subr.mxu0 0.0
        %871 = vmatpush1.msra.mxu0 0.0
        %872 = vmatprep.subr.mxu0 0.0
        %873 = vmatpush1.msra.mxu0 0.0
        %874 = vmatprep.subr.mxu0 0.0
        %875 = vmatpush1.msra.mxu0 0.0
        %876 = vmatprep.subr.mxu0 0.0
        %877 = vmatpush1.msra.mxu0 0.0
        %878 = vmatprep.subr.mxu0 0.0
        %879 = vmatpush1.msra.mxu0 0.0
        %880 = vmatprep.subr.mxu0 0.0
        %881 = vmatpush1.msra.mxu0 0.0
        %882 = vmatprep.mubr.f32.mxu0 0.0
        %883 = vmatmul.mubr.f32.gmra.mrb[0].mxu0 %v816
        %v884 = vpop.f32.mrb[0].mxu0
        %v885 = vadd.f32 0.0, %v884
        %v886 = vpop.f32.mrb[0].mxu0
        %v887 = vadd.f32 0.0, %v886
        %888 = vdwg.mxu0
        %v889 = vadd.f32 %v788, %v885
        %v890 = vadd.f32 %v789, %v887
        %v892 = vlaneseq
        %v893 = vshrl.u32 %v892, 7
        %v894 = vsub.s32 0, %v893
        %v895 = vrot.slane %v384, %v894
        %v896 = vlaneseq
        %v897 = vshrl.u32 %v896, 7
        %v898 = vsub.s32 1, %v897
        %v899 = vrot.slane %v384, %v898
        %v902 = vadd.f32 %v889, %v895
        %v903 = vadd.f32 %v890, %v899
        %v904 = vmax.f32 %v902, 0.0
        %v905 = vmax.f32 %v903, 0.0
        %906 = vmatprep.subr.mxu0 %v416
        %907 = vmatpush1.msra.mxu0 %v415
        %908 = vmatprep.subr.mxu0 %v418
        %909 = vmatpush1.msra.mxu0 %v417
        %910 = vmatprep.subr.mxu0 %v420
        %911 = vmatpush1.msra.mxu0 %v419
        %912 = vmatprep.subr.mxu0 %v422
        %913 = vmatpush1.msra.mxu0 %v421
        %914 = vmatprep.subr.mxu0 %v424
        %915 = vmatpush1.msra.mxu0 %v423
        %916 = vmatprep.subr.mxu0 %v426
        %917 = vmatpush1.msra.mxu0 %v425
        %918 = vmatprep.subr.mxu0 %v428
        %919 = vmatpush1.msra.mxu0 %v427
        %920 = vmatprep.subr.mxu0 %v430
        %921 = vmatpush1.msra.mxu0 %v429
        %922 = vmatprep.subr.mxu0 %v432
        %923 = vmatpush1.msra.mxu0 %v431
        %924 = vmatprep.subr.mxu0 %v434
        %925 = vmatpush1.msra.mxu0 %v433
        %926 = vmatprep.subr.mxu0 %v436
        %927 = vmatpush1.msra.mxu0 %v435
        %928 = vmatprep.subr.mxu0 %v438
        %929 = vmatpush1.msra.mxu0 %v437
        %930 = vmatprep.subr.mxu0 0.0
        %931 = vmatpush1.msra.mxu0 0.0
        %932 = vmatprep.subr.mxu0 0.0
        %933 = vmatpush1.msra.mxu0 0.0
        %934 = vmatprep.subr.mxu0 0.0
        %935 = vmatpush1.msra.mxu0 0.0
        %936 = vmatprep.subr.mxu0 0.0
        %937 = vmatpush1.msra.mxu0 0.0
        %938 = vmatprep.subr.mxu0 0.0
        %939 = vmatpush1.msra.mxu0 0.0
        %940 = vmatprep.subr.mxu0 0.0
        %941 = vmatpush1.msra.mxu0 0.0
        %942 = vmatprep.subr.mxu0 0.0
        %943 = vmatpush1.msra.mxu0 0.0
        %944 = vmatprep.subr.mxu0 0.0
        %945 = vmatpush1.msra.mxu0 0.0
        %946 = vmatprep.subr.mxu0 0.0
        %947 = vmatpush1.msra.mxu0 0.0
        %948 = vmatprep.subr.mxu0 0.0
        %949 = vmatpush1.msra.mxu0 0.0
        %950 = vmatprep.subr.mxu0 0.0
        %951 = vmatpush1.msra.mxu0 0.0
        %952 = vmatprep.subr.mxu0 0.0
        %953 = vmatpush1.msra.mxu0 0.0
        %954 = vmatprep.subr.mxu0 0.0
        %955 = vmatpush1.msra.mxu0 0.0
        %956 = vmatprep.subr.mxu0 0.0
        %957 = vmatpush1.msra.mxu0 0.0
        %958 = vmatprep.subr.mxu0 0.0
        %959 = vmatpush1.msra.mxu0 0.0
        %960 = vmatprep.subr.mxu0 0.0
        %961 = vmatpush1.msra.mxu0 0.0
        %962 = vmatprep.subr.mxu0 0.0
        %963 = vmatpush1.msra.mxu0 0.0
        %964 = vmatprep.subr.mxu0 0.0
        %965 = vmatpush1.msra.mxu0 0.0
        %966 = vmatprep.subr.mxu0 0.0
        %967 = vmatpush1.msra.mxu0 0.0
        %968 = vmatprep.subr.mxu0 0.0
        %969 = vmatpush1.msra.mxu0 0.0
        %970 = vmatprep.mubr.f32.mxu0 0.0
        %971 = vmatmul.mubr.f32.gmra.mrb[0].mxu0 %v614
        %v972 = vpop.f32.mrb[0].mxu0
        %v973 = vadd.f32 0.0, %v972
        %v974 = vpop.f32.mrb[0].mxu0
        %v975 = vadd.f32 0.0, %v974
        %976 = vdwg.mxu0
        %977 = vmatprep.subr.mxu0 %v391
        %978 = vmatpush1.msra.mxu0 %v390
        %979 = vmatprep.subr.mxu0 %v393
        %980 = vmatpush1.msra.mxu0 %v392
        %981 = vmatprep.subr.mxu0 %v395
        %982 = vmatpush1.msra.mxu0 %v394
        %983 = vmatprep.subr.mxu0 %v397
        %984 = vmatpush1.msra.mxu0 %v396
        %985 = vmatprep.subr.mxu0 %v399
        %986 = vmatpush1.msra.mxu0 %v398
        %987 = vmatprep.subr.mxu0 %v401
        %988 = vmatpush1.msra.mxu0 %v400
        %989 = vmatprep.subr.mxu0 %v403
        %990 = vmatpush1.msra.mxu0 %v402
        %991 = vmatprep.subr.mxu0 %v405
        %992 = vmatpush1.msra.mxu0 %v404
        %993 = vmatprep.subr.mxu0 %v407
        %994 = vmatpush1.msra.mxu0 %v406
        %995 = vmatprep.subr.mxu0 %v409
        %996 = vmatpush1.msra.mxu0 %v408
        %997 = vmatprep.subr.mxu0 %v411
        %998 = vmatpush1.msra.mxu0 %v410
        %999 = vmatprep.subr.mxu0 %v413
        %1000 = vmatpush1.msra.mxu0 %v412
        %1001 = vmatprep.subr.mxu0 0.0
        %1002 = vmatpush1.msra.mxu0 0.0
        %1003 = vmatprep.subr.mxu0 0.0
        %1004 = vmatpush1.msra.mxu0 0.0
        %1005 = vmatprep.subr.mxu0 0.0
        %1006 = vmatpush1.msra.mxu0 0.0
        %1007 = vmatprep.subr.mxu0 0.0
        %1008 = vmatpush1.msra.mxu0 0.0
        %1009 = vmatprep.subr.mxu0 0.0
        %1010 = vmatpush1.msra.mxu0 0.0
        %1011 = vmatprep.subr.mxu0 0.0
        %1012 = vmatpush1.msra.mxu0 0.0
        %1013 = vmatprep.subr.mxu0 0.0
        %1014 = vmatpush1.msra.mxu0 0.0
        %1015 = vmatprep.subr.mxu0 0.0
        %1016 = vmatpush1.msra.mxu0 0.0
        %1017 = vmatprep.subr.mxu0 0.0
        %1018 = vmatpush1.msra.mxu0 0.0
        %1019 = vmatprep.subr.mxu0 0.0
        %1020 = vmatpush1.msra.mxu0 0.0
        %1021 = vmatprep.subr.mxu0 0.0
        %1022 = vmatpush1.msra.mxu0 0.0
        %1023 = vmatprep.subr.mxu0 0.0
        %1024 = vmatpush1.msra.mxu0 0.0
        %1025 = vmatprep.subr.mxu0 0.0
        %1026 = vmatpush1.msra.mxu0 0.0
        %1027 = vmatprep.subr.mxu0 0.0
        %1028 = vmatpush1.msra.mxu0 0.0
        %1029 = vmatprep.subr.mxu0 0.0
        %1030 = vmatpush1.msra.mxu0 0.0
        %1031 = vmatprep.subr.mxu0 0.0
        %1032 = vmatpush1.msra.mxu0 0.0
        %1033 = vmatprep.subr.mxu0 0.0
        %1034 = vmatpush1.msra.mxu0 0.0
        %1035 = vmatprep.subr.mxu0 0.0
        %1036 = vmatpush1.msra.mxu0 0.0
        %1037 = vmatprep.subr.mxu0 0.0
        %1038 = vmatpush1.msra.mxu0 0.0
        %1039 = vmatprep.subr.mxu0 0.0
        %1040 = vmatpush1.msra.mxu0 0.0
        %1041 = vmatprep.mubr.f32.mxu0 0.0
        %1042 = vmatmul.mubr.f32.gmra.mrb[0].mxu0 %v441
        %v1043 = vpop.f32.mrb[0].mxu0
        %v1044 = vadd.f32 %v973, %v1043
        %v1045 = vpop.f32.mrb[0].mxu0
        %v1046 = vadd.f32 %v975, %v1045
        %1047 = vdwg.mxu0
        %1048 = vmatprep.subr.mxu0 %v590
        %1049 = vmatpush1.msra.mxu0 %v589
        %1050 = vmatprep.subr.mxu0 %v592
        %1051 = vmatpush1.msra.mxu0 %v591
        %1052 = vmatprep.subr.mxu0 %v594
        %1053 = vmatpush1.msra.mxu0 %v593
        %1054 = vmatprep.subr.mxu0 %v596
        %1055 = vmatpush1.msra.mxu0 %v595
        %1056 = vmatprep.subr.mxu0 %v598
        %1057 = vmatpush1.msra.mxu0 %v597
        %1058 = vmatprep.subr.mxu0 %v600
        %1059 = vmatpush1.msra.mxu0 %v599
        %1060 = vmatprep.subr.mxu0 %v602
        %1061 = vmatpush1.msra.mxu0 %v601
        %1062 = vmatprep.subr.mxu0 %v604
        %1063 = vmatpush1.msra.mxu0 %v603
        %1064 = vmatprep.subr.mxu0 %v606
        %1065 = vmatpush1.msra.mxu0 %v605
        %1066 = vmatprep.subr.mxu0 %v608
        %1067 = vmatpush1.msra.mxu0 %v607
        %1068 = vmatprep.subr.mxu0 %v610
        %1069 = vmatpush1.msra.mxu0 %v609
        %1070 = vmatprep.subr.mxu0 %v612
        %1071 = vmatpush1.msra.mxu0 %v611
        %1072 = vmatprep.subr.mxu0 0.0
        %1073 = vmatpush1.msra.mxu0 0.0
        %1074 = vmatprep.subr.mxu0 0.0
        %1075 = vmatpush1.msra.mxu0 0.0
        %1076 = vmatprep.subr.mxu0 0.0
        %1077 = vmatpush1.msra.mxu0 0.0
        %1078 = vmatprep.subr.mxu0 0.0
        %1079 = vmatpush1.msra.mxu0 0.0
        %1080 = vmatprep.subr.mxu0 0.0
        %1081 = vmatpush1.msra.mxu0 0.0
        %1082 = vmatprep.subr.mxu0 0.0
        %1083 = vmatpush1.msra.mxu0 0.0
        %1084 = vmatprep.subr.mxu0 0.0
        %1085 = vmatpush1.msra.mxu0 0.0
        %1086 = vmatprep.subr.mxu0 0.0
        %1087 = vmatpush1.msra.mxu0 0.0
        %1088 = vmatprep.subr.mxu0 0.0
        %1089 = vmatpush1.msra.mxu0 0.0
        %1090 = vmatprep.subr.mxu0 0.0
        %1091 = vmatpush1.msra.mxu0 0.0
        %1092 = vmatprep.subr.mxu0 0.0
        %1093 = vmatpush1.msra.mxu0 0.0
        %1094 = vmatprep.subr.mxu0 0.0
        %1095 = vmatpush1.msra.mxu0 0.0
        %1096 = vmatprep.subr.mxu0 0.0
        %1097 = vmatpush1.msra.mxu0 0.0
        %1098 = vmatprep.subr.mxu0 0.0
        %1099 = vmatpush1.msra.mxu0 0.0
        %1100 = vmatprep.subr.mxu0 0.0
        %1101 = vmatpush1.msra.mxu0 0.0
        %1102 = vmatprep.subr.mxu0 0.0
        %1103 = vmatpush1.msra.mxu0 0.0
        %1104 = vmatprep.subr.mxu0 0.0
        %1105 = vmatpush1.msra.mxu0 0.0
        %1106 = vmatprep.subr.mxu0 0.0
        %1107 = vmatpush1.msra.mxu0 0.0
        %1108 = vmatprep.subr.mxu0 0.0
        %1109 = vmatpush1.msra.mxu0 0.0
        %1110 = vmatprep.subr.mxu0 0.0
        %1111 = vmatpush1.msra.mxu0 0.0
        %1112 = vmatprep.mubr.f32.mxu0 0.0
        %1113 = vmatmul.mubr.f32.gmra.mrb[0].mxu0 %v715
        %v1114 = vpop.f32.mrb[0].mxu0
        %v1115 = vadd.f32 0.0, %v1114
        %v1116 = vpop.f32.mrb[0].mxu0
        %v1117 = vadd.f32 0.0, %v1116
        %1118 = vdwg.mxu0
        %v1119 = vadd.f32 %v1044, %v1115
        %v1120 = vadd.f32 %v1046, %v1117
        %1121 = vmatprep.subr.mxu0 %v691
        %1122 = vmatpush1.msra.mxu0 %v690
        %1123 = vmatprep.subr.mxu0 %v693
        %1124 = vmatpush1.msra.mxu0 %v692
        %1125 = vmatprep.subr.mxu0 %v695
        %1126 = vmatpush1.msra.mxu0 %v694
        %1127 = vmatprep.subr.mxu0 %v697
        %1128 = vmatpush1.msra.mxu0 %v696
        %1129 = vmatprep.subr.mxu0 %v699
        %1130 = vmatpush1.msra.mxu0 %v698
        %1131 = vmatprep.subr.mxu0 %v701
        %1132 = vmatpush1.msra.mxu0 %v700
        %1133 = vmatprep.subr.mxu0 %v703
        %1134 = vmatpush1.msra.mxu0 %v702
        %1135 = vmatprep.subr.mxu0 %v705
        %1136 = vmatpush1.msra.mxu0 %v704
        %1137 = vmatprep.subr.mxu0 %v707
        %1138 = vmatpush1.msra.mxu0 %v706
        %1139 = vmatprep.subr.mxu0 %v709
        %1140 = vmatpush1.msra.mxu0 %v708
        %1141 = vmatprep.subr.mxu0 %v711
        %1142 = vmatpush1.msra.mxu0 %v710
        %1143 = vmatprep.subr.mxu0 %v713
        %1144 = vmatpush1.msra.mxu0 %v712
        %1145 = vmatprep.subr.mxu0 0.0
        %1146 = vmatpush1.msra.mxu0 0.0
        %1147 = vmatprep.subr.mxu0 0.0
        %1148 = vmatpush1.msra.mxu0 0.0
        %1149 = vmatprep.subr.mxu0 0.0
        %1150 = vmatpush1.msra.mxu0 0.0
        %1151 = vmatprep.subr.mxu0 0.0
        %1152 = vmatpush1.msra.mxu0 0.0
        %1153 = vmatprep.subr.mxu0 0.0
        %1154 = vmatpush1.msra.mxu0 0.0
        %1155 = vmatprep.subr.mxu0 0.0
        %1156 = vmatpush1.msra.mxu0 0.0
        %1157 = vmatprep.subr.mxu0 0.0
        %1158 = vmatpush1.msra.mxu0 0.0
        %1159 = vmatprep.subr.mxu0 0.0
        %1160 = vmatpush1.msra.mxu0 0.0
        %1161 = vmatprep.subr.mxu0 0.0
        %1162 = vmatpush1.msra.mxu0 0.0
        %1163 = vmatprep.subr.mxu0 0.0
        %1164 = vmatpush1.msra.mxu0 0.0
        %1165 = vmatprep.subr.mxu0 0.0
        %1166 = vmatpush1.msra.mxu0 0.0
        %1167 = vmatprep.subr.mxu0 0.0
        %1168 = vmatpush1.msra.mxu0 0.0
        %1169 = vmatprep.subr.mxu0 0.0
        %1170 = vmatpush1.msra.mxu0 0.0
        %1171 = vmatprep.subr.mxu0 0.0
        %1172 = vmatpush1.msra.mxu0 0.0
        %1173 = vmatprep.subr.mxu0 0.0
        %1174 = vmatpush1.msra.mxu0 0.0
        %1175 = vmatprep.subr.mxu0 0.0
        %1176 = vmatpush1.msra.mxu0 0.0
        %1177 = vmatprep.subr.mxu0 0.0
        %1178 = vmatpush1.msra.mxu0 0.0
        %1179 = vmatprep.subr.mxu0 0.0
        %1180 = vmatpush1.msra.mxu0 0.0
        %1181 = vmatprep.subr.mxu0 0.0
        %1182 = vmatpush1.msra.mxu0 0.0
        %1183 = vmatprep.subr.mxu0 0.0
        %1184 = vmatpush1.msra.mxu0 0.0
        %1185 = vmatprep.mubr.f32.mxu0 0.0
        %1186 = vmatmul.mubr.f32.gmra.mrb[0].mxu0 %v816
        %v1187 = vpop.f32.mrb[0].mxu0
        %v1188 = vadd.f32 0.0, %v1187
        %v1189 = vpop.f32.mrb[0].mxu0
        %v1190 = vadd.f32 0.0, %v1189
        %1191 = vdwg.mxu0
        %v1192 = vadd.f32 %v1119, %v1188
        %v1193 = vadd.f32 %v1120, %v1190
        %v1194 = vrot.slane %v387, 1
        %v1195 = vsel %vm439, %v1194, 0
        %1197 = vmatprep.subr.mxu0 %v792
        %1198 = vmatpush1.msra.mxu0 %v791
        %1199 = vmatprep.subr.mxu0 %v794
        %1200 = vmatpush1.msra.mxu0 %v793
        %1201 = vmatprep.subr.mxu0 %v796
        %1202 = vmatpush1.msra.mxu0 %v795
        %1203 = vmatprep.subr.mxu0 %v798
        %1204 = vmatpush1.msra.mxu0 %v797
        %1205 = vmatprep.subr.mxu0 %v800
        %1206 = vmatpush1.msra.mxu0 %v799
        %1207 = vmatprep.subr.mxu0 %v802
        %1208 = vmatpush1.msra.mxu0 %v801
        %1209 = vmatprep.subr.mxu0 %v804
        %1210 = vmatpush1.msra.mxu0 %v803
        %1211 = vmatprep.subr.mxu0 %v806
        %1212 = vmatpush1.msra.mxu0 %v805
        %1213 = vmatprep.subr.mxu0 %v808
        %1214 = vmatpush1.msra.mxu0 %v807
        %1215 = vmatprep.subr.mxu0 %v810
        %1216 = vmatpush1.msra.mxu0 %v809
        %1217 = vmatprep.subr.mxu0 %v812
        %1218 = vmatpush1.msra.mxu0 %v811
        %1219 = vmatprep.subr.mxu0 %v814
        %1220 = vmatpush1.msra.mxu0 %v813
        %1221 = vmatprep.subr.mxu0 0.0
        %1222 = vmatpush1.msra.mxu0 0.0
        %1223 = vmatprep.subr.mxu0 0.0
        %1224 = vmatpush1.msra.mxu0 0.0
        %1225 = vmatprep.subr.mxu0 0.0
        %1226 = vmatpush1.msra.mxu0 0.0
        %1227 = vmatprep.subr.mxu0 0.0
        %1228 = vmatpush1.msra.mxu0 0.0
        %1229 = vmatprep.subr.mxu0 0.0
        %1230 = vmatpush1.msra.mxu0 0.0
        %1231 = vmatprep.subr.mxu0 0.0
        %1232 = vmatpush1.msra.mxu0 0.0
        %1233 = vmatprep.subr.mxu0 0.0
        %1234 = vmatpush1.msra.mxu0 0.0
        %1235 = vmatprep.subr.mxu0 0.0
        %1236 = vmatpush1.msra.mxu0 0.0
        %1237 = vmatprep.subr.mxu0 0.0
        %1238 = vmatpush1.msra.mxu0 0.0
        %1239 = vmatprep.subr.mxu0 0.0
        %1240 = vmatpush1.msra.mxu0 0.0
        %1241 = vmatprep.subr.mxu0 0.0
        %1242 = vmatpush1.msra.mxu0 0.0
        %1243 = vmatprep.subr.mxu0 0.0
        %1244 = vmatpush1.msra.mxu0 0.0
        %1245 = vmatprep.subr.mxu0 0.0
        %1246 = vmatpush1.msra.mxu0 0.0
        %1247 = vmatprep.subr.mxu0 0.0
        %1248 = vmatpush1.msra.mxu0 0.0
        %1249 = vmatprep.subr.mxu0 0.0
        %1250 = vmatpush1.msra.mxu0 0.0
        %1251 = vmatprep.subr.mxu0 0.0
        %1252 = vmatpush1.msra.mxu0 0.0
        %1253 = vmatprep.subr.mxu0 0.0
        %1254 = vmatpush1.msra.mxu0 0.0
        %1255 = vmatprep.subr.mxu0 0.0
        %1256 = vmatpush1.msra.mxu0 0.0
        %1257 = vmatprep.subr.mxu0 0.0
        %1258 = vmatpush1.msra.mxu0 0.0
        %1259 = vmatprep.subr.mxu0 0.0
        %1260 = vmatpush1.msra.mxu0 0.0
        %1261 = vmatprep.mubr.f32.mxu0 0.0
        %1262 = vmatmul.mubr.f32.gmra.mrb[0].mxu0 %v1195
        %v1263 = vpop.f32.mrb[0].mxu0
        %v1264 = vadd.f32 0.0, %v1263
        %v1265 = vpop.f32.mrb[0].mxu0
        %v1266 = vadd.f32 0.0, %v1265
        %1267 = vdwg.mxu0
        %v1268 = vadd.f32 %v1192, %v1264
        %v1269 = vadd.f32 %v1193, %v1266
        %v1270 = vadd.f32 %v1268, %v895
        %v1271 = vadd.f32 %v1269, %v899
        %v1272 = vmax.f32 %v1270, 0.0
        %v1273 = vmax.f32 %v1271, 0.0
        %1274 = vmatprep.subr.mxu0 %v416
        %1275 = vmatpush1.msra.mxu0 %v415
        %1276 = vmatprep.subr.mxu0 %v418
        %1277 = vmatpush1.msra.mxu0 %v417
        %1278 = vmatprep.subr.mxu0 %v420
        %1279 = vmatpush1.msra.mxu0 %v419
        %1280 = vmatprep.subr.mxu0 %v422
        %1281 = vmatpush1.msra.mxu0 %v421
        %1282 = vmatprep.subr.mxu0 %v424
        %1283 = vmatpush1.msra.mxu0 %v423
        %1284 = vmatprep.subr.mxu0 %v426
        %1285 = vmatpush1.msra.mxu0 %v425
        %1286 = vmatprep.subr.mxu0 %v428
        %1287 = vmatpush1.msra.mxu0 %v427
        %1288 = vmatprep.subr.mxu0 %v430
        %1289 = vmatpush1.msra.mxu0 %v429
        %1290 = vmatprep.subr.mxu0 %v432
        %1291 = vmatpush1.msra.mxu0 %v431
        %1292 = vmatprep.subr.mxu0 %v434
        %1293 = vmatpush1.msra.mxu0 %v433
        %1294 = vmatprep.subr.mxu0 %v436
        %1295 = vmatpush1.msra.mxu0 %v435
        %1296 = vmatprep.subr.mxu0 %v438
        %1297 = vmatpush1.msra.mxu0 %v437
        %1298 = vmatprep.subr.mxu0 0.0
        %1299 = vmatpush1.msra.mxu0 0.0
        %1300 = vmatprep.subr.mxu0 0.0
        %1301 = vmatpush1.msra.mxu0 0.0
        %1302 = vmatprep.subr.mxu0 0.0
        %1303 = vmatpush1.msra.mxu0 0.0
        %1304 = vmatprep.subr.mxu0 0.0
        %1305 = vmatpush1.msra.mxu0 0.0
        %1306 = vmatprep.subr.mxu0 0.0
        %1307 = vmatpush1.msra.mxu0 0.0
        %1308 = vmatprep.subr.mxu0 0.0
        %1309 = vmatpush1.msra.mxu0 0.0
        %1310 = vmatprep.subr.mxu0 0.0
        %1311 = vmatpush1.msra.mxu0 0.0
        %1312 = vmatprep.subr.mxu0 0.0
        %1313 = vmatpush1.msra.mxu0 0.0
        %1314 = vmatprep.subr.mxu0 0.0
        %1315 = vmatpush1.msra.mxu0 0.0
        %1316 = vmatprep.subr.mxu0 0.0
        %1317 = vmatpush1.msra.mxu0 0.0
        %1318 = vmatprep.subr.mxu0 0.0
        %1319 = vmatpush1.msra.mxu0 0.0
        %1320 = vmatprep.subr.mxu0 0.0
        %1321 = vmatpush1.msra.mxu0 0.0
        %1322 = vmatprep.subr.mxu0 0.0
        %1323 = vmatpush1.msra.mxu0 0.0
        %1324 = vmatprep.subr.mxu0 0.0
        %1325 = vmatpush1.msra.mxu0 0.0
        %1326 = vmatprep.subr.mxu0 0.0
        %1327 = vmatpush1.msra.mxu0 0.0
        %1328 = vmatprep.subr.mxu0 0.0
        %1329 = vmatpush1.msra.mxu0 0.0
        %1330 = vmatprep.subr.mxu0 0.0
        %1331 = vmatpush1.msra.mxu0 0.0
        %1332 = vmatprep.subr.mxu0 0.0
        %1333 = vmatpush1.msra.mxu0 0.0
        %1334 = vmatprep.subr.mxu0 0.0
        %1335 = vmatpush1.msra.mxu0 0.0
        %1336 = vmatprep.subr.mxu0 0.0
        %1337 = vmatpush1.msra.mxu0 0.0
        %1338 = vmatprep.mubr.f32.mxu0 0.0
        %1339 = vmatmul.mubr.f32.gmra.mrb[0].mxu0 %v715
        %v1340 = vpop.f32.mrb[0].mxu0
        %v1341 = vadd.f32 0.0, %v1340
        %v1342 = vpop.f32.mrb[0].mxu0
        %v1343 = vadd.f32 0.0, %v1342
        %1344 = vdwg.mxu0
        %1345 = vmatprep.subr.mxu0 %v391
        %1346 = vmatpush1.msra.mxu0 %v390
        %1347 = vmatprep.subr.mxu0 %v393
        %1348 = vmatpush1.msra.mxu0 %v392
        %1349 = vmatprep.subr.mxu0 %v395
        %1350 = vmatpush1.msra.mxu0 %v394
        %1351 = vmatprep.subr.mxu0 %v397
        %1352 = vmatpush1.msra.mxu0 %v396
        %1353 = vmatprep.subr.mxu0 %v399
        %1354 = vmatpush1.msra.mxu0 %v398
        %1355 = vmatprep.subr.mxu0 %v401
        %1356 = vmatpush1.msra.mxu0 %v400
        %1357 = vmatprep.subr.mxu0 %v403
        %1358 = vmatpush1.msra.mxu0 %v402
        %1359 = vmatprep.subr.mxu0 %v405
        %1360 = vmatpush1.msra.mxu0 %v404
        %1361 = vmatprep.subr.mxu0 %v407
        %1362 = vmatpush1.msra.mxu0 %v406
        %1363 = vmatprep.subr.mxu0 %v409
        %1364 = vmatpush1.msra.mxu0 %v408
        %1365 = vmatprep.subr.mxu0 %v411
        %1366 = vmatpush1.msra.mxu0 %v410
        %1367 = vmatprep.subr.mxu0 %v413
        %1368 = vmatpush1.msra.mxu0 %v412
        %1369 = vmatprep.subr.mxu0 0.0
        %1370 = vmatpush1.msra.mxu0 0.0
        %1371 = vmatprep.subr.mxu0 0.0
        %1372 = vmatpush1.msra.mxu0 0.0
        %1373 = vmatprep.subr.mxu0 0.0
        %1374 = vmatpush1.msra.mxu0 0.0
        %1375 = vmatprep.subr.mxu0 0.0
        %1376 = vmatpush1.msra.mxu0 0.0
        %1377 = vmatprep.subr.mxu0 0.0
        %1378 = vmatpush1.msra.mxu0 0.0
        %1379 = vmatprep.subr.mxu0 0.0
        %1380 = vmatpush1.msra.mxu0 0.0
        %1381 = vmatprep.subr.mxu0 0.0
        %1382 = vmatpush1.msra.mxu0 0.0
        %1383 = vmatprep.subr.mxu0 0.0
        %1384 = vmatpush1.msra.mxu0 0.0
        %1385 = vmatprep.subr.mxu0 0.0
        %1386 = vmatpush1.msra.mxu0 0.0
        %1387 = vmatprep.subr.mxu0 0.0
        %1388 = vmatpush1.msra.mxu0 0.0
        %1389 = vmatprep.subr.mxu0 0.0
        %1390 = vmatpush1.msra.mxu0 0.0
        %1391 = vmatprep.subr.mxu0 0.0
        %1392 = vmatpush1.msra.mxu0 0.0
        %1393 = vmatprep.subr.mxu0 0.0
        %1394 = vmatpush1.msra.mxu0 0.0
        %1395 = vmatprep.subr.mxu0 0.0
        %1396 = vmatpush1.msra.mxu0 0.0
        %1397 = vmatprep.subr.mxu0 0.0
        %1398 = vmatpush1.msra.mxu0 0.0
        %1399 = vmatprep.subr.mxu0 0.0
        %1400 = vmatpush1.msra.mxu0 0.0
        %1401 = vmatprep.subr.mxu0 0.0
        %1402 = vmatpush1.msra.mxu0 0.0
        %1403 = vmatprep.subr.mxu0 0.0
        %1404 = vmatpush1.msra.mxu0 0.0
        %1405 = vmatprep.subr.mxu0 0.0
        %1406 = vmatpush1.msra.mxu0 0.0
        %1407 = vmatprep.subr.mxu0 0.0
        %1408 = vmatpush1.msra.mxu0 0.0
        %1409 = vmatprep.mubr.f32.mxu0 0.0
        %1410 = vmatmul.mubr.f32.gmra.mrb[0].mxu0 %v614
        %v1411 = vpop.f32.mrb[0].mxu0
        %v1412 = vadd.f32 %v1341, %v1411
        %v1413 = vpop.f32.mrb[0].mxu0
        %v1414 = vadd.f32 %v1343, %v1413
        %1415 = vdwg.mxu0
        %1416 = vmatprep.subr.mxu0 %v590
        %1417 = vmatpush1.msra.mxu0 %v589
        %1418 = vmatprep.subr.mxu0 %v592
        %1419 = vmatpush1.msra.mxu0 %v591
        %1420 = vmatprep.subr.mxu0 %v594
        %1421 = vmatpush1.msra.mxu0 %v593
        %1422 = vmatprep.subr.mxu0 %v596
        %1423 = vmatpush1.msra.mxu0 %v595
        %1424 = vmatprep.subr.mxu0 %v598
        %1425 = vmatpush1.msra.mxu0 %v597
        %1426 = vmatprep.subr.mxu0 %v600
        %1427 = vmatpush1.msra.mxu0 %v599
        %1428 = vmatprep.subr.mxu0 %v602
        %1429 = vmatpush1.msra.mxu0 %v601
        %1430 = vmatprep.subr.mxu0 %v604
        %1431 = vmatpush1.msra.mxu0 %v603
        %1432 = vmatprep.subr.mxu0 %v606
        %1433 = vmatpush1.msra.mxu0 %v605
        %1434 = vmatprep.subr.mxu0 %v608
        %1435 = vmatpush1.msra.mxu0 %v607
        %1436 = vmatprep.subr.mxu0 %v610
        %1437 = vmatpush1.msra.mxu0 %v609
        %1438 = vmatprep.subr.mxu0 %v612
        %1439 = vmatpush1.msra.mxu0 %v611
        %1440 = vmatprep.subr.mxu0 0.0
        %1441 = vmatpush1.msra.mxu0 0.0
        %1442 = vmatprep.subr.mxu0 0.0
        %1443 = vmatpush1.msra.mxu0 0.0
        %1444 = vmatprep.subr.mxu0 0.0
        %1445 = vmatpush1.msra.mxu0 0.0
        %1446 = vmatprep.subr.mxu0 0.0
        %1447 = vmatpush1.msra.mxu0 0.0
        %1448 = vmatprep.subr.mxu0 0.0
        %1449 = vmatpush1.msra.mxu0 0.0
        %1450 = vmatprep.subr.mxu0 0.0
        %1451 = vmatpush1.msra.mxu0 0.0
        %1452 = vmatprep.subr.mxu0 0.0
        %1453 = vmatpush1.msra.mxu0 0.0
        %1454 = vmatprep.subr.mxu0 0.0
        %1455 = vmatpush1.msra.mxu0 0.0
        %1456 = vmatprep.subr.mxu0 0.0
        %1457 = vmatpush1.msra.mxu0 0.0
        %1458 = vmatprep.subr.mxu0 0.0
        %1459 = vmatpush1.msra.mxu0 0.0
        %1460 = vmatprep.subr.mxu0 0.0
        %1461 = vmatpush1.msra.mxu0 0.0
        %1462 = vmatprep.subr.mxu0 0.0
        %1463 = vmatpush1.msra.mxu0 0.0
        %1464 = vmatprep.subr.mxu0 0.0
        %1465 = vmatpush1.msra.mxu0 0.0
        %1466 = vmatprep.subr.mxu0 0.0
        %1467 = vmatpush1.msra.mxu0 0.0
        %1468 = vmatprep.subr.mxu0 0.0
        %1469 = vmatpush1.msra.mxu0 0.0
        %1470 = vmatprep.subr.mxu0 0.0
        %1471 = vmatpush1.msra.mxu0 0.0
        %1472 = vmatprep.subr.mxu0 0.0
        %1473 = vmatpush1.msra.mxu0 0.0
        %1474 = vmatprep.subr.mxu0 0.0
        %1475 = vmatpush1.msra.mxu0 0.0
        %1476 = vmatprep.subr.mxu0 0.0
        %1477 = vmatpush1.msra.mxu0 0.0
        %1478 = vmatprep.subr.mxu0 0.0
        %1479 = vmatpush1.msra.mxu0 0.0
        %1480 = vmatprep.mubr.f32.mxu0 0.0
        %1481 = vmatmul.mubr.f32.gmra.mrb[0].mxu0 %v816
        %v1482 = vpop.f32.mrb[0].mxu0
        %v1483 = vadd.f32 0.0, %v1482
        %v1484 = vpop.f32.mrb[0].mxu0
        %v1485 = vadd.f32 0.0, %v1484
        %1486 = vdwg.mxu0
        %v1487 = vadd.f32 %v1412, %v1483
        %v1488 = vadd.f32 %v1414, %v1485
        %1489 = vmatprep.subr.mxu0 %v691
        %1490 = vmatpush1.msra.mxu0 %v690
        %1491 = vmatprep.subr.mxu0 %v693
        %1492 = vmatpush1.msra.mxu0 %v692
        %1493 = vmatprep.subr.mxu0 %v695
        %1494 = vmatpush1.msra.mxu0 %v694
        %1495 = vmatprep.subr.mxu0 %v697
        %1496 = vmatpush1.msra.mxu0 %v696
        %1497 = vmatprep.subr.mxu0 %v699
        %1498 = vmatpush1.msra.mxu0 %v698
        %1499 = vmatprep.subr.mxu0 %v701
        %1500 = vmatpush1.msra.mxu0 %v700
        %1501 = vmatprep.subr.mxu0 %v703
        %1502 = vmatpush1.msra.mxu0 %v702
        %1503 = vmatprep.subr.mxu0 %v705
        %1504 = vmatpush1.msra.mxu0 %v704
        %1505 = vmatprep.subr.mxu0 %v707
        %1506 = vmatpush1.msra.mxu0 %v706
        %1507 = vmatprep.subr.mxu0 %v709
        %1508 = vmatpush1.msra.mxu0 %v708
        %1509 = vmatprep.subr.mxu0 %v711
        %1510 = vmatpush1.msra.mxu0 %v710
        %1511 = vmatprep.subr.mxu0 %v713
        %1512 = vmatpush1.msra.mxu0 %v712
        %1513 = vmatprep.subr.mxu0 0.0
        %1514 = vmatpush1.msra.mxu0 0.0
        %1515 = vmatprep.subr.mxu0 0.0
        %1516 = vmatpush1.msra.mxu0 0.0
        %1517 = vmatprep.subr.mxu0 0.0
        %1518 = vmatpush1.msra.mxu0 0.0
        %1519 = vmatprep.subr.mxu0 0.0
        %1520 = vmatpush1.msra.mxu0 0.0
        %1521 = vmatprep.subr.mxu0 0.0
        %1522 = vmatpush1.msra.mxu0 0.0
        %1523 = vmatprep.subr.mxu0 0.0
        %1524 = vmatpush1.msra.mxu0 0.0
        %1525 = vmatprep.subr.mxu0 0.0
        %1526 = vmatpush1.msra.mxu0 0.0
        %1527 = vmatprep.subr.mxu0 0.0
        %1528 = vmatpush1.msra.mxu0 0.0
        %1529 = vmatprep.subr.mxu0 0.0
        %1530 = vmatpush1.msra.mxu0 0.0
        %1531 = vmatprep.subr.mxu0 0.0
        %1532 = vmatpush1.msra.mxu0 0.0
        %1533 = vmatprep.subr.mxu0 0.0
        %1534 = vmatpush1.msra.mxu0 0.0
        %1535 = vmatprep.subr.mxu0 0.0
        %1536 = vmatpush1.msra.mxu0 0.0
        %1537 = vmatprep.subr.mxu0 0.0
        %1538 = vmatpush1.msra.mxu0 0.0
        %1539 = vmatprep.subr.mxu0 0.0
        %1540 = vmatpush1.msra.mxu0 0.0
        %1541 = vmatprep.subr.mxu0 0.0
        %1542 = vmatpush1.msra.mxu0 0.0
        %1543 = vmatprep.subr.mxu0 0.0
        %1544 = vmatpush1.msra.mxu0 0.0
        %1545 = vmatprep.subr.mxu0 0.0
        %1546 = vmatpush1.msra.mxu0 0.0
        %1547 = vmatprep.subr.mxu0 0.0
        %1548 = vmatpush1.msra.mxu0 0.0
        %1549 = vmatprep.subr.mxu0 0.0
        %1550 = vmatpush1.msra.mxu0 0.0
        %1551 = vmatprep.subr.mxu0 0.0
        %1552 = vmatpush1.msra.mxu0 0.0
        %1553 = vmatprep.mubr.f32.mxu0 0.0
        %1554 = vmatmul.mubr.f32.gmra.mrb[0].mxu0 %v1195
        %v1555 = vpop.f32.mrb[0].mxu0
        %v1556 = vadd.f32 0.0, %v1555
        %v1557 = vpop.f32.mrb[0].mxu0
        %v1558 = vadd.f32 0.0, %v1557
        %1559 = vdwg.mxu0
        %v1560 = vadd.f32 %v1487, %v1556
        %v1561 = vadd.f32 %v1488, %v1558
        %v1562 = vrot.slane %v388, 1
        %v1563 = vsel %vm439, %v1562, 0
        %1565 = vmatprep.subr.mxu0 %v792
        %1566 = vmatpush1.msra.mxu0 %v791
        %1567 = vmatprep.subr.mxu0 %v794
        %1568 = vmatpush1.msra.mxu0 %v793
        %1569 = vmatprep.subr.mxu0 %v796
        %1570 = vmatpush1.msra.mxu0 %v795
        %1571 = vmatprep.subr.mxu0 %v798
        %1572 = vmatpush1.msra.mxu0 %v797
        %1573 = vmatprep.subr.mxu0 %v800
        %1574 = vmatpush1.msra.mxu0 %v799
        %1575 = vmatprep.subr.mxu0 %v802
        %1576 = vmatpush1.msra.mxu0 %v801
        %1577 = vmatprep.subr.mxu0 %v804
        %1578 = vmatpush1.msra.mxu0 %v803
        %1579 = vmatprep.subr.mxu0 %v806
        %1580 = vmatpush1.msra.mxu0 %v805
        %1581 = vmatprep.subr.mxu0 %v808
        %1582 = vmatpush1.msra.mxu0 %v807
        %1583 = vmatprep.subr.mxu0 %v810
        %1584 = vmatpush1.msra.mxu0 %v809
        %1585 = vmatprep.subr.mxu0 %v812
        %1586 = vmatpush1.msra.mxu0 %v811
        %1587 = vmatprep.subr.mxu0 %v814
        %1588 = vmatpush1.msra.mxu0 %v813
        %1589 = vmatprep.subr.mxu0 0.0
        %1590 = vmatpush1.msra.mxu0 0.0
        %1591 = vmatprep.subr.mxu0 0.0
        %1592 = vmatpush1.msra.mxu0 0.0
        %1593 = vmatprep.subr.mxu0 0.0
        %1594 = vmatpush1.msra.mxu0 0.0
        %1595 = vmatprep.subr.mxu0 0.0
        %1596 = vmatpush1.msra.mxu0 0.0
        %1597 = vmatprep.subr.mxu0 0.0
        %1598 = vmatpush1.msra.mxu0 0.0
        %1599 = vmatprep.subr.mxu0 0.0
        %1600 = vmatpush1.msra.mxu0 0.0
        %1601 = vmatprep.subr.mxu0 0.0
        %1602 = vmatpush1.msra.mxu0 0.0
        %1603 = vmatprep.subr.mxu0 0.0
        %1604 = vmatpush1.msra.mxu0 0.0
        %1605 = vmatprep.subr.mxu0 0.0
        %1606 = vmatpush1.msra.mxu0 0.0
        %1607 = vmatprep.subr.mxu0 0.0
        %1608 = vmatpush1.msra.mxu0 0.0
        %1609 = vmatprep.subr.mxu0 0.0
        %1610 = vmatpush1.msra.mxu0 0.0
        %1611 = vmatprep.subr.mxu0 0.0
        %1612 = vmatpush1.msra.mxu0 0.0
        %1613 = vmatprep.subr.mxu0 0.0
        %1614 = vmatpush1.msra.mxu0 0.0
        %1615 = vmatprep.subr.mxu0 0.0
        %1616 = vmatpush1.msra.mxu0 0.0
        %1617 = vmatprep.subr.mxu0 0.0
        %1618 = vmatpush1.msra.mxu0 0.0
        %1619 = vmatprep.subr.mxu0 0.0
        %1620 = vmatpush1.msra.mxu0 0.0
        %1621 = vmatprep.subr.mxu0 0.0
        %1622 = vmatpush1.msra.mxu0 0.0
        %1623 = vmatprep.subr.mxu0 0.0
        %1624 = vmatpush1.msra.mxu0 0.0
        %1625 = vmatprep.subr.mxu0 0.0
        %1626 = vmatpush1.msra.mxu0 0.0
        %1627 = vmatprep.subr.mxu0 0.0
        %1628 = vmatpush1.msra.mxu0 0.0
        %1629 = vmatprep.mubr.f32.mxu0 0.0
        %1630 = vmatmul.mubr.f32.gmra.mrb[0].mxu0 %v1563
        %v1631 = vpop.f32.mrb[0].mxu0
        %v1632 = vadd.f32 0.0, %v1631
        %v1633 = vpop.f32.mrb[0].mxu0
        %v1634 = vadd.f32 0.0, %v1633
        %1635 = vdwg.mxu0
        %v1636 = vadd.f32 %v1560, %v1632
        %v1637 = vadd.f32 %v1561, %v1634
        %v1638 = vadd.f32 %v1636, %v895
        %v1639 = vadd.f32 %v1637, %v899
        %v1640 = vmax.f32 %v1638, 0.0
        %v1641 = vmax.f32 %v1639, 0.0
        %1642 = vmatprep.subr.mxu0 %v416
        %1643 = vmatpush1.msra.mxu0 %v415
        %1644 = vmatprep.subr.mxu0 %v418
        %1645 = vmatpush1.msra.mxu0 %v417
        %1646 = vmatprep.subr.mxu0 %v420
        %1647 = vmatpush1.msra.mxu0 %v419
        %1648 = vmatprep.subr.mxu0 %v422
        %1649 = vmatpush1.msra.mxu0 %v421
        %1650 = vmatprep.subr.mxu0 %v424
        %1651 = vmatpush1.msra.mxu0 %v423
        %1652 = vmatprep.subr.mxu0 %v426
        %1653 = vmatpush1.msra.mxu0 %v425
        %1654 = vmatprep.subr.mxu0 %v428
        %1655 = vmatpush1.msra.mxu0 %v427
        %1656 = vmatprep.subr.mxu0 %v430
        %1657 = vmatpush1.msra.mxu0 %v429
        %1658 = vmatprep.subr.mxu0 %v432
        %1659 = vmatpush1.msra.mxu0 %v431
        %1660 = vmatprep.subr.mxu0 %v434
        %1661 = vmatpush1.msra.mxu0 %v433
        %1662 = vmatprep.subr.mxu0 %v436
        %1663 = vmatpush1.msra.mxu0 %v435
        %1664 = vmatprep.subr.mxu0 %v438
        %1665 = vmatpush1.msra.mxu0 %v437
        %1666 = vmatprep.subr.mxu0 0.0
        %1667 = vmatpush1.msra.mxu0 0.0
        %1668 = vmatprep.subr.mxu0 0.0
        %1669 = vmatpush1.msra.mxu0 0.0
        %1670 = vmatprep.subr.mxu0 0.0
        %1671 = vmatpush1.msra.mxu0 0.0
        %1672 = vmatprep.subr.mxu0 0.0
        %1673 = vmatpush1.msra.mxu0 0.0
        %1674 = vmatprep.subr.mxu0 0.0
        %1675 = vmatpush1.msra.mxu0 0.0
        %1676 = vmatprep.subr.mxu0 0.0
        %1677 = vmatpush1.msra.mxu0 0.0
        %1678 = vmatprep.subr.mxu0 0.0
        %1679 = vmatpush1.msra.mxu0 0.0
        %1680 = vmatprep.subr.mxu0 0.0
        %1681 = vmatpush1.msra.mxu0 0.0
        %1682 = vmatprep.subr.mxu0 0.0
        %1683 = vmatpush1.msra.mxu0 0.0
        %1684 = vmatprep.subr.mxu0 0.0
        %1685 = vmatpush1.msra.mxu0 0.0
        %1686 = vmatprep.subr.mxu0 0.0
        %1687 = vmatpush1.msra.mxu0 0.0
        %1688 = vmatprep.subr.mxu0 0.0
        %1689 = vmatpush1.msra.mxu0 0.0
        %1690 = vmatprep.subr.mxu0 0.0
        %1691 = vmatpush1.msra.mxu0 0.0
        %1692 = vmatprep.subr.mxu0 0.0
        %1693 = vmatpush1.msra.mxu0 0.0
        %1694 = vmatprep.subr.mxu0 0.0
        %1695 = vmatpush1.msra.mxu0 0.0
        %1696 = vmatprep.subr.mxu0 0.0
        %1697 = vmatpush1.msra.mxu0 0.0
        %1698 = vmatprep.subr.mxu0 0.0
        %1699 = vmatpush1.msra.mxu0 0.0
        %1700 = vmatprep.subr.mxu0 0.0
        %1701 = vmatpush1.msra.mxu0 0.0
        %1702 = vmatprep.subr.mxu0 0.0
        %1703 = vmatpush1.msra.mxu0 0.0
        %1704 = vmatprep.subr.mxu0 0.0
        %1705 = vmatpush1.msra.mxu0 0.0
        %1706 = vmatprep.mubr.f32.mxu0 0.0
        %1707 = vmatmul.mubr.f32.gmra.mrb[0].mxu0 %v816
        %v1708 = vpop.f32.mrb[0].mxu0
        %v1709 = vadd.f32 0.0, %v1708
        %v1710 = vpop.f32.mrb[0].mxu0
        %v1711 = vadd.f32 0.0, %v1710
        %1712 = vdwg.mxu0
        %1713 = vmatprep.subr.mxu0 %v391
        %1714 = vmatpush1.msra.mxu0 %v390
        %1715 = vmatprep.subr.mxu0 %v393
        %1716 = vmatpush1.msra.mxu0 %v392
        %1717 = vmatprep.subr.mxu0 %v395
        %1718 = vmatpush1.msra.mxu0 %v394
        %1719 = vmatprep.subr.mxu0 %v397
        %1720 = vmatpush1.msra.mxu0 %v396
        %1721 = vmatprep.subr.mxu0 %v399
        %1722 = vmatpush1.msra.mxu0 %v398
        %1723 = vmatprep.subr.mxu0 %v401
        %1724 = vmatpush1.msra.mxu0 %v400
        %1725 = vmatprep.subr.mxu0 %v403
        %1726 = vmatpush1.msra.mxu0 %v402
        %1727 = vmatprep.subr.mxu0 %v405
        %1728 = vmatpush1.msra.mxu0 %v404
        %1729 = vmatprep.subr.mxu0 %v407
        %1730 = vmatpush1.msra.mxu0 %v406
        %1731 = vmatprep.subr.mxu0 %v409
        %1732 = vmatpush1.msra.mxu0 %v408
        %1733 = vmatprep.subr.mxu0 %v411
        %1734 = vmatpush1.msra.mxu0 %v410
        %1735 = vmatprep.subr.mxu0 %v413
        %1736 = vmatpush1.msra.mxu0 %v412
        %1737 = vmatprep.subr.mxu0 0.0
        %1738 = vmatpush1.msra.mxu0 0.0
        %1739 = vmatprep.subr.mxu0 0.0
        %1740 = vmatpush1.msra.mxu0 0.0
        %1741 = vmatprep.subr.mxu0 0.0
        %1742 = vmatpush1.msra.mxu0 0.0
        %1743 = vmatprep.subr.mxu0 0.0
        %1744 = vmatpush1.msra.mxu0 0.0
        %1745 = vmatprep.subr.mxu0 0.0
        %1746 = vmatpush1.msra.mxu0 0.0
        %1747 = vmatprep.subr.mxu0 0.0
        %1748 = vmatpush1.msra.mxu0 0.0
        %1749 = vmatprep.subr.mxu0 0.0
        %1750 = vmatpush1.msra.mxu0 0.0
        %1751 = vmatprep.subr.mxu0 0.0
        %1752 = vmatpush1.msra.mxu0 0.0
        %1753 = vmatprep.subr.mxu0 0.0
        %1754 = vmatpush1.msra.mxu0 0.0
        %1755 = vmatprep.subr.mxu0 0.0
        %1756 = vmatpush1.msra.mxu0 0.0
        %1757 = vmatprep.subr.mxu0 0.0
        %1758 = vmatpush1.msra.mxu0 0.0
        %1759 = vmatprep.subr.mxu0 0.0
        %1760 = vmatpush1.msra.mxu0 0.0
        %1761 = vmatprep.subr.mxu0 0.0
        %1762 = vmatpush1.msra.mxu0 0.0
        %1763 = vmatprep.subr.mxu0 0.0
        %1764 = vmatpush1.msra.mxu0 0.0
        %1765 = vmatprep.subr.mxu0 0.0
        %1766 = vmatpush1.msra.mxu0 0.0
        %1767 = vmatprep.subr.mxu0 0.0
        %1768 = vmatpush1.msra.mxu0 0.0
        %1769 = vmatprep.subr.mxu0 0.0
        %1770 = vmatpush1.msra.mxu0 0.0
        %1771 = vmatprep.subr.mxu0 0.0
        %1772 = vmatpush1.msra.mxu0 0.0
        %1773 = vmatprep.subr.mxu0 0.0
        %1774 = vmatpush1.msra.mxu0 0.0
        %1775 = vmatprep.subr.mxu0 0.0
        %1776 = vmatpush1.msra.mxu0 0.0
        %1777 = vmatprep.mubr.f32.mxu0 0.0
        %1778 = vmatmul.mubr.f32.gmra.mrb[0].mxu0 %v715
        %v1779 = vpop.f32.mrb[0].mxu0
        %v1780 = vadd.f32 %v1709, %v1779
        %v1781 = vpop.f32.mrb[0].mxu0
        %v1782 = vadd.f32 %v1711, %v1781
        %1783 = vdwg.mxu0
        %1784 = vmatprep.subr.mxu0 %v590
        %1785 = vmatpush1.msra.mxu0 %v589
        %1786 = vmatprep.subr.mxu0 %v592
        %1787 = vmatpush1.msra.mxu0 %v591
        %1788 = vmatprep.subr.mxu0 %v594
        %1789 = vmatpush1.msra.mxu0 %v593
        %1790 = vmatprep.subr.mxu0 %v596
        %1791 = vmatpush1.msra.mxu0 %v595
        %1792 = vmatprep.subr.mxu0 %v598
        %1793 = vmatpush1.msra.mxu0 %v597
        %1794 = vmatprep.subr.mxu0 %v600
        %1795 = vmatpush1.msra.mxu0 %v599
        %1796 = vmatprep.subr.mxu0 %v602
        %1797 = vmatpush1.msra.mxu0 %v601
        %1798 = vmatprep.subr.mxu0 %v604
        %1799 = vmatpush1.msra.mxu0 %v603
        %1800 = vmatprep.subr.mxu0 %v606
        %1801 = vmatpush1.msra.mxu0 %v605
        %1802 = vmatprep.subr.mxu0 %v608
        %1803 = vmatpush1.msra.mxu0 %v607
        %1804 = vmatprep.subr.mxu0 %v610
        %1805 = vmatpush1.msra.mxu0 %v609
        %1806 = vmatprep.subr.mxu0 %v612
        %1807 = vmatpush1.msra.mxu0 %v611
        %1808 = vmatprep.subr.mxu0 0.0
        %1809 = vmatpush1.msra.mxu0 0.0
        %1810 = vmatprep.subr.mxu0 0.0
        %1811 = vmatpush1.msra.mxu0 0.0
        %1812 = vmatprep.subr.mxu0 0.0
        %1813 = vmatpush1.msra.mxu0 0.0
        %1814 = vmatprep.subr.mxu0 0.0
        %1815 = vmatpush1.msra.mxu0 0.0
        %1816 = vmatprep.subr.mxu0 0.0
        %1817 = vmatpush1.msra.mxu0 0.0
        %1818 = vmatprep.subr.mxu0 0.0
        %1819 = vmatpush1.msra.mxu0 0.0
        %1820 = vmatprep.subr.mxu0 0.0
        %1821 = vmatpush1.msra.mxu0 0.0
        %1822 = vmatprep.subr.mxu0 0.0
        %1823 = vmatpush1.msra.mxu0 0.0
        %1824 = vmatprep.subr.mxu0 0.0
        %1825 = vmatpush1.msra.mxu0 0.0
        %1826 = vmatprep.subr.mxu0 0.0
        %1827 = vmatpush1.msra.mxu0 0.0
        %1828 = vmatprep.subr.mxu0 0.0
        %1829 = vmatpush1.msra.mxu0 0.0
        %1830 = vmatprep.subr.mxu0 0.0
        %1831 = vmatpush1.msra.mxu0 0.0
        %1832 = vmatprep.subr.mxu0 0.0
        %1833 = vmatpush1.msra.mxu0 0.0
        %1834 = vmatprep.subr.mxu0 0.0
        %1835 = vmatpush1.msra.mxu0 0.0
        %1836 = vmatprep.subr.mxu0 0.0
        %1837 = vmatpush1.msra.mxu0 0.0
        %1838 = vmatprep.subr.mxu0 0.0
        %1839 = vmatpush1.msra.mxu0 0.0
        %1840 = vmatprep.subr.mxu0 0.0
        %1841 = vmatpush1.msra.mxu0 0.0
        %1842 = vmatprep.subr.mxu0 0.0
        %1843 = vmatpush1.msra.mxu0 0.0
        %1844 = vmatprep.subr.mxu0 0.0
        %1845 = vmatpush1.msra.mxu0 0.0
        %1846 = vmatprep.subr.mxu0 0.0
        %1847 = vmatpush1.msra.mxu0 0.0
        %1848 = vmatprep.mubr.f32.mxu0 0.0
        %1849 = vmatmul.mubr.f32.gmra.mrb[0].mxu0 %v1195
        %v1850 = vpop.f32.mrb[0].mxu0
        %v1851 = vadd.f32 0.0, %v1850
        %v1852 = vpop.f32.mrb[0].mxu0
        %v1853 = vadd.f32 0.0, %v1852
        %1854 = vdwg.mxu0
        %v1855 = vadd.f32 %v1780, %v1851
        %v1856 = vadd.f32 %v1782, %v1853
        %1857 = vmatprep.subr.mxu0 %v691
        %1858 = vmatpush1.msra.mxu0 %v690
        %1859 = vmatprep.subr.mxu0 %v693
        %1860 = vmatpush1.msra.mxu0 %v692
        %1861 = vmatprep.subr.mxu0 %v695
        %1862 = vmatpush1.msra.mxu0 %v694
        %1863 = vmatprep.subr.mxu0 %v697
        %1864 = vmatpush1.msra.mxu0 %v696
        %1865 = vmatprep.subr.mxu0 %v699
        %1866 = vmatpush1.msra.mxu0 %v698
        %1867 = vmatprep.subr.mxu0 %v701
        %1868 = vmatpush1.msra.mxu0 %v700
        %1869 = vmatprep.subr.mxu0 %v703
        %1870 = vmatpush1.msra.mxu0 %v702
        %1871 = vmatprep.subr.mxu0 %v705
        %1872 = vmatpush1.msra.mxu0 %v704
        %1873 = vmatprep.subr.mxu0 %v707
        %1874 = vmatpush1.msra.mxu0 %v706
        %1875 = vmatprep.subr.mxu0 %v709
        %1876 = vmatpush1.msra.mxu0 %v708
        %1877 = vmatprep.subr.mxu0 %v711
        %1878 = vmatpush1.msra.mxu0 %v710
        %1879 = vmatprep.subr.mxu0 %v713
        %1880 = vmatpush1.msra.mxu0 %v712
        %1881 = vmatprep.subr.mxu0 0.0
        %1882 = vmatpush1.msra.mxu0 0.0
        %1883 = vmatprep.subr.mxu0 0.0
        %1884 = vmatpush1.msra.mxu0 0.0
        %1885 = vmatprep.subr.mxu0 0.0
        %1886 = vmatpush1.msra.mxu0 0.0
        %1887 = vmatprep.subr.mxu0 0.0
        %1888 = vmatpush1.msra.mxu0 0.0
        %1889 = vmatprep.subr.mxu0 0.0
        %1890 = vmatpush1.msra.mxu0 0.0
        %1891 = vmatprep.subr.mxu0 0.0
        %1892 = vmatpush1.msra.mxu0 0.0
        %1893 = vmatprep.subr.mxu0 0.0
        %1894 = vmatpush1.msra.mxu0 0.0
        %1895 = vmatprep.subr.mxu0 0.0
        %1896 = vmatpush1.msra.mxu0 0.0
        %1897 = vmatprep.subr.mxu0 0.0
        %1898 = vmatpush1.msra.mxu0 0.0
        %1899 = vmatprep.subr.mxu0 0.0
        %1900 = vmatpush1.msra.mxu0 0.0
        %1901 = vmatprep.subr.mxu0 0.0
        %1902 = vmatpush1.msra.mxu0 0.0
        %1903 = vmatprep.subr.mxu0 0.0
        %1904 = vmatpush1.msra.mxu0 0.0
        %1905 = vmatprep.subr.mxu0 0.0
        %1906 = vmatpush1.msra.mxu0 0.0
        %1907 = vmatprep.subr.mxu0 0.0
        %1908 = vmatpush1.msra.mxu0 0.0
        %1909 = vmatprep.subr.mxu0 0.0
        %1910 = vmatpush1.msra.mxu0 0.0
        %1911 = vmatprep.subr.mxu0 0.0
        %1912 = vmatpush1.msra.mxu0 0.0
        %1913 = vmatprep.subr.mxu0 0.0
        %1914 = vmatpush1.msra.mxu0 0.0
        %1915 = vmatprep.subr.mxu0 0.0
        %1916 = vmatpush1.msra.mxu0 0.0
        %1917 = vmatprep.subr.mxu0 0.0
        %1918 = vmatpush1.msra.mxu0 0.0
        %1919 = vmatprep.subr.mxu0 0.0
        %1920 = vmatpush1.msra.mxu0 0.0
        %1921 = vmatprep.mubr.f32.mxu0 0.0
        %1922 = vmatmul.mubr.f32.gmra.mrb[0].mxu0 %v1563
        %v1923 = vpop.f32.mrb[0].mxu0
        %v1924 = vadd.f32 0.0, %v1923
        %v1925 = vpop.f32.mrb[0].mxu0
        %v1926 = vadd.f32 0.0, %v1925
        %1927 = vdwg.mxu0
        %v1928 = vadd.f32 %v1855, %v1924
        %v1929 = vadd.f32 %v1856, %v1926
        %v1930 = vrot.slane %v389, 1
        %v1931 = vsel %vm439, %v1930, 0
        %1933 = vmatprep.subr.mxu0 %v792
        %1934 = vmatpush1.msra.mxu0 %v791
        %1935 = vmatprep.subr.mxu0 %v794
        %1936 = vmatpush1.msra.mxu0 %v793
        %1937 = vmatprep.subr.mxu0 %v796
        %1938 = vmatpush1.msra.mxu0 %v795
        %1939 = vmatprep.subr.mxu0 %v798
        %1940 = vmatpush1.msra.mxu0 %v797
        %1941 = vmatprep.subr.mxu0 %v800
        %1942 = vmatpush1.msra.mxu0 %v799
        %1943 = vmatprep.subr.mxu0 %v802
        %1944 = vmatpush1.msra.mxu0 %v801
        %1945 = vmatprep.subr.mxu0 %v804
        %1946 = vmatpush1.msra.mxu0 %v803
        %1947 = vmatprep.subr.mxu0 %v806
        %1948 = vmatpush1.msra.mxu0 %v805
        %1949 = vmatprep.subr.mxu0 %v808
        %1950 = vmatpush1.msra.mxu0 %v807
        %1951 = vmatprep.subr.mxu0 %v810
        %1952 = vmatpush1.msra.mxu0 %v809
        %1953 = vmatprep.subr.mxu0 %v812
        %1954 = vmatpush1.msra.mxu0 %v811
        %1955 = vmatprep.subr.mxu0 %v814
        %1956 = vmatpush1.msra.mxu0 %v813
        %1957 = vmatprep.subr.mxu0 0.0
        %1958 = vmatpush1.msra.mxu0 0.0
        %1959 = vmatprep.subr.mxu0 0.0
        %1960 = vmatpush1.msra.mxu0 0.0
        %1961 = vmatprep.subr.mxu0 0.0
        %1962 = vmatpush1.msra.mxu0 0.0
        %1963 = vmatprep.subr.mxu0 0.0
        %1964 = vmatpush1.msra.mxu0 0.0
        %1965 = vmatprep.subr.mxu0 0.0
        %1966 = vmatpush1.msra.mxu0 0.0
        %1967 = vmatprep.subr.mxu0 0.0
        %1968 = vmatpush1.msra.mxu0 0.0
        %1969 = vmatprep.subr.mxu0 0.0
        %1970 = vmatpush1.msra.mxu0 0.0
        %1971 = vmatprep.subr.mxu0 0.0
        %1972 = vmatpush1.msra.mxu0 0.0
        %1973 = vmatprep.subr.mxu0 0.0
        %1974 = vmatpush1.msra.mxu0 0.0
        %1975 = vmatprep.subr.mxu0 0.0
        %1976 = vmatpush1.msra.mxu0 0.0
        %1977 = vmatprep.subr.mxu0 0.0
        %1978 = vmatpush1.msra.mxu0 0.0
        %1979 = vmatprep.subr.mxu0 0.0
        %1980 = vmatpush1.msra.mxu0 0.0
        %1981 = vmatprep.subr.mxu0 0.0
        %1982 = vmatpush1.msra.mxu0 0.0
        %1983 = vmatprep.subr.mxu0 0.0
        %1984 = vmatpush1.msra.mxu0 0.0
        %1985 = vmatprep.subr.mxu0 0.0
        %1986 = vmatpush1.msra.mxu0 0.0
        %1987 = vmatprep.subr.mxu0 0.0
        %1988 = vmatpush1.msra.mxu0 0.0
        %1989 = vmatprep.subr.mxu0 0.0
        %1990 = vmatpush1.msra.mxu0 0.0
        %1991 = vmatprep.subr.mxu0 0.0
        %1992 = vmatpush1.msra.mxu0 0.0
        %1993 = vmatprep.subr.mxu0 0.0
        %1994 = vmatpush1.msra.mxu0 0.0
        %1995 = vmatprep.subr.mxu0 0.0
        %1996 = vmatpush1.msra.mxu0 0.0
        %1997 = vmatprep.mubr.f32.mxu0 0.0
        %1998 = vmatmul.mubr.f32.gmra.mrb[0].mxu0 %v1931
        %v1999 = vpop.f32.mrb[0].mxu0
        %v2000 = vadd.f32 0.0, %v1999
        %v2001 = vpop.f32.mrb[0].mxu0
        %v2002 = vadd.f32 0.0, %v2001
        %2003 = vdwg.mxu0
        %v2004 = vadd.f32 %v1928, %v2000
        %v2005 = vadd.f32 %v1929, %v2002
        %v2006 = vadd.f32 %v2004, %v895
        %v2007 = vadd.f32 %v2005, %v899
        %v2008 = vmax.f32 %v2006, 0.0
        %v2009 = vmax.f32 %v2007, 0.0
        %v2010 = vmax.f32 %v904, %v1272
        %v2011 = vmax.f32 %v905, %v1273
        %v2012 = vmax.f32 %v1640, %v2008
        %v2013 = vmax.f32 %v1641, %v2009
        %v2014 = vmax.f32 %v2010, %v2011
        %v2015 = vmax.f32 %v2012, %v2013
        %v2016 = vld [vmem:[%s3] sm:$0xff]
        %v2017 = vld [vmem:[%s3 + $0x8] sm:$0xff]
        %v2018 = vld [vmem:[%s3 + $0x10] sm:$0xff]
        %v2019 = vld [vmem:[%s3 + $0x18] sm:$0xff]
        %v2020 = vld [vmem:[%s3 + $0x20] sm:$0xff]
        %v2021 = vld [vmem:[%s3 + $0x28] sm:$0xff]
        %v2022 = vld [vmem:[%s3 + $0x30] sm:$0xff]
        %v2023 = vld [vmem:[%s3 + $0x38] sm:$0xff]
        %v2024 = vld [vmem:[%s3 + $0x40] sm:$0xff]
        %v2025 = vld [vmem:[%s3 + $0x48] sm:$0xff]
        %v2026 = vld [vmem:[%s3 + $0x50] sm:$0xff]
        %v2027 = vld [vmem:[%s3 + $0x58] sm:$0xff]
        %v2028 = vld [vmem:[%s3 + $0x60] sm:$0xff]
        %v2029 = vld [vmem:[%s3 + $0x68] sm:$0xff]
        %v2030 = vld [vmem:[%s3 + $0x70] sm:$0xff]
        %v2031 = vld [vmem:[%s3 + $0x78] sm:$0xff]
        %v2032 = vld [vmem:[%s3 + $0x80] sm:$0xff]
        %v2033 = vld [vmem:[%s3 + $0x88] sm:$0xff]
        %v2034 = vld [vmem:[%s3 + $0x90] sm:$0xff]
        %v2035 = vld [vmem:[%s3 + $0x98] sm:$0xff]
        %v2036 = vld [vmem:[%s3 + $0xa0] sm:$0xff]
        %v2037 = vld [vmem:[%s3 + $0xa8] sm:$0xff]
        %v2038 = vld [vmem:[%s3 + $0xb0] sm:$0xff]
        %v2039 = vld [vmem:[%s3 + $0xb8] sm:$0xff]
        %v2040 = vld [vmem:[%s3 + $0xc0] sm:$0xff]
        %v2041 = vld [vmem:[%s3 + $0xc8] sm:$0xff]
        %v2042 = vld [vmem:[%s3 + $0xd0] sm:$0xff]
        %v2043 = vld [vmem:[%s3 + $0xd8] sm:$0xff]
        %v2044 = vld [vmem:[%s3 + $0xe0] sm:$0xff]
        %v2045 = vld [vmem:[%s3 + $0xe8] sm:$0xff]
        %v2046 = vld [vmem:[%s3 + $0xf0] sm:$0xff]
        %v2047 = vld [vmem:[%s3 + $0xf8] sm:$0xff]
        %s2048 = scalar_lea.vmem %s3, 256
        %v2049 = vld [vmem:[%s2048] sm:$0xff]
        %v2050 = vld [vmem:[%s2048 + $0x8] sm:$0xff]
        %v2051 = vld [vmem:[%s2048 + $0x10] sm:$0xff]
        %v2052 = vld [vmem:[%s2048 + $0x18] sm:$0xff]
        %v2053 = vld [vmem:[%s2048 + $0x20] sm:$0xff]
        %v2054 = vld [vmem:[%s2048 + $0x28] sm:$0xff]
        %v2055 = vld [vmem:[%s2048 + $0x30] sm:$0xff]
        %v2056 = vld [vmem:[%s2048 + $0x38] sm:$0xff]
        %v2057 = vld [vmem:[%s2048 + $0x40] sm:$0xff]
        %v2058 = vld [vmem:[%s2048 + $0x48] sm:$0xff]
        %v2059 = vld [vmem:[%s2048 + $0x50] sm:$0xff]
        %v2060 = vld [vmem:[%s2048 + $0x58] sm:$0xff]
        %v2061 = vld [vmem:[%s2048 + $0x60] sm:$0xff]
        %v2062 = vld [vmem:[%s2048 + $0x68] sm:$0xff]
        %v2063 = vld [vmem:[%s2048 + $0x70] sm:$0xff]
        %v2064 = vld [vmem:[%s2048 + $0x78] sm:$0xff]
        %v2065 = vld [vmem:[%s2048 + $0x80] sm:$0xff]
        %v2066 = vld [vmem:[%s2048 + $0x88] sm:$0xff]
        %v2067 = vld [vmem:[%s2048 + $0x90] sm:$0xff]
        %v2068 = vld [vmem:[%s2048 + $0x98] sm:$0xff]
        %v2069 = vld [vmem:[%s2048 + $0xa0] sm:$0xff]
        %v2070 = vld [vmem:[%s2048 + $0xa8] sm:$0xff]
        %v2071 = vld [vmem:[%s2048 + $0xb0] sm:$0xff]
        %v2072 = vld [vmem:[%s2048 + $0xb8] sm:$0xff]
        %v2073 = vld [vmem:[%s2048 + $0xc0] sm:$0xff]
        %v2074 = vld [vmem:[%s2048 + $0xc8] sm:$0xff]
        %v2075 = vld [vmem:[%s2048 + $0xd0] sm:$0xff]
        %v2076 = vld [vmem:[%s2048 + $0xd8] sm:$0xff]
        %v2077 = vld [vmem:[%s2048 + $0xe0] sm:$0xff]
        %v2078 = vld [vmem:[%s2048 + $0xe8] sm:$0xff]
        %v2079 = vld [vmem:[%s2048 + $0xf0] sm:$0xff]
        %v2080 = vld [vmem:[%s2048 + $0xf8] sm:$0xff]
        %2081 = vmatprep.subr.mxu0 %v2050
        %2082 = vmatpush1.msra.mxu0 %v2049
        %2083 = vmatprep.subr.mxu0 %v2052
        %2084 = vmatpush1.msra.mxu0 %v2051
        %2085 = vmatprep.subr.mxu0 %v2054
        %2086 = vmatpush1.msra.mxu0 %v2053
        %2087 = vmatprep.subr.mxu0 %v2056
        %2088 = vmatpush1.msra.mxu0 %v2055
        %2089 = vmatprep.subr.mxu0 %v2058
        %2090 = vmatpush1.msra.mxu0 %v2057
        %2091 = vmatprep.subr.mxu0 %v2060
        %2092 = vmatpush1.msra.mxu0 %v2059
        %2093 = vmatprep.subr.mxu0 %v2062
        %2094 = vmatpush1.msra.mxu0 %v2061
        %2095 = vmatprep.subr.mxu0 %v2064
        %2096 = vmatpush1.msra.mxu0 %v2063
        %2097 = vmatprep.subr.mxu0 %v2066
        %2098 = vmatpush1.msra.mxu0 %v2065
        %2099 = vmatprep.subr.mxu0 %v2068
        %2100 = vmatpush1.msra.mxu0 %v2067
        %2101 = vmatprep.subr.mxu0 %v2070
        %2102 = vmatpush1.msra.mxu0 %v2069
        %2103 = vmatprep.subr.mxu0 %v2072
        %2104 = vmatpush1.msra.mxu0 %v2071
        %2105 = vmatprep.subr.mxu0 %v2074
        %2106 = vmatpush1.msra.mxu0 %v2073
        %2107 = vmatprep.subr.mxu0 %v2076
        %2108 = vmatpush1.msra.mxu0 %v2075
        %2109 = vmatprep.subr.mxu0 %v2078
        %2110 = vmatpush1.msra.mxu0 %v2077
        %2111 = vmatprep.subr.mxu0 %v2080
        %2112 = vmatpush1.msra.mxu0 %v2079
        %2113 = vmatprep.subr.mxu0 0.0
        %2114 = vmatpush1.msra.mxu0 0.0
        %2115 = vmatprep.subr.mxu0 0.0
        %2116 = vmatpush1.msra.mxu0 0.0
        %2117 = vmatprep.subr.mxu0 0.0
        %2118 = vmatpush1.msra.mxu0 0.0
        %2119 = vmatprep.subr.mxu0 0.0
        %2120 = vmatpush1.msra.mxu0 0.0
        %2121 = vmatprep.subr.mxu0 0.0
        %2122 = vmatpush1.msra.mxu0 0.0
        %2123 = vmatprep.subr.mxu0 0.0
        %2124 = vmatpush1.msra.mxu0 0.0
        %2125 = vmatprep.subr.mxu0 0.0
        %2126 = vmatpush1.msra.mxu0 0.0
        %2127 = vmatprep.subr.mxu0 0.0
        %2128 = vmatpush1.msra.mxu0 0.0
        %2129 = vmatprep.subr.mxu0 0.0
        %2130 = vmatpush1.msra.mxu0 0.0
        %2131 = vmatprep.subr.mxu0 0.0
        %2132 = vmatpush1.msra.mxu0 0.0
        %2133 = vmatprep.subr.mxu0 0.0
        %2134 = vmatpush1.msra.mxu0 0.0
        %2135 = vmatprep.subr.mxu0 0.0
        %2136 = vmatpush1.msra.mxu0 0.0
        %2137 = vmatprep.subr.mxu0 0.0
        %2138 = vmatpush1.msra.mxu0 0.0
        %2139 = vmatprep.subr.mxu0 0.0
        %2140 = vmatpush1.msra.mxu0 0.0
        %2141 = vmatprep.subr.mxu0 0.0
        %2142 = vmatpush1.msra.mxu0 0.0
        %2143 = vmatprep.subr.mxu0 0.0
        %2144 = vmatpush1.msra.mxu0 0.0
        %2145 = vmatprep.mubr.f32.mxu0 0.0
        %2146 = vmatmul.mubr.f32.gmra.mrb[0].mxu0 %v2015
        %v2147 = vpop.f32.mrb[0].mxu0
        %v2148 = vadd.f32 0.0, %v2147
        %v2149 = vpop.f32.mrb[0].mxu0
        %v2150 = vadd.f32 0.0, %v2149
        %2151 = vdwg.mxu0
        %2152 = vmatprep.subr.mxu0 %v2017
        %2153 = vmatpush1.msra.mxu0 %v2016
        %2154 = vmatprep.subr.mxu0 %v2019
        %2155 = vmatpush1.msra.mxu0 %v2018
        %2156 = vmatprep.subr.mxu0 %v2021
        %2157 = vmatpush1.msra.mxu0 %v2020
        %2158 = vmatprep.subr.mxu0 %v2023
        %2159 = vmatpush1.msra.mxu0 %v2022
        %2160 = vmatprep.subr.mxu0 %v2025
        %2161 = vmatpush1.msra.mxu0 %v2024
        %2162 = vmatprep.subr.mxu0 %v2027
        %2163 = vmatpush1.msra.mxu0 %v2026
        %2164 = vmatprep.subr.mxu0 %v2029
        %2165 = vmatpush1.msra.mxu0 %v2028
        %2166 = vmatprep.subr.mxu0 %v2031
        %2167 = vmatpush1.msra.mxu0 %v2030
        %2168 = vmatprep.subr.mxu0 %v2033
        %2169 = vmatpush1.msra.mxu0 %v2032
        %2170 = vmatprep.subr.mxu0 %v2035
        %2171 = vmatpush1.msra.mxu0 %v2034
        %2172 = vmatprep.subr.mxu0 %v2037
        %2173 = vmatpush1.msra.mxu0 %v2036
        %2174 = vmatprep.subr.mxu0 %v2039
        %2175 = vmatpush1.msra.mxu0 %v2038
        %2176 = vmatprep.subr.mxu0 %v2041
        %2177 = vmatpush1.msra.mxu0 %v2040
        %2178 = vmatprep.subr.mxu0 %v2043
        %2179 = vmatpush1.msra.mxu0 %v2042
        %2180 = vmatprep.subr.mxu0 %v2045
        %2181 = vmatpush1.msra.mxu0 %v2044
        %2182 = vmatprep.subr.mxu0 %v2047
        %2183 = vmatpush1.msra.mxu0 %v2046
        %2184 = vmatprep.subr.mxu0 0.0
        %2185 = vmatpush1.msra.mxu0 0.0
        %2186 = vmatprep.subr.mxu0 0.0
        %2187 = vmatpush1.msra.mxu0 0.0
        %2188 = vmatprep.subr.mxu0 0.0
        %2189 = vmatpush1.msra.mxu0 0.0
        %2190 = vmatprep.subr.mxu0 0.0
        %2191 = vmatpush1.msra.mxu0 0.0
        %2192 = vmatprep.subr.mxu0 0.0
        %2193 = vmatpush1.msra.mxu0 0.0
        %2194 = vmatprep.subr.mxu0 0.0
        %2195 = vmatpush1.msra.mxu0 0.0
        %2196 = vmatprep.subr.mxu0 0.0
        %2197 = vmatpush1.msra.mxu0 0.0
        %2198 = vmatprep.subr.mxu0 0.0
        %2199 = vmatpush1.msra.mxu0 0.0
        %2200 = vmatprep.subr.mxu0 0.0
        %2201 = vmatpush1.msra.mxu0 0.0
        %2202 = vmatprep.subr.mxu0 0.0
        %2203 = vmatpush1.msra.mxu0 0.0
        %2204 = vmatprep.subr.mxu0 0.0
        %2205 = vmatpush1.msra.mxu0 0.0
        %2206 = vmatprep.subr.mxu0 0.0
        %2207 = vmatpush1.msra.mxu0 0.0
        %2208 = vmatprep.subr.mxu0 0.0
        %2209 = vmatpush1.msra.mxu0 0.0
        %2210 = vmatprep.subr.mxu0 0.0
        %2211 = vmatpush1.msra.mxu0 0.0
        %2212 = vmatprep.subr.mxu0 0.0
        %2213 = vmatpush1.msra.mxu0 0.0
        %2214 = vmatprep.subr.mxu0 0.0
        %2215 = vmatpush1.msra.mxu0 0.0
        %2216 = vmatprep.mubr.f32.mxu0 0.0
        %2217 = vmatmul.mubr.f32.gmra.mrb[0].mxu0 %v2014
        %v2218 = vpop.f32.mrb[0].mxu0
        %v2219 = vadd.f32 %v2148, %v2218
        %v2220 = vpop.f32.mrb[0].mxu0
        %v2221 = vadd.f32 %v2150, %v2220
        %2222 = vdwg.mxu0
        %v2224 = vrot.slane %v2014, 1
        %2226 = vmatprep.subr.mxu0 %v2050
        %2227 = vmatpush1.msra.mxu0 %v2049
        %2228 = vmatprep.subr.mxu0 %v2052
        %2229 = vmatpush1.msra.mxu0 %v2051
        %2230 = vmatprep.subr.mxu0 %v2054
        %2231 = vmatpush1.msra.mxu0 %v2053
        %2232 = vmatprep.subr.mxu0 %v2056
        %2233 = vmatpush1.msra.mxu0 %v2055
        %2234 = vmatprep.subr.mxu0 %v2058
        %2235 = vmatpush1.msra.mxu0 %v2057
        %2236 = vmatprep.subr.mxu0 %v2060
        %2237 = vmatpush1.msra.mxu0 %v2059
        %2238 = vmatprep.subr.mxu0 %v2062
        %2239 = vmatpush1.msra.mxu0 %v2061
        %2240 = vmatprep.subr.mxu0 %v2064
        %2241 = vmatpush1.msra.mxu0 %v2063
        %2242 = vmatprep.subr.mxu0 %v2066
        %2243 = vmatpush1.msra.mxu0 %v2065
        %2244 = vmatprep.subr.mxu0 %v2068
        %2245 = vmatpush1.msra.mxu0 %v2067
        %2246 = vmatprep.subr.mxu0 %v2070
        %2247 = vmatpush1.msra.mxu0 %v2069
        %2248 = vmatprep.subr.mxu0 %v2072
        %2249 = vmatpush1.msra.mxu0 %v2071
        %2250 = vmatprep.subr.mxu0 %v2074
        %2251 = vmatpush1.msra.mxu0 %v2073
        %2252 = vmatprep.subr.mxu0 %v2076
        %2253 = vmatpush1.msra.mxu0 %v2075
        %2254 = vmatprep.subr.mxu0 %v2078
        %2255 = vmatpush1.msra.mxu0 %v2077
        %2256 = vmatprep.subr.mxu0 %v2080
        %2257 = vmatpush1.msra.mxu0 %v2079
        %2258 = vmatprep.subr.mxu0 0.0
        %2259 = vmatpush1.msra.mxu0 0.0
        %2260 = vmatprep.subr.mxu0 0.0
        %2261 = vmatpush1.msra.mxu0 0.0
        %2262 = vmatprep.subr.mxu0 0.0
        %2263 = vmatpush1.msra.mxu0 0.0
        %2264 = vmatprep.subr.mxu0 0.0
        %2265 = vmatpush1.msra.mxu0 0.0
        %2266 = vmatprep.subr.mxu0 0.0
        %2267 = vmatpush1.msra.mxu0 0.0
        %2268 = vmatprep.subr.mxu0 0.0
        %2269 = vmatpush1.msra.mxu0 0.0
        %2270 = vmatprep.subr.mxu0 0.0
        %2271 = vmatpush1.msra.mxu0 0.0
        %2272 = vmatprep.subr.mxu0 0.0
        %2273 = vmatpush1.msra.mxu0 0.0
        %2274 = vmatprep.subr.mxu0 0.0
        %2275 = vmatpush1.msra.mxu0 0.0
        %2276 = vmatprep.subr.mxu0 0.0
        %2277 = vmatpush1.msra.mxu0 0.0
        %2278 = vmatprep.subr.mxu0 0.0
        %2279 = vmatpush1.msra.mxu0 0.0
        %2280 = vmatprep.subr.mxu0 0.0
        %2281 = vmatpush1.msra.mxu0 0.0
        %2282 = vmatprep.subr.mxu0 0.0
        %2283 = vmatpush1.msra.mxu0 0.0
        %2284 = vmatprep.subr.mxu0 0.0
        %2285 = vmatpush1.msra.mxu0 0.0
        %2286 = vmatprep.subr.mxu0 0.0
        %2287 = vmatpush1.msra.mxu0 0.0
        %2288 = vmatprep.subr.mxu0 0.0
        %2289 = vmatpush1.msra.mxu0 0.0
        %2290 = vmatprep.mubr.f32.mxu0 0.0
        %2291 = vmatmul.mubr.f32.gmra.mrb[0].mxu0 %v2224
        %v2292 = vpop.f32.mrb[0].mxu0
        %v2293 = vadd.f32 0.0, %v2292
        %v2294 = vpop.f32.mrb[0].mxu0
        %v2295 = vadd.f32 0.0, %v2294
        %2296 = vdwg.mxu0
        %2297 = vmatprep.subr.mxu0 %v2017
        %2298 = vmatpush1.msra.mxu0 %v2016
        %2299 = vmatprep.subr.mxu0 %v2019
        %2300 = vmatpush1.msra.mxu0 %v2018
        %2301 = vmatprep.subr.mxu0 %v2021
        %2302 = vmatpush1.msra.mxu0 %v2020
        %2303 = vmatprep.subr.mxu0 %v2023
        %2304 = vmatpush1.msra.mxu0 %v2022
        %2305 = vmatprep.subr.mxu0 %v2025
        %2306 = vmatpush1.msra.mxu0 %v2024
        %2307 = vmatprep.subr.mxu0 %v2027
        %2308 = vmatpush1.msra.mxu0 %v2026
        %2309 = vmatprep.subr.mxu0 %v2029
        %2310 = vmatpush1.msra.mxu0 %v2028
        %2311 = vmatprep.subr.mxu0 %v2031
        %2312 = vmatpush1.msra.mxu0 %v2030
        %2313 = vmatprep.subr.mxu0 %v2033
        %2314 = vmatpush1.msra.mxu0 %v2032
        %2315 = vmatprep.subr.mxu0 %v2035
        %2316 = vmatpush1.msra.mxu0 %v2034
        %2317 = vmatprep.subr.mxu0 %v2037
        %2318 = vmatpush1.msra.mxu0 %v2036
        %2319 = vmatprep.subr.mxu0 %v2039
        %2320 = vmatpush1.msra.mxu0 %v2038
        %2321 = vmatprep.subr.mxu0 %v2041
        %2322 = vmatpush1.msra.mxu0 %v2040
        %2323 = vmatprep.subr.mxu0 %v2043
        %2324 = vmatpush1.msra.mxu0 %v2042
        %2325 = vmatprep.subr.mxu0 %v2045
        %2326 = vmatpush1.msra.mxu0 %v2044
        %2327 = vmatprep.subr.mxu0 %v2047
        %2328 = vmatpush1.msra.mxu0 %v2046
        %2329 = vmatprep.subr.mxu0 0.0
        %2330 = vmatpush1.msra.mxu0 0.0
        %2331 = vmatprep.subr.mxu0 0.0
        %2332 = vmatpush1.msra.mxu0 0.0
        %2333 = vmatprep.subr.mxu0 0.0
        %2334 = vmatpush1.msra.mxu0 0.0
        %2335 = vmatprep.subr.mxu0 0.0
        %2336 = vmatpush1.msra.mxu0 0.0
        %2337 = vmatprep.subr.mxu0 0.0
        %2338 = vmatpush1.msra.mxu0 0.0
        %2339 = vmatprep.subr.mxu0 0.0
        %2340 = vmatpush1.msra.mxu0 0.0
        %2341 = vmatprep.subr.mxu0 0.0
        %2342 = vmatpush1.msra.mxu0 0.0
        %2343 = vmatprep.subr.mxu0 0.0
        %2344 = vmatpush1.msra.mxu0 0.0
        %2345 = vmatprep.subr.mxu0 0.0
        %2346 = vmatpush1.msra.mxu0 0.0
        %2347 = vmatprep.subr.mxu0 0.0
        %2348 = vmatpush1.msra.mxu0 0.0
        %2349 = vmatprep.subr.mxu0 0.0
        %2350 = vmatpush1.msra.mxu0 0.0
        %2351 = vmatprep.subr.mxu0 0.0
        %2352 = vmatpush1.msra.mxu0 0.0
        %2353 = vmatprep.subr.mxu0 0.0
        %2354 = vmatpush1.msra.mxu0 0.0
        %2355 = vmatprep.subr.mxu0 0.0
        %2356 = vmatpush1.msra.mxu0 0.0
        %2357 = vmatprep.subr.mxu0 0.0
        %2358 = vmatpush1.msra.mxu0 0.0
        %2359 = vmatprep.subr.mxu0 0.0
        %2360 = vmatpush1.msra.mxu0 0.0
        %2361 = vmatprep.mubr.f32.mxu0 0.0
        %2362 = vmatmul.mubr.f32.gmra.mrb[0].mxu0 %v2015
        %v2363 = vpop.f32.mrb[0].mxu0
        %v2364 = vadd.f32 %v2293, %v2363
        %v2365 = vpop.f32.mrb[0].mxu0
        %v2366 = vadd.f32 %v2295, %v2365
        %2367 = vdwg.mxu0
        %s2368 = scalar_lea.vmem %s3, 512
        %v2369 = vld [vmem:[%s2368] sm:$0xff]
        %v2370 = vld [vmem:[%s2368 + $0x8] sm:$0xff]
        %v2371 = vld [vmem:[%s2368 + $0x10] sm:$0xff]
        %v2372 = vld [vmem:[%s2368 + $0x18] sm:$0xff]
        %v2373 = vld [vmem:[%s2368 + $0x20] sm:$0xff]
        %v2374 = vld [vmem:[%s2368 + $0x28] sm:$0xff]
        %v2375 = vld [vmem:[%s2368 + $0x30] sm:$0xff]
        %v2376 = vld [vmem:[%s2368 + $0x38] sm:$0xff]
        %v2377 = vld [vmem:[%s2368 + $0x40] sm:$0xff]
        %v2378 = vld [vmem:[%s2368 + $0x48] sm:$0xff]
        %v2379 = vld [vmem:[%s2368 + $0x50] sm:$0xff]
        %v2380 = vld [vmem:[%s2368 + $0x58] sm:$0xff]
        %v2381 = vld [vmem:[%s2368 + $0x60] sm:$0xff]
        %v2382 = vld [vmem:[%s2368 + $0x68] sm:$0xff]
        %v2383 = vld [vmem:[%s2368 + $0x70] sm:$0xff]
        %v2384 = vld [vmem:[%s2368 + $0x78] sm:$0xff]
        %v2385 = vld [vmem:[%s2368 + $0x80] sm:$0xff]
        %v2386 = vld [vmem:[%s2368 + $0x88] sm:$0xff]
        %v2387 = vld [vmem:[%s2368 + $0x90] sm:$0xff]
        %v2388 = vld [vmem:[%s2368 + $0x98] sm:$0xff]
        %v2389 = vld [vmem:[%s2368 + $0xa0] sm:$0xff]
        %v2390 = vld [vmem:[%s2368 + $0xa8] sm:$0xff]
        %v2391 = vld [vmem:[%s2368 + $0xb0] sm:$0xff]
        %v2392 = vld [vmem:[%s2368 + $0xb8] sm:$0xff]
        %v2393 = vld [vmem:[%s2368 + $0xc0] sm:$0xff]
        %v2394 = vld [vmem:[%s2368 + $0xc8] sm:$0xff]
        %v2395 = vld [vmem:[%s2368 + $0xd0] sm:$0xff]
        %v2396 = vld [vmem:[%s2368 + $0xd8] sm:$0xff]
        %v2397 = vld [vmem:[%s2368 + $0xe0] sm:$0xff]
        %v2398 = vld [vmem:[%s2368 + $0xe8] sm:$0xff]
        %v2399 = vld [vmem:[%s2368 + $0xf0] sm:$0xff]
        %v2400 = vld [vmem:[%s2368 + $0xf8] sm:$0xff]
        %2401 = vmatprep.subr.mxu0 %v2370
        %2402 = vmatpush1.msra.mxu0 %v2369
        %2403 = vmatprep.subr.mxu0 %v2372
        %2404 = vmatpush1.msra.mxu0 %v2371
        %2405 = vmatprep.subr.mxu0 %v2374
        %2406 = vmatpush1.msra.mxu0 %v2373
        %2407 = vmatprep.subr.mxu0 %v2376
        %2408 = vmatpush1.msra.mxu0 %v2375
        %2409 = vmatprep.subr.mxu0 %v2378
        %2410 = vmatpush1.msra.mxu0 %v2377
        %2411 = vmatprep.subr.mxu0 %v2380
        %2412 = vmatpush1.msra.mxu0 %v2379
        %2413 = vmatprep.subr.mxu0 %v2382
        %2414 = vmatpush1.msra.mxu0 %v2381
        %2415 = vmatprep.subr.mxu0 %v2384
        %2416 = vmatpush1.msra.mxu0 %v2383
        %2417 = vmatprep.subr.mxu0 %v2386
        %2418 = vmatpush1.msra.mxu0 %v2385
        %2419 = vmatprep.subr.mxu0 %v2388
        %2420 = vmatpush1.msra.mxu0 %v2387
        %2421 = vmatprep.subr.mxu0 %v2390
        %2422 = vmatpush1.msra.mxu0 %v2389
        %2423 = vmatprep.subr.mxu0 %v2392
        %2424 = vmatpush1.msra.mxu0 %v2391
        %2425 = vmatprep.subr.mxu0 %v2394
        %2426 = vmatpush1.msra.mxu0 %v2393
        %2427 = vmatprep.subr.mxu0 %v2396
        %2428 = vmatpush1.msra.mxu0 %v2395
        %2429 = vmatprep.subr.mxu0 %v2398
        %2430 = vmatpush1.msra.mxu0 %v2397
        %2431 = vmatprep.subr.mxu0 %v2400
        %2432 = vmatpush1.msra.mxu0 %v2399
        %2433 = vmatprep.subr.mxu0 0.0
        %2434 = vmatpush1.msra.mxu0 0.0
        %2435 = vmatprep.subr.mxu0 0.0
        %2436 = vmatpush1.msra.mxu0 0.0
        %2437 = vmatprep.subr.mxu0 0.0
        %2438 = vmatpush1.msra.mxu0 0.0
        %2439 = vmatprep.subr.mxu0 0.0
        %2440 = vmatpush1.msra.mxu0 0.0
        %2441 = vmatprep.subr.mxu0 0.0
        %2442 = vmatpush1.msra.mxu0 0.0
        %2443 = vmatprep.subr.mxu0 0.0
        %2444 = vmatpush1.msra.mxu0 0.0
        %2445 = vmatprep.subr.mxu0 0.0
        %2446 = vmatpush1.msra.mxu0 0.0
        %2447 = vmatprep.subr.mxu0 0.0
        %2448 = vmatpush1.msra.mxu0 0.0
        %2449 = vmatprep.subr.mxu0 0.0
        %2450 = vmatpush1.msra.mxu0 0.0
        %2451 = vmatprep.subr.mxu0 0.0
        %2452 = vmatpush1.msra.mxu0 0.0
        %2453 = vmatprep.subr.mxu0 0.0
        %2454 = vmatpush1.msra.mxu0 0.0
        %2455 = vmatprep.subr.mxu0 0.0
        %2456 = vmatpush1.msra.mxu0 0.0
        %2457 = vmatprep.subr.mxu0 0.0
        %2458 = vmatpush1.msra.mxu0 0.0
        %2459 = vmatprep.subr.mxu0 0.0
        %2460 = vmatpush1.msra.mxu0 0.0
        %2461 = vmatprep.subr.mxu0 0.0
        %2462 = vmatpush1.msra.mxu0 0.0
        %2463 = vmatprep.subr.mxu0 0.0
        %2464 = vmatpush1.msra.mxu0 0.0
        %2465 = vmatprep.mubr.f32.mxu0 0.0
        %2466 = vmatmul.mubr.f32.gmra.mrb[0].mxu0 %v2224
        %v2467 = vpop.f32.mrb[0].mxu0
        %v2468 = vadd.f32 0.0, %v2467
        %v2469 = vpop.f32.mrb[0].mxu0
        %v2470 = vadd.f32 0.0, %v2469
        %2471 = vdwg.mxu0
        %v2472 = vadd.f32 %v2219, %v2468
        %v2473 = vadd.f32 %v2221, %v2470
        %v2475 = vrot.slane %v2015, 1
        %2477 = vmatprep.subr.mxu0 %v2370
        %2478 = vmatpush1.msra.mxu0 %v2369
        %2479 = vmatprep.subr.mxu0 %v2372
        %2480 = vmatpush1.msra.mxu0 %v2371
        %2481 = vmatprep.subr.mxu0 %v2374
        %2482 = vmatpush1.msra.mxu0 %v2373
        %2483 = vmatprep.subr.mxu0 %v2376
        %2484 = vmatpush1.msra.mxu0 %v2375
        %2485 = vmatprep.subr.mxu0 %v2378
        %2486 = vmatpush1.msra.mxu0 %v2377
        %2487 = vmatprep.subr.mxu0 %v2380
        %2488 = vmatpush1.msra.mxu0 %v2379
        %2489 = vmatprep.subr.mxu0 %v2382
        %2490 = vmatpush1.msra.mxu0 %v2381
        %2491 = vmatprep.subr.mxu0 %v2384
        %2492 = vmatpush1.msra.mxu0 %v2383
        %2493 = vmatprep.subr.mxu0 %v2386
        %2494 = vmatpush1.msra.mxu0 %v2385
        %2495 = vmatprep.subr.mxu0 %v2388
        %2496 = vmatpush1.msra.mxu0 %v2387
        %2497 = vmatprep.subr.mxu0 %v2390
        %2498 = vmatpush1.msra.mxu0 %v2389
        %2499 = vmatprep.subr.mxu0 %v2392
        %2500 = vmatpush1.msra.mxu0 %v2391
        %2501 = vmatprep.subr.mxu0 %v2394
        %2502 = vmatpush1.msra.mxu0 %v2393
        %2503 = vmatprep.subr.mxu0 %v2396
        %2504 = vmatpush1.msra.mxu0 %v2395
        %2505 = vmatprep.subr.mxu0 %v2398
        %2506 = vmatpush1.msra.mxu0 %v2397
        %2507 = vmatprep.subr.mxu0 %v2400
        %2508 = vmatpush1.msra.mxu0 %v2399
        %2509 = vmatprep.subr.mxu0 0.0
        %2510 = vmatpush1.msra.mxu0 0.0
        %2511 = vmatprep.subr.mxu0 0.0
        %2512 = vmatpush1.msra.mxu0 0.0
        %2513 = vmatprep.subr.mxu0 0.0
        %2514 = vmatpush1.msra.mxu0 0.0
        %2515 = vmatprep.subr.mxu0 0.0
        %2516 = vmatpush1.msra.mxu0 0.0
        %2517 = vmatprep.subr.mxu0 0.0
        %2518 = vmatpush1.msra.mxu0 0.0
        %2519 = vmatprep.subr.mxu0 0.0
        %2520 = vmatpush1.msra.mxu0 0.0
        %2521 = vmatprep.subr.mxu0 0.0
        %2522 = vmatpush1.msra.mxu0 0.0
        %2523 = vmatprep.subr.mxu0 0.0
        %2524 = vmatpush1.msra.mxu0 0.0
        %2525 = vmatprep.subr.mxu0 0.0
        %2526 = vmatpush1.msra.mxu0 0.0
        %2527 = vmatprep.subr.mxu0 0.0
        %2528 = vmatpush1.msra.mxu0 0.0
        %2529 = vmatprep.subr.mxu0 0.0
        %2530 = vmatpush1.msra.mxu0 0.0
        %2531 = vmatprep.subr.mxu0 0.0
        %2532 = vmatpush1.msra.mxu0 0.0
        %2533 = vmatprep.subr.mxu0 0.0
        %2534 = vmatpush1.msra.mxu0 0.0
        %2535 = vmatprep.subr.mxu0 0.0
        %2536 = vmatpush1.msra.mxu0 0.0
        %2537 = vmatprep.subr.mxu0 0.0
        %2538 = vmatpush1.msra.mxu0 0.0
        %2539 = vmatprep.subr.mxu0 0.0
        %2540 = vmatpush1.msra.mxu0 0.0
        %2541 = vmatprep.mubr.f32.mxu0 0.0
        %2542 = vmatmul.mubr.f32.gmra.mrb[0].mxu0 %v2475
        %v2543 = vpop.f32.mrb[0].mxu0
        %v2544 = vadd.f32 0.0, %v2543
        %v2545 = vpop.f32.mrb[0].mxu0
        %v2546 = vadd.f32 0.0, %v2545
        %2547 = vdwg.mxu0
        %v2548 = vadd.f32 %v2364, %v2544
        %v2549 = vadd.f32 %v2366, %v2546
        %s2550 = scalar_lea.vmem %s3, 768
        %v2551 = vld [vmem:[%s2550] sm:$0xff]
        %v2552 = vld [vmem:[%s2550 + $0x8] sm:$0xff]
        %v2553 = vld [vmem:[%s2550 + $0x10] sm:$0xff]
        %v2554 = vld [vmem:[%s2550 + $0x18] sm:$0xff]
        %v2555 = vld [vmem:[%s2550 + $0x20] sm:$0xff]
        %v2556 = vld [vmem:[%s2550 + $0x28] sm:$0xff]
        %v2557 = vld [vmem:[%s2550 + $0x30] sm:$0xff]
        %v2558 = vld [vmem:[%s2550 + $0x38] sm:$0xff]
        %v2559 = vld [vmem:[%s2550 + $0x40] sm:$0xff]
        %v2560 = vld [vmem:[%s2550 + $0x48] sm:$0xff]
        %v2561 = vld [vmem:[%s2550 + $0x50] sm:$0xff]
        %v2562 = vld [vmem:[%s2550 + $0x58] sm:$0xff]
        %v2563 = vld [vmem:[%s2550 + $0x60] sm:$0xff]
        %v2564 = vld [vmem:[%s2550 + $0x68] sm:$0xff]
        %v2565 = vld [vmem:[%s2550 + $0x70] sm:$0xff]
        %v2566 = vld [vmem:[%s2550 + $0x78] sm:$0xff]
        %v2567 = vld [vmem:[%s2550 + $0x80] sm:$0xff]
        %v2568 = vld [vmem:[%s2550 + $0x88] sm:$0xff]
        %v2569 = vld [vmem:[%s2550 + $0x90] sm:$0xff]
        %v2570 = vld [vmem:[%s2550 + $0x98] sm:$0xff]
        %v2571 = vld [vmem:[%s2550 + $0xa0] sm:$0xff]
        %v2572 = vld [vmem:[%s2550 + $0xa8] sm:$0xff]
        %v2573 = vld [vmem:[%s2550 + $0xb0] sm:$0xff]
        %v2574 = vld [vmem:[%s2550 + $0xb8] sm:$0xff]
        %v2575 = vld [vmem:[%s2550 + $0xc0] sm:$0xff]
        %v2576 = vld [vmem:[%s2550 + $0xc8] sm:$0xff]
        %v2577 = vld [vmem:[%s2550 + $0xd0] sm:$0xff]
        %v2578 = vld [vmem:[%s2550 + $0xd8] sm:$0xff]
        %v2579 = vld [vmem:[%s2550 + $0xe0] sm:$0xff]
        %v2580 = vld [vmem:[%s2550 + $0xe8] sm:$0xff]
        %v2581 = vld [vmem:[%s2550 + $0xf0] sm:$0xff]
        %v2582 = vld [vmem:[%s2550 + $0xf8] sm:$0xff]
        %2583 = vmatprep.subr.mxu0 %v2552
        %2584 = vmatpush1.msra.mxu0 %v2551
        %2585 = vmatprep.subr.mxu0 %v2554
        %2586 = vmatpush1.msra.mxu0 %v2553
        %2587 = vmatprep.subr.mxu0 %v2556
        %2588 = vmatpush1.msra.mxu0 %v2555
        %2589 = vmatprep.subr.mxu0 %v2558
        %2590 = vmatpush1.msra.mxu0 %v2557
        %2591 = vmatprep.subr.mxu0 %v2560
        %2592 = vmatpush1.msra.mxu0 %v2559
        %2593 = vmatprep.subr.mxu0 %v2562
        %2594 = vmatpush1.msra.mxu0 %v2561
        %2595 = vmatprep.subr.mxu0 %v2564
        %2596 = vmatpush1.msra.mxu0 %v2563
        %2597 = vmatprep.subr.mxu0 %v2566
        %2598 = vmatpush1.msra.mxu0 %v2565
        %2599 = vmatprep.subr.mxu0 %v2568
        %2600 = vmatpush1.msra.mxu0 %v2567
        %2601 = vmatprep.subr.mxu0 %v2570
        %2602 = vmatpush1.msra.mxu0 %v2569
        %2603 = vmatprep.subr.mxu0 %v2572
        %2604 = vmatpush1.msra.mxu0 %v2571
        %2605 = vmatprep.subr.mxu0 %v2574
        %2606 = vmatpush1.msra.mxu0 %v2573
        %2607 = vmatprep.subr.mxu0 %v2576
        %2608 = vmatpush1.msra.mxu0 %v2575
        %2609 = vmatprep.subr.mxu0 %v2578
        %2610 = vmatpush1.msra.mxu0 %v2577
        %2611 = vmatprep.subr.mxu0 %v2580
        %2612 = vmatpush1.msra.mxu0 %v2579
        %2613 = vmatprep.subr.mxu0 %v2582
        %2614 = vmatpush1.msra.mxu0 %v2581
        %2615 = vmatprep.subr.mxu0 0.0
        %2616 = vmatpush1.msra.mxu0 0.0
        %2617 = vmatprep.subr.mxu0 0.0
        %2618 = vmatpush1.msra.mxu0 0.0
        %2619 = vmatprep.subr.mxu0 0.0
        %2620 = vmatpush1.msra.mxu0 0.0
        %2621 = vmatprep.subr.mxu0 0.0
        %2622 = vmatpush1.msra.mxu0 0.0
        %2623 = vmatprep.subr.mxu0 0.0
        %2624 = vmatpush1.msra.mxu0 0.0
        %2625 = vmatprep.subr.mxu0 0.0
        %2626 = vmatpush1.msra.mxu0 0.0
        %2627 = vmatprep.subr.mxu0 0.0
        %2628 = vmatpush1.msra.mxu0 0.0
        %2629 = vmatprep.subr.mxu0 0.0
        %2630 = vmatpush1.msra.mxu0 0.0
        %2631 = vmatprep.subr.mxu0 0.0
        %2632 = vmatpush1.msra.mxu0 0.0
        %2633 = vmatprep.subr.mxu0 0.0
        %2634 = vmatpush1.msra.mxu0 0.0
        %2635 = vmatprep.subr.mxu0 0.0
        %2636 = vmatpush1.msra.mxu0 0.0
        %2637 = vmatprep.subr.mxu0 0.0
        %2638 = vmatpush1.msra.mxu0 0.0
        %2639 = vmatprep.subr.mxu0 0.0
        %2640 = vmatpush1.msra.mxu0 0.0
        %2641 = vmatprep.subr.mxu0 0.0
        %2642 = vmatpush1.msra.mxu0 0.0
        %2643 = vmatprep.subr.mxu0 0.0
        %2644 = vmatpush1.msra.mxu0 0.0
        %2645 = vmatprep.subr.mxu0 0.0
        %2646 = vmatpush1.msra.mxu0 0.0
        %2647 = vmatprep.mubr.f32.mxu0 0.0
        %2648 = vmatmul.mubr.f32.gmra.mrb[0].mxu0 %v2475
        %v2649 = vpop.f32.mrb[0].mxu0
        %v2650 = vadd.f32 0.0, %v2649
        %v2651 = vpop.f32.mrb[0].mxu0
        %v2652 = vadd.f32 0.0, %v2651
        %2653 = vdwg.mxu0
        %v2654 = vadd.f32 %v2472, %v2650
        %v2655 = vadd.f32 %v2473, %v2652
        %v2656 = vrot.slane %v2014, 2
        %2658 = vmatprep.subr.mxu0 %v2552
        %2659 = vmatpush1.msra.mxu0 %v2551
        %2660 = vmatprep.subr.mxu0 %v2554
        %2661 = vmatpush1.msra.mxu0 %v2553
        %2662 = vmatprep.subr.mxu0 %v2556
        %2663 = vmatpush1.msra.mxu0 %v2555
        %2664 = vmatprep.subr.mxu0 %v2558
        %2665 = vmatpush1.msra.mxu0 %v2557
        %2666 = vmatprep.subr.mxu0 %v2560
        %2667 = vmatpush1.msra.mxu0 %v2559
        %2668 = vmatprep.subr.mxu0 %v2562
        %2669 = vmatpush1.msra.mxu0 %v2561
        %2670 = vmatprep.subr.mxu0 %v2564
        %2671 = vmatpush1.msra.mxu0 %v2563
        %2672 = vmatprep.subr.mxu0 %v2566
        %2673 = vmatpush1.msra.mxu0 %v2565
        %2674 = vmatprep.subr.mxu0 %v2568
        %2675 = vmatpush1.msra.mxu0 %v2567
        %2676 = vmatprep.subr.mxu0 %v2570
        %2677 = vmatpush1.msra.mxu0 %v2569
        %2678 = vmatprep.subr.mxu0 %v2572
        %2679 = vmatpush1.msra.mxu0 %v2571
        %2680 = vmatprep.subr.mxu0 %v2574
        %2681 = vmatpush1.msra.mxu0 %v2573
        %2682 = vmatprep.subr.mxu0 %v2576
        %2683 = vmatpush1.msra.mxu0 %v2575
        %2684 = vmatprep.subr.mxu0 %v2578
        %2685 = vmatpush1.msra.mxu0 %v2577
        %2686 = vmatprep.subr.mxu0 %v2580
        %2687 = vmatpush1.msra.mxu0 %v2579
        %2688 = vmatprep.subr.mxu0 %v2582
        %2689 = vmatpush1.msra.mxu0 %v2581
        %2690 = vmatprep.subr.mxu0 0.0
        %2691 = vmatpush1.msra.mxu0 0.0
        %2692 = vmatprep.subr.mxu0 0.0
        %2693 = vmatpush1.msra.mxu0 0.0
        %2694 = vmatprep.subr.mxu0 0.0
        %2695 = vmatpush1.msra.mxu0 0.0
        %2696 = vmatprep.subr.mxu0 0.0
        %2697 = vmatpush1.msra.mxu0 0.0
        %2698 = vmatprep.subr.mxu0 0.0
        %2699 = vmatpush1.msra.mxu0 0.0
        %2700 = vmatprep.subr.mxu0 0.0
        %2701 = vmatpush1.msra.mxu0 0.0
        %2702 = vmatprep.subr.mxu0 0.0
        %2703 = vmatpush1.msra.mxu0 0.0
        %2704 = vmatprep.subr.mxu0 0.0
        %2705 = vmatpush1.msra.mxu0 0.0
        %2706 = vmatprep.subr.mxu0 0.0
        %2707 = vmatpush1.msra.mxu0 0.0
        %2708 = vmatprep.subr.mxu0 0.0
        %2709 = vmatpush1.msra.mxu0 0.0
        %2710 = vmatprep.subr.mxu0 0.0
        %2711 = vmatpush1.msra.mxu0 0.0
        %2712 = vmatprep.subr.mxu0 0.0
        %2713 = vmatpush1.msra.mxu0 0.0
        %2714 = vmatprep.subr.mxu0 0.0
        %2715 = vmatpush1.msra.mxu0 0.0
        %2716 = vmatprep.subr.mxu0 0.0
        %2717 = vmatpush1.msra.mxu0 0.0
        %2718 = vmatprep.subr.mxu0 0.0
        %2719 = vmatpush1.msra.mxu0 0.0
        %2720 = vmatprep.subr.mxu0 0.0
        %2721 = vmatpush1.msra.mxu0 0.0
        %2722 = vmatprep.mubr.f32.mxu0 0.0
        %2723 = vmatmul.mubr.f32.gmra.mrb[0].mxu0 %v2656
        %v2724 = vpop.f32.mrb[0].mxu0
        %v2725 = vadd.f32 0.0, %v2724
        %v2726 = vpop.f32.mrb[0].mxu0
        %v2727 = vadd.f32 0.0, %v2726
        %2728 = vdwg.mxu0
        %v2729 = vadd.f32 %v2548, %v2725
        %v2730 = vadd.f32 %v2549, %v2727
        %s2731 = scalar_lea.vmem %s3, 1024
        %v2732 = vld [vmem:[%s2731] sm:$0xff]
        %v2733 = vld [vmem:[%s2731 + $0x8] sm:$0xff]
        %v2734 = vld [vmem:[%s2731 + $0x10] sm:$0xff]
        %v2735 = vld [vmem:[%s2731 + $0x18] sm:$0xff]
        %v2736 = vld [vmem:[%s2731 + $0x20] sm:$0xff]
        %v2737 = vld [vmem:[%s2731 + $0x28] sm:$0xff]
        %v2738 = vld [vmem:[%s2731 + $0x30] sm:$0xff]
        %v2739 = vld [vmem:[%s2731 + $0x38] sm:$0xff]
        %v2740 = vld [vmem:[%s2731 + $0x40] sm:$0xff]
        %v2741 = vld [vmem:[%s2731 + $0x48] sm:$0xff]
        %v2742 = vld [vmem:[%s2731 + $0x50] sm:$0xff]
        %v2743 = vld [vmem:[%s2731 + $0x58] sm:$0xff]
        %v2744 = vld [vmem:[%s2731 + $0x60] sm:$0xff]
        %v2745 = vld [vmem:[%s2731 + $0x68] sm:$0xff]
        %v2746 = vld [vmem:[%s2731 + $0x70] sm:$0xff]
        %v2747 = vld [vmem:[%s2731 + $0x78] sm:$0xff]
        %v2748 = vld [vmem:[%s2731 + $0x80] sm:$0xff]
        %v2749 = vld [vmem:[%s2731 + $0x88] sm:$0xff]
        %v2750 = vld [vmem:[%s2731 + $0x90] sm:$0xff]
        %v2751 = vld [vmem:[%s2731 + $0x98] sm:$0xff]
        %v2752 = vld [vmem:[%s2731 + $0xa0] sm:$0xff]
        %v2753 = vld [vmem:[%s2731 + $0xa8] sm:$0xff]
        %v2754 = vld [vmem:[%s2731 + $0xb0] sm:$0xff]
        %v2755 = vld [vmem:[%s2731 + $0xb8] sm:$0xff]
        %v2756 = vld [vmem:[%s2731 + $0xc0] sm:$0xff]
        %v2757 = vld [vmem:[%s2731 + $0xc8] sm:$0xff]
        %v2758 = vld [vmem:[%s2731 + $0xd0] sm:$0xff]
        %v2759 = vld [vmem:[%s2731 + $0xd8] sm:$0xff]
        %v2760 = vld [vmem:[%s2731 + $0xe0] sm:$0xff]
        %v2761 = vld [vmem:[%s2731 + $0xe8] sm:$0xff]
        %v2762 = vld [vmem:[%s2731 + $0xf0] sm:$0xff]
        %v2763 = vld [vmem:[%s2731 + $0xf8] sm:$0xff]
        %2764 = vmatprep.subr.mxu0 %v2733
        %2765 = vmatpush1.msra.mxu0 %v2732
        %2766 = vmatprep.subr.mxu0 %v2735
        %2767 = vmatpush1.msra.mxu0 %v2734
        %2768 = vmatprep.subr.mxu0 %v2737
        %2769 = vmatpush1.msra.mxu0 %v2736
        %2770 = vmatprep.subr.mxu0 %v2739
        %2771 = vmatpush1.msra.mxu0 %v2738
        %2772 = vmatprep.subr.mxu0 %v2741
        %2773 = vmatpush1.msra.mxu0 %v2740
        %2774 = vmatprep.subr.mxu0 %v2743
        %2775 = vmatpush1.msra.mxu0 %v2742
        %2776 = vmatprep.subr.mxu0 %v2745
        %2777 = vmatpush1.msra.mxu0 %v2744
        %2778 = vmatprep.subr.mxu0 %v2747
        %2779 = vmatpush1.msra.mxu0 %v2746
        %2780 = vmatprep.subr.mxu0 %v2749
        %2781 = vmatpush1.msra.mxu0 %v2748
        %2782 = vmatprep.subr.mxu0 %v2751
        %2783 = vmatpush1.msra.mxu0 %v2750
        %2784 = vmatprep.subr.mxu0 %v2753
        %2785 = vmatpush1.msra.mxu0 %v2752
        %2786 = vmatprep.subr.mxu0 %v2755
        %2787 = vmatpush1.msra.mxu0 %v2754
        %2788 = vmatprep.subr.mxu0 %v2757
        %2789 = vmatpush1.msra.mxu0 %v2756
        %2790 = vmatprep.subr.mxu0 %v2759
        %2791 = vmatpush1.msra.mxu0 %v2758
        %2792 = vmatprep.subr.mxu0 %v2761
        %2793 = vmatpush1.msra.mxu0 %v2760
        %2794 = vmatprep.subr.mxu0 %v2763
        %2795 = vmatpush1.msra.mxu0 %v2762
        %2796 = vmatprep.subr.mxu0 0.0
        %2797 = vmatpush1.msra.mxu0 0.0
        %2798 = vmatprep.subr.mxu0 0.0
        %2799 = vmatpush1.msra.mxu0 0.0
        %2800 = vmatprep.subr.mxu0 0.0
        %2801 = vmatpush1.msra.mxu0 0.0
        %2802 = vmatprep.subr.mxu0 0.0
        %2803 = vmatpush1.msra.mxu0 0.0
        %2804 = vmatprep.subr.mxu0 0.0
        %2805 = vmatpush1.msra.mxu0 0.0
        %2806 = vmatprep.subr.mxu0 0.0
        %2807 = vmatpush1.msra.mxu0 0.0
        %2808 = vmatprep.subr.mxu0 0.0
        %2809 = vmatpush1.msra.mxu0 0.0
        %2810 = vmatprep.subr.mxu0 0.0
        %2811 = vmatpush1.msra.mxu0 0.0
        %2812 = vmatprep.subr.mxu0 0.0
        %2813 = vmatpush1.msra.mxu0 0.0
        %2814 = vmatprep.subr.mxu0 0.0
        %2815 = vmatpush1.msra.mxu0 0.0
        %2816 = vmatprep.subr.mxu0 0.0
        %2817 = vmatpush1.msra.mxu0 0.0
        %2818 = vmatprep.subr.mxu0 0.0
        %2819 = vmatpush1.msra.mxu0 0.0
        %2820 = vmatprep.subr.mxu0 0.0
        %2821 = vmatpush1.msra.mxu0 0.0
        %2822 = vmatprep.subr.mxu0 0.0
        %2823 = vmatpush1.msra.mxu0 0.0
        %2824 = vmatprep.subr.mxu0 0.0
        %2825 = vmatpush1.msra.mxu0 0.0
        %2826 = vmatprep.subr.mxu0 0.0
        %2827 = vmatpush1.msra.mxu0 0.0
        %2828 = vmatprep.mubr.f32.mxu0 0.0
        %2829 = vmatmul.mubr.f32.gmra.mrb[0].mxu0 %v2656
        %v2830 = vpop.f32.mrb[0].mxu0
        %v2831 = vadd.f32 0.0, %v2830
        %v2832 = vpop.f32.mrb[0].mxu0
        %v2833 = vadd.f32 0.0, %v2832
        %2834 = vdwg.mxu0
        %v2835 = vadd.f32 %v2654, %v2831
        %v2836 = vadd.f32 %v2655, %v2833
        %v2837 = vrot.slane %v2015, 2
        %2839 = vmatprep.subr.mxu0 %v2733
        %2840 = vmatpush1.msra.mxu0 %v2732
        %2841 = vmatprep.subr.mxu0 %v2735
        %2842 = vmatpush1.msra.mxu0 %v2734
        %2843 = vmatprep.subr.mxu0 %v2737
        %2844 = vmatpush1.msra.mxu0 %v2736
        %2845 = vmatprep.subr.mxu0 %v2739
        %2846 = vmatpush1.msra.mxu0 %v2738
        %2847 = vmatprep.subr.mxu0 %v2741
        %2848 = vmatpush1.msra.mxu0 %v2740
        %2849 = vmatprep.subr.mxu0 %v2743
        %2850 = vmatpush1.msra.mxu0 %v2742
        %2851 = vmatprep.subr.mxu0 %v2745
        %2852 = vmatpush1.msra.mxu0 %v2744
        %2853 = vmatprep.subr.mxu0 %v2747
        %2854 = vmatpush1.msra.mxu0 %v2746
        %2855 = vmatprep.subr.mxu0 %v2749
        %2856 = vmatpush1.msra.mxu0 %v2748
        %2857 = vmatprep.subr.mxu0 %v2751
        %2858 = vmatpush1.msra.mxu0 %v2750
        %2859 = vmatprep.subr.mxu0 %v2753
        %2860 = vmatpush1.msra.mxu0 %v2752
        %2861 = vmatprep.subr.mxu0 %v2755
        %2862 = vmatpush1.msra.mxu0 %v2754
        %2863 = vmatprep.subr.mxu0 %v2757
        %2864 = vmatpush1.msra.mxu0 %v2756
        %2865 = vmatprep.subr.mxu0 %v2759
        %2866 = vmatpush1.msra.mxu0 %v2758
        %2867 = vmatprep.subr.mxu0 %v2761
        %2868 = vmatpush1.msra.mxu0 %v2760
        %2869 = vmatprep.subr.mxu0 %v2763
        %2870 = vmatpush1.msra.mxu0 %v2762
        %2871 = vmatprep.subr.mxu0 0.0
        %2872 = vmatpush1.msra.mxu0 0.0
        %2873 = vmatprep.subr.mxu0 0.0
        %2874 = vmatpush1.msra.mxu0 0.0
        %2875 = vmatprep.subr.mxu0 0.0
        %2876 = vmatpush1.msra.mxu0 0.0
        %2877 = vmatprep.subr.mxu0 0.0
        %2878 = vmatpush1.msra.mxu0 0.0
        %2879 = vmatprep.subr.mxu0 0.0
        %2880 = vmatpush1.msra.mxu0 0.0
        %2881 = vmatprep.subr.mxu0 0.0
        %2882 = vmatpush1.msra.mxu0 0.0
        %2883 = vmatprep.subr.mxu0 0.0
        %2884 = vmatpush1.msra.mxu0 0.0
        %2885 = vmatprep.subr.mxu0 0.0
        %2886 = vmatpush1.msra.mxu0 0.0
        %2887 = vmatprep.subr.mxu0 0.0
        %2888 = vmatpush1.msra.mxu0 0.0
        %2889 = vmatprep.subr.mxu0 0.0
        %2890 = vmatpush1.msra.mxu0 0.0
        %2891 = vmatprep.subr.mxu0 0.0
        %2892 = vmatpush1.msra.mxu0 0.0
        %2893 = vmatprep.subr.mxu0 0.0
        %2894 = vmatpush1.msra.mxu0 0.0
        %2895 = vmatprep.subr.mxu0 0.0
        %2896 = vmatpush1.msra.mxu0 0.0
        %2897 = vmatprep.subr.mxu0 0.0
        %2898 = vmatpush1.msra.mxu0 0.0
        %2899 = vmatprep.subr.mxu0 0.0
        %2900 = vmatpush1.msra.mxu0 0.0
        %2901 = vmatprep.subr.mxu0 0.0
        %2902 = vmatpush1.msra.mxu0 0.0
        %2903 = vmatprep.mubr.f32.mxu0 0.0
        %2904 = vmatmul.mubr.f32.gmra.mrb[0].mxu0 %v2837
        %v2905 = vpop.f32.mrb[0].mxu0
        %v2906 = vadd.f32 0.0, %v2905
        %v2907 = vpop.f32.mrb[0].mxu0
        %v2908 = vadd.f32 0.0, %v2907
        %2909 = vdwg.mxu0
        %v2910 = vadd.f32 %v2729, %v2906
        %v2911 = vadd.f32 %v2730, %v2908
        %v2913 = vlaneseq
        %v2914 = vshrl.u32 %v2913, 7
        %v2915 = vsub.s32 0, %v2914
        %v2916 = vrot.slane %v385, %v2915
        %v2917 = vlaneseq
        %v2918 = vshrl.u32 %v2917, 7
        %v2919 = vsub.s32 1, %v2918
        %v2920 = vrot.slane %v385, %v2919
        %v2923 = vadd.f32 %v2835, %v2916
        %v2924 = vadd.f32 %v2836, %v2920
        %v2925 = vmax.f32 %v2923, 0.0
        %v2926 = vmax.f32 %v2924, 0.0
        %v2927 = vadd.f32 %v2910, %v2916
        %v2928 = vadd.f32 %v2911, %v2920
        %v2929 = vmax.f32 %v2927, 0.0
        %v2930 = vmax.f32 %v2928, 0.0
        %v2931 = vmax.f32 %v2925, %v2929
        %v2932 = vmax.f32 %v2926, %v2930
        %v2933 = vmax.f32 %v2931, %v2932
        %v2934 = vld [vmem:[%s6] sm:$0x1]
        %v2935 = vld [vmem:[%s5] sm:$0xff]
        %v2936 = vld [vmem:[%s5 + $0x8] sm:$0xff]
        %v2937 = vld [vmem:[%s5 + $0x10] sm:$0xff]
        %v2938 = vld [vmem:[%s5 + $0x18] sm:$0xff]
        %v2939 = vld [vmem:[%s5 + $0x20] sm:$0xff]
        %v2940 = vld [vmem:[%s5 + $0x28] sm:$0xff]
        %v2941 = vld [vmem:[%s5 + $0x30] sm:$0xff]
        %v2942 = vld [vmem:[%s5 + $0x38] sm:$0xff]
        %v2943 = vld [vmem:[%s5 + $0x40] sm:$0xff]
        %v2944 = vld [vmem:[%s5 + $0x48] sm:$0xff]
        %v2945 = vld [vmem:[%s5 + $0x50] sm:$0xff]
        %v2946 = vld [vmem:[%s5 + $0x58] sm:$0xff]
        %v2947 = vld [vmem:[%s5 + $0x60] sm:$0xff]
        %v2948 = vld [vmem:[%s5 + $0x68] sm:$0xff]
        %v2949 = vld [vmem:[%s5 + $0x70] sm:$0xff]
        %v2950 = vld [vmem:[%s5 + $0x78] sm:$0xff]
        %2951 = vmatprep.subr.mxu0 0.0
        %2952 = vmatpush1.msra.mxu0 %v2935
        %2953 = vmatprep.subr.mxu0 0.0
        %2954 = vmatpush1.msra.mxu0 %v2936
        %2955 = vmatprep.subr.mxu0 0.0
        %2956 = vmatpush1.msra.mxu0 %v2937
        %2957 = vmatprep.subr.mxu0 0.0
        %2958 = vmatpush1.msra.mxu0 %v2938
        %2959 = vmatprep.subr.mxu0 0.0
        %2960 = vmatpush1.msra.mxu0 %v2939
        %2961 = vmatprep.subr.mxu0 0.0
        %2962 = vmatpush1.msra.mxu0 %v2940
        %2963 = vmatprep.subr.mxu0 0.0
        %2964 = vmatpush1.msra.mxu0 %v2941
        %2965 = vmatprep.subr.mxu0 0.0
        %2966 = vmatpush1.msra.mxu0 %v2942
        %2967 = vmatprep.subr.mxu0 0.0
        %2968 = vmatpush1.msra.mxu0 %v2943
        %2969 = vmatprep.subr.mxu0 0.0
        %2970 = vmatpush1.msra.mxu0 %v2944
        %2971 = vmatprep.subr.mxu0 0.0
        %2972 = vmatpush1.msra.mxu0 %v2945
        %2973 = vmatprep.subr.mxu0 0.0
        %2974 = vmatpush1.msra.mxu0 %v2946
        %2975 = vmatprep.subr.mxu0 0.0
        %2976 = vmatpush1.msra.mxu0 %v2947
        %2977 = vmatprep.subr.mxu0 0.0
        %2978 = vmatpush1.msra.mxu0 %v2948
        %2979 = vmatprep.subr.mxu0 0.0
        %2980 = vmatpush1.msra.mxu0 %v2949
        %2981 = vmatprep.subr.mxu0 0.0
        %2982 = vmatpush1.msra.mxu0 %v2950
        %2983 = vmatprep.subr.mxu0 0.0
        %2984 = vmatpush1.msra.mxu0 0.0
        %2985 = vmatprep.subr.mxu0 0.0
        %2986 = vmatpush1.msra.mxu0 0.0
        %2987 = vmatprep.subr.mxu0 0.0
        %2988 = vmatpush1.msra.mxu0 0.0
        %2989 = vmatprep.subr.mxu0 0.0
        %2990 = vmatpush1.msra.mxu0 0.0
        %2991 = vmatprep.subr.mxu0 0.0
        %2992 = vmatpush1.msra.mxu0 0.0
        %2993 = vmatprep.subr.mxu0 0.0
        %2994 = vmatpush1.msra.mxu0 0.0
        %2995 = vmatprep.subr.mxu0 0.0
        %2996 = vmatpush1.msra.mxu0 0.0
        %2997 = vmatprep.subr.mxu0 0.0
        %2998 = vmatpush1.msra.mxu0 0.0
        %2999 = vmatprep.subr.mxu0 0.0
        %3000 = vmatpush1.msra.mxu0 0.0
        %3001 = vmatprep.subr.mxu0 0.0
        %3002 = vmatpush1.msra.mxu0 0.0
        %3003 = vmatprep.subr.mxu0 0.0
        %3004 = vmatpush1.msra.mxu0 0.0
        %3005 = vmatprep.subr.mxu0 0.0
        %3006 = vmatpush1.msra.mxu0 0.0
        %3007 = vmatprep.subr.mxu0 0.0
        %3008 = vmatpush1.msra.mxu0 0.0
        %3009 = vmatprep.subr.mxu0 0.0
        %3010 = vmatpush1.msra.mxu0 0.0
        %3011 = vmatprep.subr.mxu0 0.0
        %3012 = vmatpush1.msra.mxu0 0.0
        %3013 = vmatprep.subr.mxu0 0.0
        %3014 = vmatpush1.msra.mxu0 0.0
        %3015 = vmatprep.mubr.f32.mxu0 0.0
        %3016 = vmatmul.mubr.f32.gmra.mrb[0].mxu0 %v2933
        %v3017 = vpop.f32.mrb[0].mxu0
        %v3018 = vadd.f32 0.0, %v3017
        %v3019 = vpop.f32.mrb[0].mxu0
        %3020 = vdwg.mxu0
        %v3021 = vadd.f32 %v2934, %v3018
        %s3022 = scalar_lea.vmem %s5, 128
        %v3023 = vld [vmem:[%s3022] sm:$0xff]
        %v3024 = vld [vmem:[%s3022 + $0x8] sm:$0xff]
        %v3025 = vld [vmem:[%s3022 + $0x10] sm:$0xff]
        %v3026 = vld [vmem:[%s3022 + $0x18] sm:$0xff]
        %v3027 = vld [vmem:[%s3022 + $0x20] sm:$0xff]
        %v3028 = vld [vmem:[%s3022 + $0x28] sm:$0xff]
        %v3029 = vld [vmem:[%s3022 + $0x30] sm:$0xff]
        %v3030 = vld [vmem:[%s3022 + $0x38] sm:$0xff]
        %v3031 = vld [vmem:[%s3022 + $0x40] sm:$0xff]
        %v3032 = vld [vmem:[%s3022 + $0x48] sm:$0xff]
        %v3033 = vld [vmem:[%s3022 + $0x50] sm:$0xff]
        %v3034 = vld [vmem:[%s3022 + $0x58] sm:$0xff]
        %v3035 = vld [vmem:[%s3022 + $0x60] sm:$0xff]
        %v3036 = vld [vmem:[%s3022 + $0x68] sm:$0xff]
        %v3037 = vld [vmem:[%s3022 + $0x70] sm:$0xff]
        %v3038 = vld [vmem:[%s3022 + $0x78] sm:$0xff]
        %v3040 = vrot.slane %v2933, 1
        %3042 = vmatprep.subr.mxu0 0.0
        %3043 = vmatpush1.msra.mxu0 %v3023
        %3044 = vmatprep.subr.mxu0 0.0
        %3045 = vmatpush1.msra.mxu0 %v3024
        %3046 = vmatprep.subr.mxu0 0.0
        %3047 = vmatpush1.msra.mxu0 %v3025
        %3048 = vmatprep.subr.mxu0 0.0
        %3049 = vmatpush1.msra.mxu0 %v3026
        %3050 = vmatprep.subr.mxu0 0.0
        %3051 = vmatpush1.msra.mxu0 %v3027
        %3052 = vmatprep.subr.mxu0 0.0
        %3053 = vmatpush1.msra.mxu0 %v3028
        %3054 = vmatprep.subr.mxu0 0.0
        %3055 = vmatpush1.msra.mxu0 %v3029
        %3056 = vmatprep.subr.mxu0 0.0
        %3057 = vmatpush1.msra.mxu0 %v3030
        %3058 = vmatprep.subr.mxu0 0.0
        %3059 = vmatpush1.msra.mxu0 %v3031
        %3060 = vmatprep.subr.mxu0 0.0
        %3061 = vmatpush1.msra.mxu0 %v3032
        %3062 = vmatprep.subr.mxu0 0.0
        %3063 = vmatpush1.msra.mxu0 %v3033
        %3064 = vmatprep.subr.mxu0 0.0
        %3065 = vmatpush1.msra.mxu0 %v3034
        %3066 = vmatprep.subr.mxu0 0.0
        %3067 = vmatpush1.msra.mxu0 %v3035
        %3068 = vmatprep.subr.mxu0 0.0
        %3069 = vmatpush1.msra.mxu0 %v3036
        %3070 = vmatprep.subr.mxu0 0.0
        %3071 = vmatpush1.msra.mxu0 %v3037
        %3072 = vmatprep.subr.mxu0 0.0
        %3073 = vmatpush1.msra.mxu0 %v3038
        %3074 = vmatprep.subr.mxu0 0.0
        %3075 = vmatpush1.msra.mxu0 0.0
        %3076 = vmatprep.subr.mxu0 0.0
        %3077 = vmatpush1.msra.mxu0 0.0
        %3078 = vmatprep.subr.mxu0 0.0
        %3079 = vmatpush1.msra.mxu0 0.0
        %3080 = vmatprep.subr.mxu0 0.0
        %3081 = vmatpush1.msra.mxu0 0.0
        %3082 = vmatprep.subr.mxu0 0.0
        %3083 = vmatpush1.msra.mxu0 0.0
        %3084 = vmatprep.subr.mxu0 0.0
        %3085 = vmatpush1.msra.mxu0 0.0
        %3086 = vmatprep.subr.mxu0 0.0
        %3087 = vmatpush1.msra.mxu0 0.0
        %3088 = vmatprep.subr.mxu0 0.0
        %3089 = vmatpush1.msra.mxu0 0.0
        %3090 = vmatprep.subr.mxu0 0.0
        %3091 = vmatpush1.msra.mxu0 0.0
        %3092 = vmatprep.subr.mxu0 0.0
        %3093 = vmatpush1.msra.mxu0 0.0
        %3094 = vmatprep.subr.mxu0 0.0
        %3095 = vmatpush1.msra.mxu0 0.0
        %3096 = vmatprep.subr.mxu0 0.0
        %3097 = vmatpush1.msra.mxu0 0.0
        %3098 = vmatprep.subr.mxu0 0.0
        %3099 = vmatpush1.msra.mxu0 0.0
        %3100 = vmatprep.subr.mxu0 0.0
        %3101 = vmatpush1.msra.mxu0 0.0
        %3102 = vmatprep.subr.mxu0 0.0
        %3103 = vmatpush1.msra.mxu0 0.0
        %3104 = vmatprep.subr.mxu0 0.0
        %3105 = vmatpush1.msra.mxu0 0.0
        %3106 = vmatprep.mubr.f32.mxu0 0.0
        %3107 = vmatmul.mubr.f32.gmra.mrb[0].mxu0 %v3040
        %v3108 = vpop.f32.mrb[0].mxu0
        %v3109 = vadd.f32 0.0, %v3108
        %v3110 = vpop.f32.mrb[0].mxu0
        %3111 = vdwg.mxu0
        %v3112 = vadd.f32 %v3021, %v3109
        %s3113 = scalar_lea.vmem %s5, 256
        %v3114 = vld [vmem:[%s3113] sm:$0xff]
        %v3115 = vld [vmem:[%s3113 + $0x8] sm:$0xff]
        %v3116 = vld [vmem:[%s3113 + $0x10] sm:$0xff]
        %v3117 = vld [vmem:[%s3113 + $0x18] sm:$0xff]
        %v3118 = vld [vmem:[%s3113 + $0x20] sm:$0xff]
        %v3119 = vld [vmem:[%s3113 + $0x28] sm:$0xff]
        %v3120 = vld [vmem:[%s3113 + $0x30] sm:$0xff]
        %v3121 = vld [vmem:[%s3113 + $0x38] sm:$0xff]
        %v3122 = vld [vmem:[%s3113 + $0x40] sm:$0xff]
        %v3123 = vld [vmem:[%s3113 + $0x48] sm:$0xff]
        %v3124 = vld [vmem:[%s3113 + $0x50] sm:$0xff]
        %v3125 = vld [vmem:[%s3113 + $0x58] sm:$0xff]
        %v3126 = vld [vmem:[%s3113 + $0x60] sm:$0xff]
        %v3127 = vld [vmem:[%s3113 + $0x68] sm:$0xff]
        %v3128 = vld [vmem:[%s3113 + $0x70] sm:$0xff]
        %v3129 = vld [vmem:[%s3113 + $0x78] sm:$0xff]
        %v3130 = vrot.slane %v2933, 2
        %3132 = vmatprep.subr.mxu0 0.0
        %3133 = vmatpush1.msra.mxu0 %v3114
        %3134 = vmatprep.subr.mxu0 0.0
        %3135 = vmatpush1.msra.mxu0 %v3115
        %3136 = vmatprep.subr.mxu0 0.0
        %3137 = vmatpush1.msra.mxu0 %v3116
        %3138 = vmatprep.subr.mxu0 0.0
        %3139 = vmatpush1.msra.mxu0 %v3117
        %3140 = vmatprep.subr.mxu0 0.0
        %3141 = vmatpush1.msra.mxu0 %v3118
        %3142 = vmatprep.subr.mxu0 0.0
        %3143 = vmatpush1.msra.mxu0 %v3119
        %3144 = vmatprep.subr.mxu0 0.0
        %3145 = vmatpush1.msra.mxu0 %v3120
        %3146 = vmatprep.subr.mxu0 0.0
        %3147 = vmatpush1.msra.mxu0 %v3121
        %3148 = vmatprep.subr.mxu0 0.0
        %3149 = vmatpush1.msra.mxu0 %v3122
        %3150 = vmatprep.subr.mxu0 0.0
        %3151 = vmatpush1.msra.mxu0 %v3123
        %3152 = vmatprep.subr.mxu0 0.0
        %3153 = vmatpush1.msra.mxu0 %v3124
        %3154 = vmatprep.subr.mxu0 0.0
        %3155 = vmatpush1.msra.mxu0 %v3125
        %3156 = vmatprep.subr.mxu0 0.0
        %3157 = vmatpush1.msra.mxu0 %v3126
        %3158 = vmatprep.subr.mxu0 0.0
        %3159 = vmatpush1.msra.mxu0 %v3127
        %3160 = vmatprep.subr.mxu0 0.0
        %3161 = vmatpush1.msra.mxu0 %v3128
        %3162 = vmatprep.subr.mxu0 0.0
        %3163 = vmatpush1.msra.mxu0 %v3129
        %3164 = vmatprep.subr.mxu0 0.0
        %3165 = vmatpush1.msra.mxu0 0.0
        %3166 = vmatprep.subr.mxu0 0.0
        %3167 = vmatpush1.msra.mxu0 0.0
        %3168 = vmatprep.subr.mxu0 0.0
        %3169 = vmatpush1.msra.mxu0 0.0
        %3170 = vmatprep.subr.mxu0 0.0
        %3171 = vmatpush1.msra.mxu0 0.0
        %3172 = vmatprep.subr.mxu0 0.0
        %3173 = vmatpush1.msra.mxu0 0.0
        %3174 = vmatprep.subr.mxu0 0.0
        %3175 = vmatpush1.msra.mxu0 0.0
        %3176 = vmatprep.subr.mxu0 0.0
        %3177 = vmatpush1.msra.mxu0 0.0
        %3178 = vmatprep.subr.mxu0 0.0
        %3179 = vmatpush1.msra.mxu0 0.0
        %3180 = vmatprep.subr.mxu0 0.0
        %3181 = vmatpush1.msra.mxu0 0.0
        %3182 = vmatprep.subr.mxu0 0.0
        %3183 = vmatpush1.msra.mxu0 0.0
        %3184 = vmatprep.subr.mxu0 0.0
        %3185 = vmatpush1.msra.mxu0 0.0
        %3186 = vmatprep.subr.mxu0 0.0
        %3187 = vmatpush1.msra.mxu0 0.0
        %3188 = vmatprep.subr.mxu0 0.0
        %3189 = vmatpush1.msra.mxu0 0.0
        %3190 = vmatprep.subr.mxu0 0.0
        %3191 = vmatpush1.msra.mxu0 0.0
        %3192 = vmatprep.subr.mxu0 0.0
        %3193 = vmatpush1.msra.mxu0 0.0
        %3194 = vmatprep.subr.mxu0 0.0
        %3195 = vmatpush1.msra.mxu0 0.0
        %3196 = vmatprep.mubr.f32.mxu0 0.0
        %3197 = vmatmul.mubr.f32.gmra.mrb[0].mxu0 %v3130
        %v3198 = vpop.f32.mrb[0].mxu0
        %v3199 = vadd.f32 0.0, %v3198
        %v3200 = vpop.f32.mrb[0].mxu0
        %3201 = vdwg.mxu0
        %v3202 = vadd.f32 %v3112, %v3199
        %s3203 = scalar_lea.vmem %s5, 384
        %v3204 = vld [vmem:[%s3203] sm:$0xff]
        %v3205 = vld [vmem:[%s3203 + $0x8] sm:$0xff]
        %v3206 = vld [vmem:[%s3203 + $0x10] sm:$0xff]
        %v3207 = vld [vmem:[%s3203 + $0x18] sm:$0xff]
        %v3208 = vld [vmem:[%s3203 + $0x20] sm:$0xff]
        %v3209 = vld [vmem:[%s3203 + $0x28] sm:$0xff]
        %v3210 = vld [vmem:[%s3203 + $0x30] sm:$0xff]
        %v3211 = vld [vmem:[%s3203 + $0x38] sm:$0xff]
        %v3212 = vld [vmem:[%s3203 + $0x40] sm:$0xff]
        %v3213 = vld [vmem:[%s3203 + $0x48] sm:$0xff]
        %v3214 = vld [vmem:[%s3203 + $0x50] sm:$0xff]
        %v3215 = vld [vmem:[%s3203 + $0x58] sm:$0xff]
        %v3216 = vld [vmem:[%s3203 + $0x60] sm:$0xff]
        %v3217 = vld [vmem:[%s3203 + $0x68] sm:$0xff]
        %v3218 = vld [vmem:[%s3203 + $0x70] sm:$0xff]
        %v3219 = vld [vmem:[%s3203 + $0x78] sm:$0xff]
        %v3220 = vrot.slane %v2933, 3
        %3222 = vmatprep.subr.mxu0 0.0
        %3223 = vmatpush1.msra.mxu0 %v3204
        %3224 = vmatprep.subr.mxu0 0.0
        %3225 = vmatpush1.msra.mxu0 %v3205
        %3226 = vmatprep.subr.mxu0 0.0
        %3227 = vmatpush1.msra.mxu0 %v3206
        %3228 = vmatprep.subr.mxu0 0.0
        %3229 = vmatpush1.msra.mxu0 %v3207
        %3230 = vmatprep.subr.mxu0 0.0
        %3231 = vmatpush1.msra.mxu0 %v3208
        %3232 = vmatprep.subr.mxu0 0.0
        %3233 = vmatpush1.msra.mxu0 %v3209
        %3234 = vmatprep.subr.mxu0 0.0
        %3235 = vmatpush1.msra.mxu0 %v3210
        %3236 = vmatprep.subr.mxu0 0.0
        %3237 = vmatpush1.msra.mxu0 %v3211
        %3238 = vmatprep.subr.mxu0 0.0
        %3239 = vmatpush1.msra.mxu0 %v3212
        %3240 = vmatprep.subr.mxu0 0.0
        %3241 = vmatpush1.msra.mxu0 %v3213
        %3242 = vmatprep.subr.mxu0 0.0
        %3243 = vmatpush1.msra.mxu0 %v3214
        %3244 = vmatprep.subr.mxu0 0.0
        %3245 = vmatpush1.msra.mxu0 %v3215
        %3246 = vmatprep.subr.mxu0 0.0
        %3247 = vmatpush1.msra.mxu0 %v3216
        %3248 = vmatprep.subr.mxu0 0.0
        %3249 = vmatpush1.msra.mxu0 %v3217
        %3250 = vmatprep.subr.mxu0 0.0
        %3251 = vmatpush1.msra.mxu0 %v3218
        %3252 = vmatprep.subr.mxu0 0.0
        %3253 = vmatpush1.msra.mxu0 %v3219
        %3254 = vmatprep.subr.mxu0 0.0
        %3255 = vmatpush1.msra.mxu0 0.0
        %3256 = vmatprep.subr.mxu0 0.0
        %3257 = vmatpush1.msra.mxu0 0.0
        %3258 = vmatprep.subr.mxu0 0.0
        %3259 = vmatpush1.msra.mxu0 0.0
        %3260 = vmatprep.subr.mxu0 0.0
        %3261 = vmatpush1.msra.mxu0 0.0
        %3262 = vmatprep.subr.mxu0 0.0
        %3263 = vmatpush1.msra.mxu0 0.0
        %3264 = vmatprep.subr.mxu0 0.0
        %3265 = vmatpush1.msra.mxu0 0.0
        %3266 = vmatprep.subr.mxu0 0.0
        %3267 = vmatpush1.msra.mxu0 0.0
        %3268 = vmatprep.subr.mxu0 0.0
        %3269 = vmatpush1.msra.mxu0 0.0
        %3270 = vmatprep.subr.mxu0 0.0
        %3271 = vmatpush1.msra.mxu0 0.0
        %3272 = vmatprep.subr.mxu0 0.0
        %3273 = vmatpush1.msra.mxu0 0.0
        %3274 = vmatprep.subr.mxu0 0.0
        %3275 = vmatpush1.msra.mxu0 0.0
        %3276 = vmatprep.subr.mxu0 0.0
        %3277 = vmatpush1.msra.mxu0 0.0
        %3278 = vmatprep.subr.mxu0 0.0
        %3279 = vmatpush1.msra.mxu0 0.0
        %3280 = vmatprep.subr.mxu0 0.0
        %3281 = vmatpush1.msra.mxu0 0.0
        %3282 = vmatprep.subr.mxu0 0.0
        %3283 = vmatpush1.msra.mxu0 0.0
        %3284 = vmatprep.subr.mxu0 0.0
        %3285 = vmatpush1.msra.mxu0 0.0
        %3286 = vmatprep.mubr.f32.mxu0 0.0
        %3287 = vmatmul.mubr.f32.gmra.mrb[0].mxu0 %v3220
        %v3288 = vpop.f32.mrb[0].mxu0
        %v3289 = vadd.f32 0.0, %v3288
        %v3290 = vpop.f32.mrb[0].mxu0
        %3291 = vdwg.mxu0
        %v3292 = vadd.f32 %v3202, %v3289
        %s3293 = scalar_lea.vmem %s5, 512
        %v3294 = vld [vmem:[%s3293] sm:$0xff]
        %v3295 = vld [vmem:[%s3293 + $0x8] sm:$0xff]
        %v3296 = vld [vmem:[%s3293 + $0x10] sm:$0xff]
        %v3297 = vld [vmem:[%s3293 + $0x18] sm:$0xff]
        %v3298 = vld [vmem:[%s3293 + $0x20] sm:$0xff]
        %v3299 = vld [vmem:[%s3293 + $0x28] sm:$0xff]
        %v3300 = vld [vmem:[%s3293 + $0x30] sm:$0xff]
        %v3301 = vld [vmem:[%s3293 + $0x38] sm:$0xff]
        %v3302 = vld [vmem:[%s3293 + $0x40] sm:$0xff]
        %v3303 = vld [vmem:[%s3293 + $0x48] sm:$0xff]
        %v3304 = vld [vmem:[%s3293 + $0x50] sm:$0xff]
        %v3305 = vld [vmem:[%s3293 + $0x58] sm:$0xff]
        %v3306 = vld [vmem:[%s3293 + $0x60] sm:$0xff]
        %v3307 = vld [vmem:[%s3293 + $0x68] sm:$0xff]
        %v3308 = vld [vmem:[%s3293 + $0x70] sm:$0xff]
        %v3309 = vld [vmem:[%s3293 + $0x78] sm:$0xff]
        %v3310 = vrot.slane %v2933, 4
        %3312 = vmatprep.subr.mxu0 0.0
        %3313 = vmatpush1.msra.mxu0 %v3294
        %3314 = vmatprep.subr.mxu0 0.0
        %3315 = vmatpush1.msra.mxu0 %v3295
        %3316 = vmatprep.subr.mxu0 0.0
        %3317 = vmatpush1.msra.mxu0 %v3296
        %3318 = vmatprep.subr.mxu0 0.0
        %3319 = vmatpush1.msra.mxu0 %v3297
        %3320 = vmatprep.subr.mxu0 0.0
        %3321 = vmatpush1.msra.mxu0 %v3298
        %3322 = vmatprep.subr.mxu0 0.0
        %3323 = vmatpush1.msra.mxu0 %v3299
        %3324 = vmatprep.subr.mxu0 0.0
        %3325 = vmatpush1.msra.mxu0 %v3300
        %3326 = vmatprep.subr.mxu0 0.0
        %3327 = vmatpush1.msra.mxu0 %v3301
        %3328 = vmatprep.subr.mxu0 0.0
        %3329 = vmatpush1.msra.mxu0 %v3302
        %3330 = vmatprep.subr.mxu0 0.0
        %3331 = vmatpush1.msra.mxu0 %v3303
        %3332 = vmatprep.subr.mxu0 0.0
        %3333 = vmatpush1.msra.mxu0 %v3304
        %3334 = vmatprep.subr.mxu0 0.0
        %3335 = vmatpush1.msra.mxu0 %v3305
        %3336 = vmatprep.subr.mxu0 0.0
        %3337 = vmatpush1.msra.mxu0 %v3306
        %3338 = vmatprep.subr.mxu0 0.0
        %3339 = vmatpush1.msra.mxu0 %v3307
        %3340 = vmatprep.subr.mxu0 0.0
        %3341 = vmatpush1.msra.mxu0 %v3308
        %3342 = vmatprep.subr.mxu0 0.0
        %3343 = vmatpush1.msra.mxu0 %v3309
        %3344 = vmatprep.subr.mxu0 0.0
        %3345 = vmatpush1.msra.mxu0 0.0
        %3346 = vmatprep.subr.mxu0 0.0
        %3347 = vmatpush1.msra.mxu0 0.0
        %3348 = vmatprep.subr.mxu0 0.0
        %3349 = vmatpush1.msra.mxu0 0.0
        %3350 = vmatprep.subr.mxu0 0.0
        %3351 = vmatpush1.msra.mxu0 0.0
        %3352 = vmatprep.subr.mxu0 0.0
        %3353 = vmatpush1.msra.mxu0 0.0
        %3354 = vmatprep.subr.mxu0 0.0
        %3355 = vmatpush1.msra.mxu0 0.0
        %3356 = vmatprep.subr.mxu0 0.0
        %3357 = vmatpush1.msra.mxu0 0.0
        %3358 = vmatprep.subr.mxu0 0.0
        %3359 = vmatpush1.msra.mxu0 0.0
        %3360 = vmatprep.subr.mxu0 0.0
        %3361 = vmatpush1.msra.mxu0 0.0
        %3362 = vmatprep.subr.mxu0 0.0
        %3363 = vmatpush1.msra.mxu0 0.0
        %3364 = vmatprep.subr.mxu0 0.0
        %3365 = vmatpush1.msra.mxu0 0.0
        %3366 = vmatprep.subr.mxu0 0.0
        %3367 = vmatpush1.msra.mxu0 0.0
        %3368 = vmatprep.subr.mxu0 0.0
        %3369 = vmatpush1.msra.mxu0 0.0
        %3370 = vmatprep.subr.mxu0 0.0
        %3371 = vmatpush1.msra.mxu0 0.0
        %3372 = vmatprep.subr.mxu0 0.0
        %3373 = vmatpush1.msra.mxu0 0.0
        %3374 = vmatprep.subr.mxu0 0.0
        %3375 = vmatpush1.msra.mxu0 0.0
        %3376 = vmatprep.mubr.f32.mxu0 0.0
        %3377 = vmatmul.mubr.f32.gmra.mrb[0].mxu0 %v3310
        %v3378 = vpop.f32.mrb[0].mxu0
        %v3379 = vadd.f32 0.0, %v3378
        %v3380 = vpop.f32.mrb[0].mxu0
        %3381 = vdwg.mxu0
        %v3382 = vadd.f32 %v3292, %v3379
        %v3383 = vmax.f32 %v3382, 0.0
        %v3384 = vld [vmem:[%s7] sm:$0xff]
        %v3385 = vld [vmem:[%s7 + $0x8] sm:$0xff]
        %v3386 = vld [vmem:[%s7 + $0x10] sm:$0xff]
        %v3387 = vld [vmem:[%s7 + $0x18] sm:$0xff]
        %v3388 = vld [vmem:[%s7 + $0x20] sm:$0xff]
        %v3389 = vld [vmem:[%s7 + $0x28] sm:$0xff]
        %v3390 = vld [vmem:[%s7 + $0x30] sm:$0xff]
        %v3391 = vld [vmem:[%s7 + $0x38] sm:$0xff]
        %v3392 = vld [vmem:[%s7 + $0x40] sm:$0xff]
        %v3393 = vld [vmem:[%s7 + $0x48] sm:$0xff]
        %v3394 = vld [vmem:[%s7 + $0x50] sm:$0xff]
        %v3395 = vld [vmem:[%s7 + $0x58] sm:$0xff]
        %v3396 = vld [vmem:[%s7 + $0x60] sm:$0xff]
        %v3397 = vld [vmem:[%s7 + $0x68] sm:$0xff]
        %v3398 = vld [vmem:[%s7 + $0x70] sm:$0xff]
        %v3399 = vld [vmem:[%s8] sm:$0x1]
        %vm3400 = vcmask 982016
        %v3402 = vsel %vm3400, %v3383, 0
        %3404 = vmatprep.subr.mxu0 0.0
        %3405 = vmatpush1.msra.mxu0 %v3384
        %3406 = vmatprep.subr.mxu0 0.0
        %3407 = vmatpush1.msra.mxu0 %v3385
        %3408 = vmatprep.subr.mxu0 0.0
        %3409 = vmatpush1.msra.mxu0 %v3386
        %3410 = vmatprep.subr.mxu0 0.0
        %3411 = vmatpush1.msra.mxu0 %v3387
        %3412 = vmatprep.subr.mxu0 0.0
        %3413 = vmatpush1.msra.mxu0 %v3388
        %3414 = vmatprep.subr.mxu0 0.0
        %3415 = vmatpush1.msra.mxu0 %v3389
        %3416 = vmatprep.subr.mxu0 0.0
        %3417 = vmatpush1.msra.mxu0 %v3390
        %3418 = vmatprep.subr.mxu0 0.0
        %3419 = vmatpush1.msra.mxu0 %v3391
        %3420 = vmatprep.subr.mxu0 0.0
        %3421 = vmatpush1.msra.mxu0 %v3392
        %3422 = vmatprep.subr.mxu0 0.0
        %3423 = vmatpush1.msra.mxu0 %v3393
        %3424 = vmatprep.subr.mxu0 0.0
        %3425 = vmatpush1.msra.mxu0 %v3394
        %3426 = vmatprep.subr.mxu0 0.0
        %3427 = vmatpush1.msra.mxu0 %v3395
        %3428 = vmatprep.subr.mxu0 0.0
        %3429 = vmatpush1.msra.mxu0 %v3396
        %3430 = vmatprep.subr.mxu0 0.0
        %3431 = vmatpush1.msra.mxu0 %v3397
        %3432 = vmatprep.subr.mxu0 0.0
        %3433 = vmatpush1.msra.mxu0 %v3398
        %3434 = vmatprep.subr.mxu0 0.0
        %3435 = vmatpush1.msra.mxu0 0.0
        %3436 = vmatprep.subr.mxu0 0.0
        %3437 = vmatpush1.msra.mxu0 0.0
        %3438 = vmatprep.subr.mxu0 0.0
        %3439 = vmatpush1.msra.mxu0 0.0
        %3440 = vmatprep.subr.mxu0 0.0
        %3441 = vmatpush1.msra.mxu0 0.0
        %3442 = vmatprep.subr.mxu0 0.0
        %3443 = vmatpush1.msra.mxu0 0.0
        %3444 = vmatprep.subr.mxu0 0.0
        %3445 = vmatpush1.msra.mxu0 0.0
        %3446 = vmatprep.subr.mxu0 0.0
        %3447 = vmatpush1.msra.mxu0 0.0
        %3448 = vmatprep.subr.mxu0 0.0
        %3449 = vmatpush1.msra.mxu0 0.0
        %3450 = vmatprep.subr.mxu0 0.0
        %3451 = vmatpush1.msra.mxu0 0.0
        %3452 = vmatprep.subr.mxu0 0.0
        %3453 = vmatpush1.msra.mxu0 0.0
        %3454 = vmatprep.subr.mxu0 0.0
        %3455 = vmatpush1.msra.mxu0 0.0
        %3456 = vmatprep.subr.mxu0 0.0
        %3457 = vmatpush1.msra.mxu0 0.0
        %3458 = vmatprep.subr.mxu0 0.0
        %3459 = vmatpush1.msra.mxu0 0.0
        %3460 = vmatprep.subr.mxu0 0.0
        %3461 = vmatpush1.msra.mxu0 0.0
        %3462 = vmatprep.subr.mxu0 0.0
        %3463 = vmatpush1.msra.mxu0 0.0
        %3464 = vmatprep.subr.mxu0 0.0
        %3465 = vmatpush1.msra.mxu0 0.0
        %3466 = vmatprep.subr.mxu0 0.0
        %3467 = vmatpush1.msra.mxu0 0.0
        %3468 = vmatprep.mubr.f32.mxu0 0.0
        %3469 = vmatmul.mubr.f32.gmra.mrb[0].mxu0 %v3402
        %v3470 = vpop.f32.mrb[0].mxu0
        %v3471 = vadd.f32 %v3399, %v3470
        %v3472 = vpop.f32.mrb[0].mxu0
        %3473 = vdwg.mxu0
        %v3474 = vmax.f32 %v3471, 0.0
        %v3475 = vld [vmem:[%s9] sm:$0xff]
        %v3476 = vld [vmem:[%s9 + $0x8] sm:$0xff]
        %v3477 = vld [vmem:[%s9 + $0x10] sm:$0xff]
        %v3478 = vld [vmem:[%s9 + $0x18] sm:$0xff]
        %v3479 = vld [vmem:[%s9 + $0x20] sm:$0xff]
        %v3480 = vld [vmem:[%s9 + $0x28] sm:$0xff]
        %v3481 = vld [vmem:[%s9 + $0x30] sm:$0xff]
        %v3482 = vld [vmem:[%s9 + $0x38] sm:$0xff]
        %v3483 = vld [vmem:[%s9 + $0x40] sm:$0xff]
        %v3484 = vld [vmem:[%s9 + $0x48] sm:$0xff]
        %v3485 = vld [vmem:[%s9 + $0x50] sm:$0xf]
        %v3486 = vld [vmem:[%s10] sm:$0x1]
        %vm3487 = vcmask 687104
        %v3489 = vsel %vm3487, %v3474, 0
        %vm3491 = vcmask 1043456
        %v3493 = vsel %vm3491, %v3485, 0
        %3495 = vmatprep.subr.mxu0 0.0
        %3496 = vmatpush1.msra.mxu0 %v3475
        %3497 = vmatprep.subr.mxu0 0.0
        %3498 = vmatpush1.msra.mxu0 %v3476
        %3499 = vmatprep.subr.mxu0 0.0
        %3500 = vmatpush1.msra.mxu0 %v3477
        %3501 = vmatprep.subr.mxu0 0.0
        %3502 = vmatpush1.msra.mxu0 %v3478
        %3503 = vmatprep.subr.mxu0 0.0
        %3504 = vmatpush1.msra.mxu0 %v3479
        %3505 = vmatprep.subr.mxu0 0.0
        %3506 = vmatpush1.msra.mxu0 %v3480
        %3507 = vmatprep.subr.mxu0 0.0
        %3508 = vmatpush1.msra.mxu0 %v3481
        %3509 = vmatprep.subr.mxu0 0.0
        %3510 = vmatpush1.msra.mxu0 %v3482
        %3511 = vmatprep.subr.mxu0 0.0
        %3512 = vmatpush1.msra.mxu0 %v3483
        %3513 = vmatprep.subr.mxu0 0.0
        %3514 = vmatpush1.msra.mxu0 %v3484
        %3515 = vmatprep.subr.mxu0 0.0
        %3516 = vmatpush1.msra.mxu0 %v3493
        %3517 = vmatprep.subr.mxu0 0.0
        %3518 = vmatpush1.msra.mxu0 0.0
        %3519 = vmatprep.subr.mxu0 0.0
        %3520 = vmatpush1.msra.mxu0 0.0
        %3521 = vmatprep.subr.mxu0 0.0
        %3522 = vmatpush1.msra.mxu0 0.0
        %3523 = vmatprep.subr.mxu0 0.0
        %3524 = vmatpush1.msra.mxu0 0.0
        %3525 = vmatprep.subr.mxu0 0.0
        %3526 = vmatpush1.msra.mxu0 0.0
        %3527 = vmatprep.subr.mxu0 0.0
        %3528 = vmatpush1.msra.mxu0 0.0
        %3529 = vmatprep.subr.mxu0 0.0
        %3530 = vmatpush1.msra.mxu0 0.0
        %3531 = vmatprep.subr.mxu0 0.0
        %3532 = vmatpush1.msra.mxu0 0.0
        %3533 = vmatprep.subr.mxu0 0.0
        %3534 = vmatpush1.msra.mxu0 0.0
        %3535 = vmatprep.subr.mxu0 0.0
        %3536 = vmatpush1.msra.mxu0 0.0
        %3537 = vmatprep.subr.mxu0 0.0
        %3538 = vmatpush1.msra.mxu0 0.0
        %3539 = vmatprep.subr.mxu0 0.0
        %3540 = vmatpush1.msra.mxu0 0.0
        %3541 = vmatprep.subr.mxu0 0.0
        %3542 = vmatpush1.msra.mxu0 0.0
        %3543 = vmatprep.subr.mxu0 0.0
        %3544 = vmatpush1.msra.mxu0 0.0
        %3545 = vmatprep.subr.mxu0 0.0
        %3546 = vmatpush1.msra.mxu0 0.0
        %3547 = vmatprep.subr.mxu0 0.0
        %3548 = vmatpush1.msra.mxu0 0.0
        %3549 = vmatprep.subr.mxu0 0.0
        %3550 = vmatpush1.msra.mxu0 0.0
        %3551 = vmatprep.subr.mxu0 0.0
        %3552 = vmatpush1.msra.mxu0 0.0
        %3553 = vmatprep.subr.mxu0 0.0
        %3554 = vmatpush1.msra.mxu0 0.0
        %3555 = vmatprep.subr.mxu0 0.0
        %3556 = vmatpush1.msra.mxu0 0.0
        %3557 = vmatprep.subr.mxu0 0.0
        %3558 = vmatpush1.msra.mxu0 0.0
        %3559 = vmatprep.mubr.f32.mxu0 0.0
        %3560 = vmatmul.mubr.f32.gmra.mrb[0].mxu0 %v3489
        %v3561 = vpop.f32.mrb[0].mxu0
        %v3562 = vadd.f32 %v3486, %v3561
        %v3563 = vpop.f32.mrb[0].mxu0
        %3564 = vdwg.mxu0
        %3565 = vst [vmem:[%s378] sm:$0x1] %v3562
        %s3566 = sand.u32 %s269, 1
        %s3567 = scalar_lea.sflag [#allocation3], %s3566
        %s3568 = sand.u32 %s269, 1
        %s3569 = scalar_lea.vmem [#allocation2], %s3568
        // Predicated region
        $region65: #{lenet_cifar_forward.1} parent=63 // pred_check
          %p3570 = pneg %p279
        $region66: #{lenet_cifar_forward.1} parent=63 // pred_check_branch
          %3572 = sbr.rel (%p3570) target = $region68
        $region67: #{lenet_cifar_forward.1} parent=63 // pred_region
          %s3574 = ssub.s32 16, 16
          %3575 = vsyncadd %s3567, %s3574
          %s3576 = smul.addr %s25, 16
          %s3577 = scalar_lea.hbm %s11, %s3576
          %s3579 = sshll.u32 %s3569, 4
          %s3580 = int_to_ptr.vmem [resolvable:$true] %s3579
          %3582 = dma.vmem_to_hbm [thread:$0]  %s3580, 16, %s3577, %s3567
        $region68: #{lenet_cifar_forward.1} parent=63 // pred_fallthru
          _
      $region64: #{lenet_cifar_forward.1} parent=5 // pred_fallthru
        _
      %p3583 = scmp.le.s32.totalorder 2, %s20
      // Predicated region
      $region69: #{lenet_cifar_forward.1} parent=5 // pred_check
        %p3584 = pneg %p3583
      $region70: #{lenet_cifar_forward.1} parent=5 // pred_check_branch
        %3586 = sbr.rel (%p3584) target = $region72
      $region71: #{lenet_cifar_forward.1} parent=5 // pred_region
        %s3587 = ssub.s32 %s20, 2
        // Predicated region
        $region73: #{lenet_cifar_forward.1} parent=71 // pred_check
          %p3588 = pneg %p285
        $region74: #{lenet_cifar_forward.1} parent=71 // pred_check_branch
          %3590 = sbr.rel (%p3588) target = $region76
        $region75: #{lenet_cifar_forward.1} parent=71 // pred_region
          %s3591 = sand.u32 %s270, 1
          %s3592 = scalar_lea.sflag [#allocation3], %s3591
          %s3593 = sand.u32 %s270, 1
          %s3594 = scalar_lea.vmem [#allocation2], %s3593
          %3595 = dma.done %s3592, 16
        $region76: #{lenet_cifar_forward.1} parent=71 // pred_fallthru
          _
      $region72: #{lenet_cifar_forward.1} parent=5 // pred_fallthru
        _
    $region6: #{lenet_cifar_forward.1} parent=1 // loop_footer
      %s24 = sadd.s32 1, %s20
    $region7: #{lenet_cifar_forward.1} parent=1 // loop_footer_branch
      %19 = sbr.rel target = $region3
    $region8: #{lenet_cifar_forward.1} parent=1 // loop_exit
      _
    %3596 = vsyncpa [#allocation3], 1
    %s3597 = scalar_lea.sflag [#allocation3], 1
    %3598 = vsyncpa %s3597, 1

</llo_original>
